<compile_context>
chip_gen: v7x
topology: tpu7x:2x2x1
jax: 0.10.0
libtpu: 0.0.40
codegen_flags: <defaults>
</compile_context>

<pallas_src>
import jax
import jax.numpy as jnp
from jax import lax
from jax.experimental import pallas as pl
from jax.experimental.pallas import tpu as pltpu


def _rnn_recurrence_kernel(xw_ref, h0_ref, w_hh_t_ref, act_ref):
    """Only the truly sequential part of the Elman RNN.

    xw_ref    : (T, B, n_h)  precomputed x_t @ W_ih^T + (b_ih + b_hh)
    h0_ref    : (B, n_h)     initial hidden state
    w_hh_t_ref: (n_h, n_h)   W_hh^T (pre-transposed, loop invariant)
    act_ref   : (T, B, n_h)  output: h_t for every time step
    """
    T = xw_ref.shape[0]
    w_hh_t = w_hh_t_ref[...]          # load once, reused by every step

    def step(t, h):
        # h_t = tanh(xW_t + h_{t-1} @ W_hh^T)   (biases already folded into xW_t)
        pre = xw_ref[t] + jnp.dot(h, w_hh_t, preferred_element_type=jnp.float32)
        h_new = jnp.tanh(pre)
        act_ref[t] = h_new.astype(act_ref.dtype)
        return h_new

    # T is small and static -> fully unroll so the LLO scheduler sees the
    # whole dependency chain at once.
    lax.fori_loop(0, T, step, h0_ref[...].astype(jnp.float32), unroll=True)


@jax.jit
def rnn_forward(x, s0, w_in, w_rec, b_ih, b_hh, w_out, b_out):
    """x: (B, T, n_in), s0: (1, B, n_h) -> (out (B, T, n_out), act (B, T, n_h)).

    Weights follow the PyTorch (out_features, in_features) convention.
    """
    B, T, n_in = x.shape
    n_h = w_rec.shape[0]

    x_tm = jnp.transpose(x, (1, 0, 2))                     # (T, B, n_in) time-major
    h0 = s0[0].astype(jnp.float32)                         # (B, n_h)
    bias = (b_ih + b_hh).astype(jnp.float32)               # fold the two biases

    # Hoisted, fully parallel input projection for all T*B rows at once,
    # with the folded bias baked in.
    xw = jnp.einsum(
        "tbi,hi->tbh", x_tm, w_in, precision=jax.lax.Precision.HIGHEST
    ).astype(jnp.float32) + bias                           # (T, B, n_h)

    # Pre-transpose W_hh once so the kernel never does a per-step .T.
    w_hh_t = jnp.transpose(w_rec).astype(jnp.float32)      # (n_h, n_h)

    vmem_spec = pl.BlockSpec(memory_space=pltpu.MemorySpace.VMEM)

    act_tm = pl.pallas_call(
        _rnn_recurrence_kernel,
        out_shape=jax.ShapeDtypeStruct((T, B, n_h), jnp.float32),
        in_specs=[vmem_spec, vmem_spec, vmem_spec],
        out_specs=vmem_spec,
        cost_estimate=pl.CostEstimate(
            flops=2 * T * B * n_h * n_h,
            transcendentals=T * B * n_h,
            bytes_accessed=4 * (2 * T * B * n_h + B * n_h + n_h * n_h),
        ),
    )(xw, h0, w_hh_t)

    act = jnp.transpose(act_tm, (1, 0, 2))                 # (B, T, n_h) batch_first

    # Hoisted Linear head: one matmul over the whole (B*T, n_h) slab instead of
    # a 3-lane masked store per timestep inside the serial recurrence.
    out = jnp.einsum(
        "bth,oh->bto", act, w_out, precision=jax.lax.Precision.HIGHEST
    ) + b_out                                              # (B, T, n_out)
    return out, act


def initialize_parameters(key, n_in, n_h, n_out):
    """Mirrors initializeParameters(): W_in ~ N(0, 1/n_in), W_rec = Q of QR(N(0,1)),
    W_out ~ N(0, 1/n_h), zero biases."""
    k1, k2, k3 = jax.random.split(key, 3)
    w_in = jax.random.normal(k1, (n_h, n_in), jnp.float32) * jnp.sqrt(1.0 / n_in)
    w_rec = jnp.linalg.qr(jax.random.normal(k2, (n_h, n_h), jnp.float32))[0]
    w_out = jax.random.normal(k3, (n_out, n_h), jnp.float32) * jnp.sqrt(1.0 / n_h)
    b_rec = jnp.zeros((n_h,), jnp.float32)
    b_out = jnp.zeros((n_out,), jnp.float32)
    # PyTorch module sets bias_ih_l0 = bias_hh_l0 = b_rec, fc.bias = b_out.
    return w_rec, w_in, b_rec, w_out, b_out


def reference_forward(x, s0, w_in, w_rec, b_ih, b_hh, w_out, b_out):
    """Pure-JAX reference (lax.scan) for correctness check."""
    h0 = s0[0]

    def step(h, x_t):
        h_new = jnp.tanh(x_t @ w_in.T + b_ih + h @ w_rec.T + b_hh)
        return h_new, h_new

    _, hs = lax.scan(step, h0, jnp.transpose(x, (1, 0, 2)))
    act = jnp.transpose(hs, (1, 0, 2))
    out = act @ w_out.T + b_out
    return out, act


if __name__ == "__main__":
    # Keep XLA reference matmuls at full f32 so the tolerance reflects real error.
    jax.config.update("jax_default_matmul_precision", "highest")

    # Small shapes consistent with the module: batch=2, seq=8, n_in=4, n_h=32, n_out=3
    B, T, n_in, n_h, n_out = 2, 8, 4, 32, 3

    key = jax.random.PRNGKey(0)
    kx, ks, kp = jax.random.split(key, 3)

    x = jax.random.normal(kx, (B, T, n_in), jnp.float32)
    s0 = jax.random.normal(ks, (1, B, n_h), jnp.float32)   # (num_layers, B, n_h)

    w_rec, w_in, b_rec, w_out, b_out = initialize_parameters(kp, n_in, n_h, n_out)
    b_ih = b_rec
    b_hh = b_rec

    out, act = rnn_forward(x, s0, w_in, w_rec, b_ih, b_hh, w_out, b_out)
    out, act = jax.block_until_ready((out, act))

    out_ref, act_ref = reference_forward(x, s0, w_in, w_rec, b_ih, b_hh, w_out, b_out)

    assert out.shape == (B, T, n_out) and act.shape == (B, T, n_h)
    # Tolerance covers tiny MXU-pass / EUP-tanh differences between Pallas and XLA.
    assert jnp.allclose(out, out_ref, atol=1e-4, rtol=1e-4)
    assert jnp.allclose(act, act_ref, atol=1e-4, rtol=1e-4)

    print("KERNEL_OK")
</pallas_src>

<mosaic_0001>
module attributes {stable_mosaic.version = 11 : i64} {
  func.func @_rnn_recurrence_kernel(%arg0: memref<8x2x32xf32, #tpu.memory_space<vmem>>, %arg1: memref<2x32xf32, #tpu.memory_space<vmem>>, %arg2: memref<32x32xf32, #tpu.memory_space<vmem>>, %arg3: memref<8x2x32xf32, #tpu.memory_space<vmem>>) attributes {dimension_semantics = [], scalar_prefetch = 0 : i64, scratch_operands = 0 : i64, tpu.core_type = #tpu.core_type<tc>} {
    %c0 = arith.constant 0 : index
    %c0_0 = arith.constant 0 : index
    %0 = vector.load %arg2[%c0, %c0_0] : memref<32x32xf32, #tpu.memory_space<vmem>>, vector<32x32xf32>
    %c0_1 = arith.constant 0 : index
    %c0_2 = arith.constant 0 : index
    %1 = vector.load %arg1[%c0_1, %c0_2] : memref<2x32xf32, #tpu.memory_space<vmem>>, vector<2x32xf32>
    %c0_i32 = arith.constant 0 : i32
    %2 = arith.index_cast %c0_i32 : i32 to index
    %c0_3 = arith.constant 0 : index
    %c0_4 = arith.constant 0 : index
    %3 = vector.load %arg0[%2, %c0_3, %c0_4] : memref<8x2x32xf32, #tpu.memory_space<vmem>>, vector<1x2x32xf32>
    %4 = vector.shape_cast %3 : vector<1x2x32xf32> to vector<2x32xf32>
    %cst = arith.constant dense<0.000000e+00> : vector<2x32xf32>
    %5 = tpu.matmul %1, %0, %cst {dimension_numbers = #tpu.dot_dimension_numbers<[1], [0], [0], [1], [0, 0, 1, 1], [], []>, precision = #tpu.contract_precision<fp32>} : vector<2x32xf32>, vector<32x32xf32>, vector<2x32xf32> -> vector<2x32xf32>
    %6 = arith.addf %4, %5 : vector<2x32xf32>
    %7 = math.tanh %6 : vector<2x32xf32>
    %8 = arith.index_cast %c0_i32 : i32 to index
    %c0_5 = arith.constant 0 : index
    %c0_6 = arith.constant 0 : index
    %9 = vector.load %arg3[%8, %c0_5, %c0_6] : memref<8x2x32xf32, #tpu.memory_space<vmem>>, vector<1x2x32xf32>
    %10 = vector.shape_cast %9 : vector<1x2x32xf32> to vector<2x32xf32>
    %11 = vector.shape_cast %7 : vector<2x32xf32> to vector<1x2x32xf32>
    tpu.vector_store %arg3[%8, %c0_5, %c0_6], %11 {strides = array<i32>} : memref<8x2x32xf32, #tpu.memory_space<vmem>>, vector<1x2x32xf32>,
    %c1_i32 = arith.constant 1 : i32
    %12 = arith.index_cast %c1_i32 : i32 to index
    %c0_7 = arith.constant 0 : index
    %c0_8 = arith.constant 0 : index
    %13 = vector.load %arg0[%12, %c0_7, %c0_8] : memref<8x2x32xf32, #tpu.memory_space<vmem>>, vector<1x2x32xf32>
    %14 = vector.shape_cast %13 : vector<1x2x32xf32> to vector<2x32xf32>
    %cst_9 = arith.constant dense<0.000000e+00> : vector<2x32xf32>
    %15 = tpu.matmul %7, %0, %cst_9 {dimension_numbers = #tpu.dot_dimension_numbers<[1], [0], [0], [1], [0, 0, 1, 1], [], []>, precision = #tpu.contract_precision<fp32>} : vector<2x32xf32>, vector<32x32xf32>, vector<2x32xf32> -> vector<2x32xf32>
    %16 = arith.addf %14, %15 : vector<2x32xf32>
    %17 = math.tanh %16 : vector<2x32xf32>
    %18 = arith.index_cast %c1_i32 : i32 to index
    %c0_10 = arith.constant 0 : index
    %c0_11 = arith.constant 0 : index
    %19 = vector.load %arg3[%18, %c0_10, %c0_11] : memref<8x2x32xf32, #tpu.memory_space<vmem>>, vector<1x2x32xf32>
    %20 = vector.shape_cast %19 : vector<1x2x32xf32> to vector<2x32xf32>
    %21 = vector.shape_cast %17 : vector<2x32xf32> to vector<1x2x32xf32>
    tpu.vector_store %arg3[%18, %c0_10, %c0_11], %21 {strides = array<i32>} : memref<8x2x32xf32, #tpu.memory_space<vmem>>, vector<1x2x32xf32>,
    %c2_i32 = arith.constant 2 : i32
    %22 = arith.index_cast %c2_i32 : i32 to index
    %c0_12 = arith.constant 0 : index
    %c0_13 = arith.constant 0 : index
    %23 = vector.load %arg0[%22, %c0_12, %c0_13] : memref<8x2x32xf32, #tpu.memory_space<vmem>>, vector<1x2x32xf32>
    %24 = vector.shape_cast %23 : vector<1x2x32xf32> to vector<2x32xf32>
    %cst_14 = arith.constant dense<0.000000e+00> : vector<2x32xf32>
    %25 = tpu.matmul %17, %0, %cst_14 {dimension_numbers = #tpu.dot_dimension_numbers<[1], [0], [0], [1], [0, 0, 1, 1], [], []>, precision = #tpu.contract_precision<fp32>} : vector<2x32xf32>, vector<32x32xf32>, vector<2x32xf32> -> vector<2x32xf32>
    %26 = arith.addf %24, %25 : vector<2x32xf32>
    %27 = math.tanh %26 : vector<2x32xf32>
    %28 = arith.index_cast %c2_i32 : i32 to index
    %c0_15 = arith.constant 0 : index
    %c0_16 = arith.constant 0 : index
    %29 = vector.load %arg3[%28, %c0_15, %c0_16] : memref<8x2x32xf32, #tpu.memory_space<vmem>>, vector<1x2x32xf32>
    %30 = vector.shape_cast %29 : vector<1x2x32xf32> to vector<2x32xf32>
    %31 = vector.shape_cast %27 : vector<2x32xf32> to vector<1x2x32xf32>
    tpu.vector_store %arg3[%28, %c0_15, %c0_16], %31 {strides = array<i32>} : memref<8x2x32xf32, #tpu.memory_space<vmem>>, vector<1x2x32xf32>,
    %c3_i32 = arith.constant 3 : i32
    %32 = arith.index_cast %c3_i32 : i32 to index
    %c0_17 = arith.constant 0 : index
    %c0_18 = arith.constant 0 : index
    %33 = vector.load %arg0[%32, %c0_17, %c0_18] : memref<8x2x32xf32, #tpu.memory_space<vmem>>, vector<1x2x32xf32>
    %34 = vector.shape_cast %33 : vector<1x2x32xf32> to vector<2x32xf32>
    %cst_19 = arith.constant dense<0.000000e+00> : vector<2x32xf32>
    %35 = tpu.matmul %27, %0, %cst_19 {dimension_numbers = #tpu.dot_dimension_numbers<[1], [0], [0], [1], [0, 0, 1, 1], [], []>, precision = #tpu.contract_precision<fp32>} : vector<2x32xf32>, vector<32x32xf32>, vector<2x32xf32> -> vector<2x32xf32>
    %36 = arith.addf %34, %35 : vector<2x32xf32>
    %37 = math.tanh %36 : vector<2x32xf32>
    %38 = arith.index_cast %c3_i32 : i32 to index
    %c0_20 = arith.constant 0 : index
    %c0_21 = arith.constant 0 : index
    %39 = vector.load %arg3[%38, %c0_20, %c0_21] : memref<8x2x32xf32, #tpu.memory_space<vmem>>, vector<1x2x32xf32>
    %40 = vector.shape_cast %39 : vector<1x2x32xf32> to vector<2x32xf32>
    %41 = vector.shape_cast %37 : vector<2x32xf32> to vector<1x2x32xf32>
    tpu.vector_store %arg3[%38, %c0_20, %c0_21], %41 {strides = array<i32>} : memref<8x2x32xf32, #tpu.memory_space<vmem>>, vector<1x2x32xf32>,
    %c4_i32 = arith.constant 4 : i32
    %42 = arith.index_cast %c4_i32 : i32 to index
    %c0_22 = arith.constant 0 : index
    %c0_23 = arith.constant 0 : index
    %43 = vector.load %arg0[%42, %c0_22, %c0_23] : memref<8x2x32xf32, #tpu.memory_space<vmem>>, vector<1x2x32xf32>
    %44 = vector.shape_cast %43 : vector<1x2x32xf32> to vector<2x32xf32>
    %cst_24 = arith.constant dense<0.000000e+00> : vector<2x32xf32>
    %45 = tpu.matmul %37, %0, %cst_24 {dimension_numbers = #tpu.dot_dimension_numbers<[1], [0], [0], [1], [0, 0, 1, 1], [], []>, precision = #tpu.contract_precision<fp32>} : vector<2x32xf32>, vector<32x32xf32>, vector<2x32xf32> -> vector<2x32xf32>
    %46 = arith.addf %44, %45 : vector<2x32xf32>
    %47 = math.tanh %46 : vector<2x32xf32>
    %48 = arith.index_cast %c4_i32 : i32 to index
    %c0_25 = arith.constant 0 : index
    %c0_26 = arith.constant 0 : index
    %49 = vector.load %arg3[%48, %c0_25, %c0_26] : memref<8x2x32xf32, #tpu.memory_space<vmem>>, vector<1x2x32xf32>
    %50 = vector.shape_cast %49 : vector<1x2x32xf32> to vector<2x32xf32>
    %51 = vector.shape_cast %47 : vector<2x32xf32> to vector<1x2x32xf32>
    tpu.vector_store %arg3[%48, %c0_25, %c0_26], %51 {strides = array<i32>} : memref<8x2x32xf32, #tpu.memory_space<vmem>>, vector<1x2x32xf32>,
    %c5_i32 = arith.constant 5 : i32
    %52 = arith.index_cast %c5_i32 : i32 to index
    %c0_27 = arith.constant 0 : index
    %c0_28 = arith.constant 0 : index
    %53 = vector.load %arg0[%52, %c0_27, %c0_28] : memref<8x2x32xf32, #tpu.memory_space<vmem>>, vector<1x2x32xf32>
    %54 = vector.shape_cast %53 : vector<1x2x32xf32> to vector<2x32xf32>
    %cst_29 = arith.constant dense<0.000000e+00> : vector<2x32xf32>
    %55 = tpu.matmul %47, %0, %cst_29 {dimension_numbers = #tpu.dot_dimension_numbers<[1], [0], [0], [1], [0, 0, 1, 1], [], []>, precision = #tpu.contract_precision<fp32>} : vector<2x32xf32>, vector<32x32xf32>, vector<2x32xf32> -> vector<2x32xf32>
    %56 = arith.addf %54, %55 : vector<2x32xf32>
    %57 = math.tanh %56 : vector<2x32xf32>
    %58 = arith.index_cast %c5_i32 : i32 to index
    %c0_30 = arith.constant 0 : index
    %c0_31 = arith.constant 0 : index
    %59 = vector.load %arg3[%58, %c0_30, %c0_31] : memref<8x2x32xf32, #tpu.memory_space<vmem>>, vector<1x2x32xf32>
    %60 = vector.shape_cast %59 : vector<1x2x32xf32> to vector<2x32xf32>
    %61 = vector.shape_cast %57 : vector<2x32xf32> to vector<1x2x32xf32>
    tpu.vector_store %arg3[%58, %c0_30, %c0_31], %61 {strides = array<i32>} : memref<8x2x32xf32, #tpu.memory_space<vmem>>, vector<1x2x32xf32>,
    %c6_i32 = arith.constant 6 : i32
    %62 = arith.index_cast %c6_i32 : i32 to index
    %c0_32 = arith.constant 0 : index
    %c0_33 = arith.constant 0 : index
    %63 = vector.load %arg0[%62, %c0_32, %c0_33] : memref<8x2x32xf32, #tpu.memory_space<vmem>>, vector<1x2x32xf32>
    %64 = vector.shape_cast %63 : vector<1x2x32xf32> to vector<2x32xf32>
    %cst_34 = arith.constant dense<0.000000e+00> : vector<2x32xf32>
    %65 = tpu.matmul %57, %0, %cst_34 {dimension_numbers = #tpu.dot_dimension_numbers<[1], [0], [0], [1], [0, 0, 1, 1], [], []>, precision = #tpu.contract_precision<fp32>} : vector<2x32xf32>, vector<32x32xf32>, vector<2x32xf32> -> vector<2x32xf32>
    %66 = arith.addf %64, %65 : vector<2x32xf32>
    %67 = math.tanh %66 : vector<2x32xf32>
    %68 = arith.index_cast %c6_i32 : i32 to index
    %c0_35 = arith.constant 0 : index
    %c0_36 = arith.constant 0 : index
    %69 = vector.load %arg3[%68, %c0_35, %c0_36] : memref<8x2x32xf32, #tpu.memory_space<vmem>>, vector<1x2x32xf32>
    %70 = vector.shape_cast %69 : vector<1x2x32xf32> to vector<2x32xf32>
    %71 = vector.shape_cast %67 : vector<2x32xf32> to vector<1x2x32xf32>
    tpu.vector_store %arg3[%68, %c0_35, %c0_36], %71 {strides = array<i32>} : memref<8x2x32xf32, #tpu.memory_space<vmem>>, vector<1x2x32xf32>,
    %c7_i32 = arith.constant 7 : i32
    %72 = arith.index_cast %c7_i32 : i32 to index
    %c0_37 = arith.constant 0 : index
    %c0_38 = arith.constant 0 : index
    %73 = vector.load %arg0[%72, %c0_37, %c0_38] : memref<8x2x32xf32, #tpu.memory_space<vmem>>, vector<1x2x32xf32>
    %74 = vector.shape_cast %73 : vector<1x2x32xf32> to vector<2x32xf32>
    %cst_39 = arith.constant dense<0.000000e+00> : vector<2x32xf32>
    %75 = tpu.matmul %67, %0, %cst_39 {dimension_numbers = #tpu.dot_dimension_numbers<[1], [0], [0], [1], [0, 0, 1, 1], [], []>, precision = #tpu.contract_precision<fp32>} : vector<2x32xf32>, vector<32x32xf32>, vector<2x32xf32> -> vector<2x32xf32>
    %76 = arith.addf %74, %75 : vector<2x32xf32>
    %77 = math.tanh %76 : vector<2x32xf32>
    %78 = arith.index_cast %c7_i32 : i32 to index
    %c0_40 = arith.constant 0 : index
    %c0_41 = arith.constant 0 : index
    %79 = vector.load %arg3[%78, %c0_40, %c0_41] : memref<8x2x32xf32, #tpu.memory_space<vmem>>, vector<1x2x32xf32>
    %80 = vector.shape_cast %79 : vector<1x2x32xf32> to vector<2x32xf32>
    %81 = vector.shape_cast %77 : vector<2x32xf32> to vector<1x2x32xf32>
    tpu.vector_store %arg3[%78, %c0_40, %c0_41], %81 {strides = array<i32>} : memref<8x2x32xf32, #tpu.memory_space<vmem>>, vector<1x2x32xf32>,
    %c8_i32 = arith.constant 8 : i32
    return
  }
}

</mosaic_0001>

<llo_original>
// kernel: rnn_forward.1
$region0: #{rnn_forward.1}
  #allocation0 [shape = 'u32[]', space=smem, size = 0x4, offset = 0x4, fixed_abs, tag = 'smem constant byte address 0x4 - core index']
  #allocation1 [shape = 'u32[144,128]{1,0:T(1,128)}', space=vmem, size = 0x12000, scoped, tag = 'internal scratch']
  %s0 = inlined_call_operand.vmem [shape: f32[8,2,32], index: 0, kind: input, shape index: {}]
  %s1 = inlined_call_operand.vmem [shape: f32[2,32], index: 1, kind: input, shape index: {}]
  %s2 = inlined_call_operand.vmem [shape: f32[32,32], index: 2, kind: input, shape index: {}]
  %s3 = inlined_call_operand.vmem [shape: f32[8,2,32], index: 3, kind: output, shape index: {}]
  %s4 = sld [smem:[#allocation0]]
  $region22: #{rnn_forward.1} parent=0
    _
  %s6 = ssub.s32 1, %s4
  %s7 = scalar_select 0, %s6, %s4
  // Predicated region
  $region2: #{rnn_forward.1} parent=0 // pred_check
    _
  $region3: #{rnn_forward.1} parent=0 // pred_check_branch
    %9 = sbr.rel (0) target = $region5
  $region4: #{rnn_forward.1} parent=0 // pred_region
    _
  $region5: #{rnn_forward.1} parent=0 // pred_fallthru
    _
  // Predicated region
  $region6: #{rnn_forward.1} parent=0 // pred_check
    _
  $region7: #{rnn_forward.1} parent=0 // pred_check_branch
    %11 = sbr.rel (0) target = $region9
  $region8: #{rnn_forward.1} parent=0 // pred_region
    _
  $region9: #{rnn_forward.1} parent=0 // pred_fallthru
    _
  // Predicated region
  $region10: #{rnn_forward.1} parent=0 // pred_check
    _
  $region11: #{rnn_forward.1} parent=0 // pred_check_branch
    %13 = sbr.rel (0) target = $region13
  $region12: #{rnn_forward.1} parent=0 // pred_region
    _
  $region13: #{rnn_forward.1} parent=0 // pred_fallthru
    _
  %v14 = vld [vmem:[%s2] sm:$0xff]
  %v15 = vld [vmem:[%s2 + $0x8] sm:$0xff]
  %v16 = vld [vmem:[%s2 + $0x10] sm:$0xff]
  %v17 = vld [vmem:[%s2 + $0x18] sm:$0xff]
  %v18 = vld [vmem:[%s1] sm:$0x3]
  %v19 = vld [vmem:[%s0] sm:$0x3]
  %vm20 = vcmask 261120
  %v22 = vsel %vm20, %v18, 0
  %24 = vmatprep.subr.mxu0 0.0
  %v25 = vand.u32 %v14, 4294901760
  %26 = vmatpush1.msra.mxu0 %v25
  %27 = vmatprep.subr.mxu0 0.0
  %v28 = vand.u32 %v15, 4294901760
  %29 = vmatpush1.msra.mxu0 %v28
  %30 = vmatprep.subr.mxu0 0.0
  %v31 = vand.u32 %v16, 4294901760
  %32 = vmatpush1.msra.mxu0 %v31
  %33 = vmatprep.subr.mxu0 0.0
  %v34 = vand.u32 %v17, 4294901760
  %35 = vmatpush1.msra.mxu0 %v34
  %36 = vmatprep.subr.mxu0 0.0
  %37 = vmatpush1.msra.mxu0 0.0
  %38 = vmatprep.subr.mxu0 0.0
  %39 = vmatpush1.msra.mxu0 0.0
  %40 = vmatprep.subr.mxu0 0.0
  %41 = vmatpush1.msra.mxu0 0.0
  %42 = vmatprep.subr.mxu0 0.0
  %43 = vmatpush1.msra.mxu0 0.0
  %44 = vmatprep.subr.mxu0 0.0
  %45 = vmatpush1.msra.mxu0 0.0
  %46 = vmatprep.subr.mxu0 0.0
  %47 = vmatpush1.msra.mxu0 0.0
  %48 = vmatprep.subr.mxu0 0.0
  %49 = vmatpush1.msra.mxu0 0.0
  %50 = vmatprep.subr.mxu0 0.0
  %51 = vmatpush1.msra.mxu0 0.0
  %52 = vmatprep.subr.mxu0 0.0
  %53 = vmatpush1.msra.mxu0 0.0
  %54 = vmatprep.subr.mxu0 0.0
  %55 = vmatpush1.msra.mxu0 0.0
  %56 = vmatprep.subr.mxu0 0.0
  %57 = vmatpush1.msra.mxu0 0.0
  %58 = vmatprep.subr.mxu0 0.0
  %59 = vmatpush1.msra.mxu0 0.0
  %60 = vmatprep.subr.mxu0 0.0
  %61 = vmatpush1.msra.mxu0 0.0
  %62 = vmatprep.subr.mxu0 0.0
  %63 = vmatpush1.msra.mxu0 0.0
  %64 = vmatprep.subr.mxu0 0.0
  %65 = vmatpush1.msra.mxu0 0.0
  %66 = vmatprep.subr.mxu0 0.0
  %67 = vmatpush1.msra.mxu0 0.0
  %68 = vmatprep.subr.mxu0 0.0
  %69 = vmatpush1.msra.mxu0 0.0
  %70 = vmatprep.subr.mxu0 0.0
  %71 = vmatpush1.msra.mxu0 0.0
  %72 = vmatprep.subr.mxu0 0.0
  %73 = vmatpush1.msra.mxu0 0.0
  %74 = vmatprep.subr.mxu0 0.0
  %75 = vmatpush1.msra.mxu0 0.0
  %76 = vmatprep.subr.mxu0 0.0
  %77 = vmatpush1.msra.mxu0 0.0
  %78 = vmatprep.subr.mxu0 0.0
  %79 = vmatpush1.msra.mxu0 0.0
  %80 = vmatprep.subr.mxu0 0.0
  %81 = vmatpush1.msra.mxu0 0.0
  %82 = vmatprep.subr.mxu0 0.0
  %83 = vmatpush1.msra.mxu0 0.0
  %84 = vmatprep.subr.mxu0 0.0
  %85 = vmatpush1.msra.mxu0 0.0
  %86 = vmatprep.subr.mxu0 0.0
  %87 = vmatpush1.msra.mxu0 0.0
  %88 = vmatprep.subr.mxu0 0.0
  %89 = vmatpush1.msra.mxu0 0.0
  %90 = vmatprep.subr.mxu0 0.0
  %91 = vmatpush1.msra.mxu0 0.0
  %92 = vmatprep.mubr.f32.mxu0 0.0
  %v93 = vand.u32 %v22, 4294901760
  %v94 = vsub.f32 %v22, %v93
  %v95 = vand.u32 %v94, 4294901760
  %v96 = vsub.f32 %v94, %v95
  %v97 = vand.u32 %v96, 4294901760
  %98 = vmatmul.mubr.f32.gmra.mrb[0].mxu0 %v97
  %v99 = vpop.f32.mrb[0].mxu0
  %v100 = vadd.f32 0.0, %v99
  %v101 = vpop.f32.mrb[0].mxu0
  %102 = vdwg.mxu0
  %103 = vmatprep.subr.mxu0 0.0
  %v104 = vand.u32 %v14, 4294901760
  %v105 = vsub.f32 %v14, %v104
  %v106 = vand.u32 %v105, 4294901760
  %v107 = vsub.f32 %v105, %v106
  %v108 = vand.u32 %v107, 4294901760
  %109 = vmatpush1.msra.mxu0 %v108
  %110 = vmatprep.subr.mxu0 0.0
  %v111 = vand.u32 %v15, 4294901760
  %v112 = vsub.f32 %v15, %v111
  %v113 = vand.u32 %v112, 4294901760
  %v114 = vsub.f32 %v112, %v113
  %v115 = vand.u32 %v114, 4294901760
  %116 = vmatpush1.msra.mxu0 %v115
  %117 = vmatprep.subr.mxu0 0.0
  %v118 = vand.u32 %v16, 4294901760
  %v119 = vsub.f32 %v16, %v118
  %v120 = vand.u32 %v119, 4294901760
  %v121 = vsub.f32 %v119, %v120
  %v122 = vand.u32 %v121, 4294901760
  %123 = vmatpush1.msra.mxu0 %v122
  %124 = vmatprep.subr.mxu0 0.0
  %v125 = vand.u32 %v17, 4294901760
  %v126 = vsub.f32 %v17, %v125
  %v127 = vand.u32 %v126, 4294901760
  %v128 = vsub.f32 %v126, %v127
  %v129 = vand.u32 %v128, 4294901760
  %130 = vmatpush1.msra.mxu0 %v129
  %131 = vmatprep.subr.mxu0 0.0
  %132 = vmatpush1.msra.mxu0 0.0
  %133 = vmatprep.subr.mxu0 0.0
  %134 = vmatpush1.msra.mxu0 0.0
  %135 = vmatprep.subr.mxu0 0.0
  %136 = vmatpush1.msra.mxu0 0.0
  %137 = vmatprep.subr.mxu0 0.0
  %138 = vmatpush1.msra.mxu0 0.0
  %139 = vmatprep.subr.mxu0 0.0
  %140 = vmatpush1.msra.mxu0 0.0
  %141 = vmatprep.subr.mxu0 0.0
  %142 = vmatpush1.msra.mxu0 0.0
  %143 = vmatprep.subr.mxu0 0.0
  %144 = vmatpush1.msra.mxu0 0.0
  %145 = vmatprep.subr.mxu0 0.0
  %146 = vmatpush1.msra.mxu0 0.0
  %147 = vmatprep.subr.mxu0 0.0
  %148 = vmatpush1.msra.mxu0 0.0
  %149 = vmatprep.subr.mxu0 0.0
  %150 = vmatpush1.msra.mxu0 0.0
  %151 = vmatprep.subr.mxu0 0.0
  %152 = vmatpush1.msra.mxu0 0.0
  %153 = vmatprep.subr.mxu0 0.0
  %154 = vmatpush1.msra.mxu0 0.0
  %155 = vmatprep.subr.mxu0 0.0
  %156 = vmatpush1.msra.mxu0 0.0
  %157 = vmatprep.subr.mxu0 0.0
  %158 = vmatpush1.msra.mxu0 0.0
  %159 = vmatprep.subr.mxu0 0.0
  %160 = vmatpush1.msra.mxu0 0.0
  %161 = vmatprep.subr.mxu0 0.0
  %162 = vmatpush1.msra.mxu0 0.0
  %163 = vmatprep.subr.mxu0 0.0
  %164 = vmatpush1.msra.mxu0 0.0
  %165 = vmatprep.subr.mxu0 0.0
  %166 = vmatpush1.msra.mxu0 0.0
  %167 = vmatprep.subr.mxu0 0.0
  %168 = vmatpush1.msra.mxu0 0.0
  %169 = vmatprep.subr.mxu0 0.0
  %170 = vmatpush1.msra.mxu0 0.0
  %171 = vmatprep.subr.mxu0 0.0
  %172 = vmatpush1.msra.mxu0 0.0
  %173 = vmatprep.subr.mxu0 0.0
  %174 = vmatpush1.msra.mxu0 0.0
  %175 = vmatprep.subr.mxu0 0.0
  %176 = vmatpush1.msra.mxu0 0.0
  %177 = vmatprep.subr.mxu0 0.0
  %178 = vmatpush1.msra.mxu0 0.0
  %179 = vmatprep.subr.mxu0 0.0
  %180 = vmatpush1.msra.mxu0 0.0
  %181 = vmatprep.subr.mxu0 0.0
  %182 = vmatpush1.msra.mxu0 0.0
  %183 = vmatprep.subr.mxu0 0.0
  %184 = vmatpush1.msra.mxu0 0.0
  %185 = vmatprep.subr.mxu0 0.0
  %186 = vmatpush1.msra.mxu0 0.0
  %187 = vmatprep.mubr.f32.mxu0 0.0
  %v188 = vand.u32 %v22, 4294901760
  %189 = vmatmul.mubr.f32.gmra.mrb[0].mxu0 %v188
  %v190 = vpop.f32.mrb[0].mxu0
  %v191 = vadd.f32 %v100, %v190
  %v192 = vpop.f32.mrb[0].mxu0
  %193 = vdwg.mxu0
  %194 = vmatprep.subr.mxu0 0.0
  %v195 = vand.u32 %v14, 4294901760
  %v196 = vsub.f32 %v14, %v195
  %197 = vmatpush1.msra.mxu0 %v196
  %198 = vmatprep.subr.mxu0 0.0
  %v199 = vand.u32 %v15, 4294901760
  %v200 = vsub.f32 %v15, %v199
  %201 = vmatpush1.msra.mxu0 %v200
  %202 = vmatprep.subr.mxu0 0.0
  %v203 = vand.u32 %v16, 4294901760
  %v204 = vsub.f32 %v16, %v203
  %205 = vmatpush1.msra.mxu0 %v204
  %206 = vmatprep.subr.mxu0 0.0
  %v207 = vand.u32 %v17, 4294901760
  %v208 = vsub.f32 %v17, %v207
  %209 = vmatpush1.msra.mxu0 %v208
  %210 = vmatprep.subr.mxu0 0.0
  %211 = vmatpush1.msra.mxu0 0.0
  %212 = vmatprep.subr.mxu0 0.0
  %213 = vmatpush1.msra.mxu0 0.0
  %214 = vmatprep.subr.mxu0 0.0
  %215 = vmatpush1.msra.mxu0 0.0
  %216 = vmatprep.subr.mxu0 0.0
  %217 = vmatpush1.msra.mxu0 0.0
  %218 = vmatprep.subr.mxu0 0.0
  %219 = vmatpush1.msra.mxu0 0.0
  %220 = vmatprep.subr.mxu0 0.0
  %221 = vmatpush1.msra.mxu0 0.0
  %222 = vmatprep.subr.mxu0 0.0
  %223 = vmatpush1.msra.mxu0 0.0
  %224 = vmatprep.subr.mxu0 0.0
  %225 = vmatpush1.msra.mxu0 0.0
  %226 = vmatprep.subr.mxu0 0.0
  %227 = vmatpush1.msra.mxu0 0.0
  %228 = vmatprep.subr.mxu0 0.0
  %229 = vmatpush1.msra.mxu0 0.0
  %230 = vmatprep.subr.mxu0 0.0
  %231 = vmatpush1.msra.mxu0 0.0
  %232 = vmatprep.subr.mxu0 0.0
  %233 = vmatpush1.msra.mxu0 0.0
  %234 = vmatprep.subr.mxu0 0.0
  %235 = vmatpush1.msra.mxu0 0.0
  %236 = vmatprep.subr.mxu0 0.0
  %237 = vmatpush1.msra.mxu0 0.0
  %238 = vmatprep.subr.mxu0 0.0
  %239 = vmatpush1.msra.mxu0 0.0
  %240 = vmatprep.subr.mxu0 0.0
  %241 = vmatpush1.msra.mxu0 0.0
  %242 = vmatprep.subr.mxu0 0.0
  %243 = vmatpush1.msra.mxu0 0.0
  %244 = vmatprep.subr.mxu0 0.0
  %245 = vmatpush1.msra.mxu0 0.0
  %246 = vmatprep.subr.mxu0 0.0
  %247 = vmatpush1.msra.mxu0 0.0
  %248 = vmatprep.subr.mxu0 0.0
  %249 = vmatpush1.msra.mxu0 0.0
  %250 = vmatprep.subr.mxu0 0.0
  %251 = vmatpush1.msra.mxu0 0.0
  %252 = vmatprep.subr.mxu0 0.0
  %253 = vmatpush1.msra.mxu0 0.0
  %254 = vmatprep.subr.mxu0 0.0
  %255 = vmatpush1.msra.mxu0 0.0
  %256 = vmatprep.subr.mxu0 0.0
  %257 = vmatpush1.msra.mxu0 0.0
  %258 = vmatprep.subr.mxu0 0.0
  %259 = vmatpush1.msra.mxu0 0.0
  %260 = vmatprep.subr.mxu0 0.0
  %261 = vmatpush1.msra.mxu0 0.0
  %262 = vmatprep.subr.mxu0 0.0
  %263 = vmatpush1.msra.mxu0 0.0
  %264 = vmatprep.subr.mxu0 0.0
  %265 = vmatpush1.msra.mxu0 0.0
  %266 = vmatprep.mubr.f32.mxu0 0.0
  %v267 = vand.u32 %v22, 4294901760
  %v268 = vsub.f32 %v22, %v267
  %269 = vmatmul.mubr.f32.gmra.mrb[0].mxu0 %v268
  %v270 = vpop.f32.mrb[0].mxu0
  %v271 = vadd.f32 %v191, %v270
  %v272 = vpop.f32.mrb[0].mxu0
  %273 = vdwg.mxu0
  %274 = vmatprep.subr.mxu0 0.0
  %v275 = vand.u32 %v14, 4294901760
  %276 = vmatpush1.msra.mxu0 %v275
  %277 = vmatprep.subr.mxu0 0.0
  %v278 = vand.u32 %v15, 4294901760
  %279 = vmatpush1.msra.mxu0 %v278
  %280 = vmatprep.subr.mxu0 0.0
  %v281 = vand.u32 %v16, 4294901760
  %282 = vmatpush1.msra.mxu0 %v281
  %283 = vmatprep.subr.mxu0 0.0
  %v284 = vand.u32 %v17, 4294901760
  %285 = vmatpush1.msra.mxu0 %v284
  %286 = vmatprep.subr.mxu0 0.0
  %287 = vmatpush1.msra.mxu0 0.0
  %288 = vmatprep.subr.mxu0 0.0
  %289 = vmatpush1.msra.mxu0 0.0
  %290 = vmatprep.subr.mxu0 0.0
  %291 = vmatpush1.msra.mxu0 0.0
  %292 = vmatprep.subr.mxu0 0.0
  %293 = vmatpush1.msra.mxu0 0.0
  %294 = vmatprep.subr.mxu0 0.0
  %295 = vmatpush1.msra.mxu0 0.0
  %296 = vmatprep.subr.mxu0 0.0
  %297 = vmatpush1.msra.mxu0 0.0
  %298 = vmatprep.subr.mxu0 0.0
  %299 = vmatpush1.msra.mxu0 0.0
  %300 = vmatprep.subr.mxu0 0.0
  %301 = vmatpush1.msra.mxu0 0.0
  %302 = vmatprep.subr.mxu0 0.0
  %303 = vmatpush1.msra.mxu0 0.0
  %304 = vmatprep.subr.mxu0 0.0
  %305 = vmatpush1.msra.mxu0 0.0
  %306 = vmatprep.subr.mxu0 0.0
  %307 = vmatpush1.msra.mxu0 0.0
  %308 = vmatprep.subr.mxu0 0.0
  %309 = vmatpush1.msra.mxu0 0.0
  %310 = vmatprep.subr.mxu0 0.0
  %311 = vmatpush1.msra.mxu0 0.0
  %312 = vmatprep.subr.mxu0 0.0
  %313 = vmatpush1.msra.mxu0 0.0
  %314 = vmatprep.subr.mxu0 0.0
  %315 = vmatpush1.msra.mxu0 0.0
  %316 = vmatprep.subr.mxu0 0.0
  %317 = vmatpush1.msra.mxu0 0.0
  %318 = vmatprep.subr.mxu0 0.0
  %319 = vmatpush1.msra.mxu0 0.0
  %320 = vmatprep.subr.mxu0 0.0
  %321 = vmatpush1.msra.mxu0 0.0
  %322 = vmatprep.subr.mxu0 0.0
  %323 = vmatpush1.msra.mxu0 0.0
  %324 = vmatprep.subr.mxu0 0.0
  %325 = vmatpush1.msra.mxu0 0.0
  %326 = vmatprep.subr.mxu0 0.0
  %327 = vmatpush1.msra.mxu0 0.0
  %328 = vmatprep.subr.mxu0 0.0
  %329 = vmatpush1.msra.mxu0 0.0
  %330 = vmatprep.subr.mxu0 0.0
  %331 = vmatpush1.msra.mxu0 0.0
  %332 = vmatprep.subr.mxu0 0.0
  %333 = vmatpush1.msra.mxu0 0.0
  %334 = vmatprep.subr.mxu0 0.0
  %335 = vmatpush1.msra.mxu0 0.0
  %336 = vmatprep.subr.mxu0 0.0
  %337 = vmatpush1.msra.mxu0 0.0
  %338 = vmatprep.subr.mxu0 0.0
  %339 = vmatpush1.msra.mxu0 0.0
  %340 = vmatprep.subr.mxu0 0.0
  %341 = vmatpush1.msra.mxu0 0.0
  %342 = vmatprep.mubr.f32.mxu0 0.0
  %v343 = vand.u32 %v22, 4294901760
  %v344 = vsub.f32 %v22, %v343
  %v345 = vand.u32 %v344, 4294901760
  %346 = vmatmul.mubr.f32.gmra.mrb[0].mxu0 %v345
  %v347 = vpop.f32.mrb[0].mxu0
  %v348 = vadd.f32 %v271, %v347
  %v349 = vpop.f32.mrb[0].mxu0
  %350 = vdwg.mxu0
  %351 = vmatprep.subr.mxu0 0.0
  %v352 = vand.u32 %v14, 4294901760
  %v353 = vsub.f32 %v14, %v352
  %v354 = vand.u32 %v353, 4294901760
  %355 = vmatpush1.msra.mxu0 %v354
  %356 = vmatprep.subr.mxu0 0.0
  %v357 = vand.u32 %v15, 4294901760
  %v358 = vsub.f32 %v15, %v357
  %v359 = vand.u32 %v358, 4294901760
  %360 = vmatpush1.msra.mxu0 %v359
  %361 = vmatprep.subr.mxu0 0.0
  %v362 = vand.u32 %v16, 4294901760
  %v363 = vsub.f32 %v16, %v362
  %v364 = vand.u32 %v363, 4294901760
  %365 = vmatpush1.msra.mxu0 %v364
  %366 = vmatprep.subr.mxu0 0.0
  %v367 = vand.u32 %v17, 4294901760
  %v368 = vsub.f32 %v17, %v367
  %v369 = vand.u32 %v368, 4294901760
  %370 = vmatpush1.msra.mxu0 %v369
  %371 = vmatprep.subr.mxu0 0.0
  %372 = vmatpush1.msra.mxu0 0.0
  %373 = vmatprep.subr.mxu0 0.0
  %374 = vmatpush1.msra.mxu0 0.0
  %375 = vmatprep.subr.mxu0 0.0
  %376 = vmatpush1.msra.mxu0 0.0
  %377 = vmatprep.subr.mxu0 0.0
  %378 = vmatpush1.msra.mxu0 0.0
  %379 = vmatprep.subr.mxu0 0.0
  %380 = vmatpush1.msra.mxu0 0.0
  %381 = vmatprep.subr.mxu0 0.0
  %382 = vmatpush1.msra.mxu0 0.0
  %383 = vmatprep.subr.mxu0 0.0
  %384 = vmatpush1.msra.mxu0 0.0
  %385 = vmatprep.subr.mxu0 0.0
  %386 = vmatpush1.msra.mxu0 0.0
  %387 = vmatprep.subr.mxu0 0.0
  %388 = vmatpush1.msra.mxu0 0.0
  %389 = vmatprep.subr.mxu0 0.0
  %390 = vmatpush1.msra.mxu0 0.0
  %391 = vmatprep.subr.mxu0 0.0
  %392 = vmatpush1.msra.mxu0 0.0
  %393 = vmatprep.subr.mxu0 0.0
  %394 = vmatpush1.msra.mxu0 0.0
  %395 = vmatprep.subr.mxu0 0.0
  %396 = vmatpush1.msra.mxu0 0.0
  %397 = vmatprep.subr.mxu0 0.0
  %398 = vmatpush1.msra.mxu0 0.0
  %399 = vmatprep.subr.mxu0 0.0
  %400 = vmatpush1.msra.mxu0 0.0
  %401 = vmatprep.subr.mxu0 0.0
  %402 = vmatpush1.msra.mxu0 0.0
  %403 = vmatprep.subr.mxu0 0.0
  %404 = vmatpush1.msra.mxu0 0.0
  %405 = vmatprep.subr.mxu0 0.0
  %406 = vmatpush1.msra.mxu0 0.0
  %407 = vmatprep.subr.mxu0 0.0
  %408 = vmatpush1.msra.mxu0 0.0
  %409 = vmatprep.subr.mxu0 0.0
  %410 = vmatpush1.msra.mxu0 0.0
  %411 = vmatprep.subr.mxu0 0.0
  %412 = vmatpush1.msra.mxu0 0.0
  %413 = vmatprep.subr.mxu0 0.0
  %414 = vmatpush1.msra.mxu0 0.0
  %415 = vmatprep.subr.mxu0 0.0
  %416 = vmatpush1.msra.mxu0 0.0
  %417 = vmatprep.subr.mxu0 0.0
  %418 = vmatpush1.msra.mxu0 0.0
  %419 = vmatprep.subr.mxu0 0.0
  %420 = vmatpush1.msra.mxu0 0.0
  %421 = vmatprep.subr.mxu0 0.0
  %422 = vmatpush1.msra.mxu0 0.0
  %423 = vmatprep.subr.mxu0 0.0
  %424 = vmatpush1.msra.mxu0 0.0
  %425 = vmatprep.subr.mxu0 0.0
  %426 = vmatpush1.msra.mxu0 0.0
  %427 = vmatprep.mubr.f32.mxu0 0.0
  %v428 = vand.u32 %v22, 4294901760
  %429 = vmatmul.mubr.f32.gmra.mrb[0].mxu0 %v428
  %v430 = vpop.f32.mrb[0].mxu0
  %v431 = vadd.f32 %v348, %v430
  %v432 = vpop.f32.mrb[0].mxu0
  %433 = vdwg.mxu0
  %434 = vmatprep.subr.mxu0 0.0
  %v435 = vand.u32 %v14, 4294901760
  %436 = vmatpush1.msra.mxu0 %v435
  %437 = vmatprep.subr.mxu0 0.0
  %v438 = vand.u32 %v15, 4294901760
  %439 = vmatpush1.msra.mxu0 %v438
  %440 = vmatprep.subr.mxu0 0.0
  %v441 = vand.u32 %v16, 4294901760
  %442 = vmatpush1.msra.mxu0 %v441
  %443 = vmatprep.subr.mxu0 0.0
  %v444 = vand.u32 %v17, 4294901760
  %445 = vmatpush1.msra.mxu0 %v444
  %446 = vmatprep.subr.mxu0 0.0
  %447 = vmatpush1.msra.mxu0 0.0
  %448 = vmatprep.subr.mxu0 0.0
  %449 = vmatpush1.msra.mxu0 0.0
  %450 = vmatprep.subr.mxu0 0.0
  %451 = vmatpush1.msra.mxu0 0.0
  %452 = vmatprep.subr.mxu0 0.0
  %453 = vmatpush1.msra.mxu0 0.0
  %454 = vmatprep.subr.mxu0 0.0
  %455 = vmatpush1.msra.mxu0 0.0
  %456 = vmatprep.subr.mxu0 0.0
  %457 = vmatpush1.msra.mxu0 0.0
  %458 = vmatprep.subr.mxu0 0.0
  %459 = vmatpush1.msra.mxu0 0.0
  %460 = vmatprep.subr.mxu0 0.0
  %461 = vmatpush1.msra.mxu0 0.0
  %462 = vmatprep.subr.mxu0 0.0
  %463 = vmatpush1.msra.mxu0 0.0
  %464 = vmatprep.subr.mxu0 0.0
  %465 = vmatpush1.msra.mxu0 0.0
  %466 = vmatprep.subr.mxu0 0.0
  %467 = vmatpush1.msra.mxu0 0.0
  %468 = vmatprep.subr.mxu0 0.0
  %469 = vmatpush1.msra.mxu0 0.0
  %470 = vmatprep.subr.mxu0 0.0
  %471 = vmatpush1.msra.mxu0 0.0
  %472 = vmatprep.subr.mxu0 0.0
  %473 = vmatpush1.msra.mxu0 0.0
  %474 = vmatprep.subr.mxu0 0.0
  %475 = vmatpush1.msra.mxu0 0.0
  %476 = vmatprep.subr.mxu0 0.0
  %477 = vmatpush1.msra.mxu0 0.0
  %478 = vmatprep.subr.mxu0 0.0
  %479 = vmatpush1.msra.mxu0 0.0
  %480 = vmatprep.subr.mxu0 0.0
  %481 = vmatpush1.msra.mxu0 0.0
  %482 = vmatprep.subr.mxu0 0.0
  %483 = vmatpush1.msra.mxu0 0.0
  %484 = vmatprep.subr.mxu0 0.0
  %485 = vmatpush1.msra.mxu0 0.0
  %486 = vmatprep.subr.mxu0 0.0
  %487 = vmatpush1.msra.mxu0 0.0
  %488 = vmatprep.subr.mxu0 0.0
  %489 = vmatpush1.msra.mxu0 0.0
  %490 = vmatprep.subr.mxu0 0.0
  %491 = vmatpush1.msra.mxu0 0.0
  %492 = vmatprep.subr.mxu0 0.0
  %493 = vmatpush1.msra.mxu0 0.0
  %494 = vmatprep.subr.mxu0 0.0
  %495 = vmatpush1.msra.mxu0 0.0
  %496 = vmatprep.subr.mxu0 0.0
  %497 = vmatpush1.msra.mxu0 0.0
  %498 = vmatprep.subr.mxu0 0.0
  %499 = vmatpush1.msra.mxu0 0.0
  %500 = vmatprep.subr.mxu0 0.0
  %501 = vmatpush1.msra.mxu0 0.0
  %502 = vmatprep.mubr.f32.mxu0 0.0
  %v503 = vand.u32 %v22, 4294901760
  %504 = vmatmul.mubr.f32.gmra.mrb[0].mxu0 %v503
  %v505 = vpop.f32.mrb[0].mxu0
  %v506 = vadd.f32 %v431, %v505
  %v507 = vpop.f32.mrb[0].mxu0
  %508 = vdwg.mxu0
  %v509 = vadd.f32 %v19, %v506
  %v510 = vtanh.pop %v509
  %vm511 = vcmask 254976
  %512 = vst.msk [vmem:[%s3] sm:$0x3] %vm511, %v510
  %s513 = scalar_lea.vmem %s0, 2
  %v514 = vld [vmem:[%s513] sm:$0x3]
  %v516 = vsel %vm20, %v510, 0
  %518 = vmatprep.subr.mxu0 0.0
  %v519 = vand.u32 %v14, 4294901760
  %520 = vmatpush1.msra.mxu0 %v519
  %521 = vmatprep.subr.mxu0 0.0
  %v522 = vand.u32 %v15, 4294901760
  %523 = vmatpush1.msra.mxu0 %v522
  %524 = vmatprep.subr.mxu0 0.0
  %v525 = vand.u32 %v16, 4294901760
  %526 = vmatpush1.msra.mxu0 %v525
  %527 = vmatprep.subr.mxu0 0.0
  %v528 = vand.u32 %v17, 4294901760
  %529 = vmatpush1.msra.mxu0 %v528
  %530 = vmatprep.subr.mxu0 0.0
  %531 = vmatpush1.msra.mxu0 0.0
  %532 = vmatprep.subr.mxu0 0.0
  %533 = vmatpush1.msra.mxu0 0.0
  %534 = vmatprep.subr.mxu0 0.0
  %535 = vmatpush1.msra.mxu0 0.0
  %536 = vmatprep.subr.mxu0 0.0
  %537 = vmatpush1.msra.mxu0 0.0
  %538 = vmatprep.subr.mxu0 0.0
  %539 = vmatpush1.msra.mxu0 0.0
  %540 = vmatprep.subr.mxu0 0.0
  %541 = vmatpush1.msra.mxu0 0.0
  %542 = vmatprep.subr.mxu0 0.0
  %543 = vmatpush1.msra.mxu0 0.0
  %544 = vmatprep.subr.mxu0 0.0
  %545 = vmatpush1.msra.mxu0 0.0
  %546 = vmatprep.subr.mxu0 0.0
  %547 = vmatpush1.msra.mxu0 0.0
  %548 = vmatprep.subr.mxu0 0.0
  %549 = vmatpush1.msra.mxu0 0.0
  %550 = vmatprep.subr.mxu0 0.0
  %551 = vmatpush1.msra.mxu0 0.0
  %552 = vmatprep.subr.mxu0 0.0
  %553 = vmatpush1.msra.mxu0 0.0
  %554 = vmatprep.subr.mxu0 0.0
  %555 = vmatpush1.msra.mxu0 0.0
  %556 = vmatprep.subr.mxu0 0.0
  %557 = vmatpush1.msra.mxu0 0.0
  %558 = vmatprep.subr.mxu0 0.0
  %559 = vmatpush1.msra.mxu0 0.0
  %560 = vmatprep.subr.mxu0 0.0
  %561 = vmatpush1.msra.mxu0 0.0
  %562 = vmatprep.subr.mxu0 0.0
  %563 = vmatpush1.msra.mxu0 0.0
  %564 = vmatprep.subr.mxu0 0.0
  %565 = vmatpush1.msra.mxu0 0.0
  %566 = vmatprep.subr.mxu0 0.0
  %567 = vmatpush1.msra.mxu0 0.0
  %568 = vmatprep.subr.mxu0 0.0
  %569 = vmatpush1.msra.mxu0 0.0
  %570 = vmatprep.subr.mxu0 0.0
  %571 = vmatpush1.msra.mxu0 0.0
  %572 = vmatprep.subr.mxu0 0.0
  %573 = vmatpush1.msra.mxu0 0.0
  %574 = vmatprep.subr.mxu0 0.0
  %575 = vmatpush1.msra.mxu0 0.0
  %576 = vmatprep.subr.mxu0 0.0
  %577 = vmatpush1.msra.mxu0 0.0
  %578 = vmatprep.subr.mxu0 0.0
  %579 = vmatpush1.msra.mxu0 0.0
  %580 = vmatprep.subr.mxu0 0.0
  %581 = vmatpush1.msra.mxu0 0.0
  %582 = vmatprep.subr.mxu0 0.0
  %583 = vmatpush1.msra.mxu0 0.0
  %584 = vmatprep.subr.mxu0 0.0
  %585 = vmatpush1.msra.mxu0 0.0
  %586 = vmatprep.mubr.f32.mxu0 0.0
  %v587 = vand.u32 %v516, 4294901760
  %v588 = vsub.f32 %v516, %v587
  %v589 = vand.u32 %v588, 4294901760
  %v590 = vsub.f32 %v588, %v589
  %v591 = vand.u32 %v590, 4294901760
  %592 = vmatmul.mubr.f32.gmra.mrb[0].mxu0 %v591
  %v593 = vpop.f32.mrb[0].mxu0
  %v594 = vadd.f32 0.0, %v593
  %v595 = vpop.f32.mrb[0].mxu0
  %596 = vdwg.mxu0
  %597 = vmatprep.subr.mxu0 0.0
  %v598 = vand.u32 %v14, 4294901760
  %v599 = vsub.f32 %v14, %v598
  %v600 = vand.u32 %v599, 4294901760
  %v601 = vsub.f32 %v599, %v600
  %v602 = vand.u32 %v601, 4294901760
  %603 = vmatpush1.msra.mxu0 %v602
  %604 = vmatprep.subr.mxu0 0.0
  %v605 = vand.u32 %v15, 4294901760
  %v606 = vsub.f32 %v15, %v605
  %v607 = vand.u32 %v606, 4294901760
  %v608 = vsub.f32 %v606, %v607
  %v609 = vand.u32 %v608, 4294901760
  %610 = vmatpush1.msra.mxu0 %v609
  %611 = vmatprep.subr.mxu0 0.0
  %v612 = vand.u32 %v16, 4294901760
  %v613 = vsub.f32 %v16, %v612
  %v614 = vand.u32 %v613, 4294901760
  %v615 = vsub.f32 %v613, %v614
  %v616 = vand.u32 %v615, 4294901760
  %617 = vmatpush1.msra.mxu0 %v616
  %618 = vmatprep.subr.mxu0 0.0
  %v619 = vand.u32 %v17, 4294901760
  %v620 = vsub.f32 %v17, %v619
  %v621 = vand.u32 %v620, 4294901760
  %v622 = vsub.f32 %v620, %v621
  %v623 = vand.u32 %v622, 4294901760
  %624 = vmatpush1.msra.mxu0 %v623
  %625 = vmatprep.subr.mxu0 0.0
  %626 = vmatpush1.msra.mxu0 0.0
  %627 = vmatprep.subr.mxu0 0.0
  %628 = vmatpush1.msra.mxu0 0.0
  %629 = vmatprep.subr.mxu0 0.0
  %630 = vmatpush1.msra.mxu0 0.0
  %631 = vmatprep.subr.mxu0 0.0
  %632 = vmatpush1.msra.mxu0 0.0
  %633 = vmatprep.subr.mxu0 0.0
  %634 = vmatpush1.msra.mxu0 0.0
  %635 = vmatprep.subr.mxu0 0.0
  %636 = vmatpush1.msra.mxu0 0.0
  %637 = vmatprep.subr.mxu0 0.0
  %638 = vmatpush1.msra.mxu0 0.0
  %639 = vmatprep.subr.mxu0 0.0
  %640 = vmatpush1.msra.mxu0 0.0
  %641 = vmatprep.subr.mxu0 0.0
  %642 = vmatpush1.msra.mxu0 0.0
  %643 = vmatprep.subr.mxu0 0.0
  %644 = vmatpush1.msra.mxu0 0.0
  %645 = vmatprep.subr.mxu0 0.0
  %646 = vmatpush1.msra.mxu0 0.0
  %647 = vmatprep.subr.mxu0 0.0
  %648 = vmatpush1.msra.mxu0 0.0
  %649 = vmatprep.subr.mxu0 0.0
  %650 = vmatpush1.msra.mxu0 0.0
  %651 = vmatprep.subr.mxu0 0.0
  %652 = vmatpush1.msra.mxu0 0.0
  %653 = vmatprep.subr.mxu0 0.0
  %654 = vmatpush1.msra.mxu0 0.0
  %655 = vmatprep.subr.mxu0 0.0
  %656 = vmatpush1.msra.mxu0 0.0
  %657 = vmatprep.subr.mxu0 0.0
  %658 = vmatpush1.msra.mxu0 0.0
  %659 = vmatprep.subr.mxu0 0.0
  %660 = vmatpush1.msra.mxu0 0.0
  %661 = vmatprep.subr.mxu0 0.0
  %662 = vmatpush1.msra.mxu0 0.0
  %663 = vmatprep.subr.mxu0 0.0
  %664 = vmatpush1.msra.mxu0 0.0
  %665 = vmatprep.subr.mxu0 0.0
  %666 = vmatpush1.msra.mxu0 0.0
  %667 = vmatprep.subr.mxu0 0.0
  %668 = vmatpush1.msra.mxu0 0.0
  %669 = vmatprep.subr.mxu0 0.0
  %670 = vmatpush1.msra.mxu0 0.0
  %671 = vmatprep.subr.mxu0 0.0
  %672 = vmatpush1.msra.mxu0 0.0
  %673 = vmatprep.subr.mxu0 0.0
  %674 = vmatpush1.msra.mxu0 0.0
  %675 = vmatprep.subr.mxu0 0.0
  %676 = vmatpush1.msra.mxu0 0.0
  %677 = vmatprep.subr.mxu0 0.0
  %678 = vmatpush1.msra.mxu0 0.0
  %679 = vmatprep.subr.mxu0 0.0
  %680 = vmatpush1.msra.mxu0 0.0
  %681 = vmatprep.mubr.f32.mxu0 0.0
  %v682 = vand.u32 %v516, 4294901760
  %683 = vmatmul.mubr.f32.gmra.mrb[0].mxu0 %v682
  %v684 = vpop.f32.mrb[0].mxu0
  %v685 = vadd.f32 %v594, %v684
  %v686 = vpop.f32.mrb[0].mxu0
  %687 = vdwg.mxu0
  %688 = vmatprep.subr.mxu0 0.0
  %v689 = vand.u32 %v14, 4294901760
  %v690 = vsub.f32 %v14, %v689
  %691 = vmatpush1.msra.mxu0 %v690
  %692 = vmatprep.subr.mxu0 0.0
  %v693 = vand.u32 %v15, 4294901760
  %v694 = vsub.f32 %v15, %v693
  %695 = vmatpush1.msra.mxu0 %v694
  %696 = vmatprep.subr.mxu0 0.0
  %v697 = vand.u32 %v16, 4294901760
  %v698 = vsub.f32 %v16, %v697
  %699 = vmatpush1.msra.mxu0 %v698
  %700 = vmatprep.subr.mxu0 0.0
  %v701 = vand.u32 %v17, 4294901760
  %v702 = vsub.f32 %v17, %v701
  %703 = vmatpush1.msra.mxu0 %v702
  %704 = vmatprep.subr.mxu0 0.0
  %705 = vmatpush1.msra.mxu0 0.0
  %706 = vmatprep.subr.mxu0 0.0
  %707 = vmatpush1.msra.mxu0 0.0
  %708 = vmatprep.subr.mxu0 0.0
  %709 = vmatpush1.msra.mxu0 0.0
  %710 = vmatprep.subr.mxu0 0.0
  %711 = vmatpush1.msra.mxu0 0.0
  %712 = vmatprep.subr.mxu0 0.0
  %713 = vmatpush1.msra.mxu0 0.0
  %714 = vmatprep.subr.mxu0 0.0
  %715 = vmatpush1.msra.mxu0 0.0
  %716 = vmatprep.subr.mxu0 0.0
  %717 = vmatpush1.msra.mxu0 0.0
  %718 = vmatprep.subr.mxu0 0.0
  %719 = vmatpush1.msra.mxu0 0.0
  %720 = vmatprep.subr.mxu0 0.0
  %721 = vmatpush1.msra.mxu0 0.0
  %722 = vmatprep.subr.mxu0 0.0
  %723 = vmatpush1.msra.mxu0 0.0
  %724 = vmatprep.subr.mxu0 0.0
  %725 = vmatpush1.msra.mxu0 0.0
  %726 = vmatprep.subr.mxu0 0.0
  %727 = vmatpush1.msra.mxu0 0.0
  %728 = vmatprep.subr.mxu0 0.0
  %729 = vmatpush1.msra.mxu0 0.0
  %730 = vmatprep.subr.mxu0 0.0
  %731 = vmatpush1.msra.mxu0 0.0
  %732 = vmatprep.subr.mxu0 0.0
  %733 = vmatpush1.msra.mxu0 0.0
  %734 = vmatprep.subr.mxu0 0.0
  %735 = vmatpush1.msra.mxu0 0.0
  %736 = vmatprep.subr.mxu0 0.0
  %737 = vmatpush1.msra.mxu0 0.0
  %738 = vmatprep.subr.mxu0 0.0
  %739 = vmatpush1.msra.mxu0 0.0
  %740 = vmatprep.subr.mxu0 0.0
  %741 = vmatpush1.msra.mxu0 0.0
  %742 = vmatprep.subr.mxu0 0.0
  %743 = vmatpush1.msra.mxu0 0.0
  %744 = vmatprep.subr.mxu0 0.0
  %745 = vmatpush1.msra.mxu0 0.0
  %746 = vmatprep.subr.mxu0 0.0
  %747 = vmatpush1.msra.mxu0 0.0
  %748 = vmatprep.subr.mxu0 0.0
  %749 = vmatpush1.msra.mxu0 0.0
  %750 = vmatprep.subr.mxu0 0.0
  %751 = vmatpush1.msra.mxu0 0.0
  %752 = vmatprep.subr.mxu0 0.0
  %753 = vmatpush1.msra.mxu0 0.0
  %754 = vmatprep.subr.mxu0 0.0
  %755 = vmatpush1.msra.mxu0 0.0
  %756 = vmatprep.subr.mxu0 0.0
  %757 = vmatpush1.msra.mxu0 0.0
  %758 = vmatprep.subr.mxu0 0.0
  %759 = vmatpush1.msra.mxu0 0.0
  %760 = vmatprep.mubr.f32.mxu0 0.0
  %v761 = vand.u32 %v516, 4294901760
  %v762 = vsub.f32 %v516, %v761
  %763 = vmatmul.mubr.f32.gmra.mrb[0].mxu0 %v762
  %v764 = vpop.f32.mrb[0].mxu0
  %v765 = vadd.f32 %v685, %v764
  %v766 = vpop.f32.mrb[0].mxu0
  %767 = vdwg.mxu0
  %768 = vmatprep.subr.mxu0 0.0
  %v769 = vand.u32 %v14, 4294901760
  %770 = vmatpush1.msra.mxu0 %v769
  %771 = vmatprep.subr.mxu0 0.0
  %v772 = vand.u32 %v15, 4294901760
  %773 = vmatpush1.msra.mxu0 %v772
  %774 = vmatprep.subr.mxu0 0.0
  %v775 = vand.u32 %v16, 4294901760
  %776 = vmatpush1.msra.mxu0 %v775
  %777 = vmatprep.subr.mxu0 0.0
  %v778 = vand.u32 %v17, 4294901760
  %779 = vmatpush1.msra.mxu0 %v778
  %780 = vmatprep.subr.mxu0 0.0
  %781 = vmatpush1.msra.mxu0 0.0
  %782 = vmatprep.subr.mxu0 0.0
  %783 = vmatpush1.msra.mxu0 0.0
  %784 = vmatprep.subr.mxu0 0.0
  %785 = vmatpush1.msra.mxu0 0.0
  %786 = vmatprep.subr.mxu0 0.0
  %787 = vmatpush1.msra.mxu0 0.0
  %788 = vmatprep.subr.mxu0 0.0
  %789 = vmatpush1.msra.mxu0 0.0
  %790 = vmatprep.subr.mxu0 0.0
  %791 = vmatpush1.msra.mxu0 0.0
  %792 = vmatprep.subr.mxu0 0.0
  %793 = vmatpush1.msra.mxu0 0.0
  %794 = vmatprep.subr.mxu0 0.0
  %795 = vmatpush1.msra.mxu0 0.0
  %796 = vmatprep.subr.mxu0 0.0
  %797 = vmatpush1.msra.mxu0 0.0
  %798 = vmatprep.subr.mxu0 0.0
  %799 = vmatpush1.msra.mxu0 0.0
  %800 = vmatprep.subr.mxu0 0.0
  %801 = vmatpush1.msra.mxu0 0.0
  %802 = vmatprep.subr.mxu0 0.0
  %803 = vmatpush1.msra.mxu0 0.0
  %804 = vmatprep.subr.mxu0 0.0
  %805 = vmatpush1.msra.mxu0 0.0
  %806 = vmatprep.subr.mxu0 0.0
  %807 = vmatpush1.msra.mxu0 0.0
  %808 = vmatprep.subr.mxu0 0.0
  %809 = vmatpush1.msra.mxu0 0.0
  %810 = vmatprep.subr.mxu0 0.0
  %811 = vmatpush1.msra.mxu0 0.0
  %812 = vmatprep.subr.mxu0 0.0
  %813 = vmatpush1.msra.mxu0 0.0
  %814 = vmatprep.subr.mxu0 0.0
  %815 = vmatpush1.msra.mxu0 0.0
  %816 = vmatprep.subr.mxu0 0.0
  %817 = vmatpush1.msra.mxu0 0.0
  %818 = vmatprep.subr.mxu0 0.0
  %819 = vmatpush1.msra.mxu0 0.0
  %820 = vmatprep.subr.mxu0 0.0
  %821 = vmatpush1.msra.mxu0 0.0
  %822 = vmatprep.subr.mxu0 0.0
  %823 = vmatpush1.msra.mxu0 0.0
  %824 = vmatprep.subr.mxu0 0.0
  %825 = vmatpush1.msra.mxu0 0.0
  %826 = vmatprep.subr.mxu0 0.0
  %827 = vmatpush1.msra.mxu0 0.0
  %828 = vmatprep.subr.mxu0 0.0
  %829 = vmatpush1.msra.mxu0 0.0
  %830 = vmatprep.subr.mxu0 0.0
  %831 = vmatpush1.msra.mxu0 0.0
  %832 = vmatprep.subr.mxu0 0.0
  %833 = vmatpush1.msra.mxu0 0.0
  %834 = vmatprep.subr.mxu0 0.0
  %835 = vmatpush1.msra.mxu0 0.0
  %836 = vmatprep.mubr.f32.mxu0 0.0
  %v837 = vand.u32 %v516, 4294901760
  %v838 = vsub.f32 %v516, %v837
  %v839 = vand.u32 %v838, 4294901760
  %840 = vmatmul.mubr.f32.gmra.mrb[0].mxu0 %v839
  %v841 = vpop.f32.mrb[0].mxu0
  %v842 = vadd.f32 %v765, %v841
  %v843 = vpop.f32.mrb[0].mxu0
  %844 = vdwg.mxu0
  %845 = vmatprep.subr.mxu0 0.0
  %v846 = vand.u32 %v14, 4294901760
  %v847 = vsub.f32 %v14, %v846
  %v848 = vand.u32 %v847, 4294901760
  %849 = vmatpush1.msra.mxu0 %v848
  %850 = vmatprep.subr.mxu0 0.0
  %v851 = vand.u32 %v15, 4294901760
  %v852 = vsub.f32 %v15, %v851
  %v853 = vand.u32 %v852, 4294901760
  %854 = vmatpush1.msra.mxu0 %v853
  %855 = vmatprep.subr.mxu0 0.0
  %v856 = vand.u32 %v16, 4294901760
  %v857 = vsub.f32 %v16, %v856
  %v858 = vand.u32 %v857, 4294901760
  %859 = vmatpush1.msra.mxu0 %v858
  %860 = vmatprep.subr.mxu0 0.0
  %v861 = vand.u32 %v17, 4294901760
  %v862 = vsub.f32 %v17, %v861
  %v863 = vand.u32 %v862, 4294901760
  %864 = vmatpush1.msra.mxu0 %v863
  %865 = vmatprep.subr.mxu0 0.0
  %866 = vmatpush1.msra.mxu0 0.0
  %867 = vmatprep.subr.mxu0 0.0
  %868 = vmatpush1.msra.mxu0 0.0
  %869 = vmatprep.subr.mxu0 0.0
  %870 = vmatpush1.msra.mxu0 0.0
  %871 = vmatprep.subr.mxu0 0.0
  %872 = vmatpush1.msra.mxu0 0.0
  %873 = vmatprep.subr.mxu0 0.0
  %874 = vmatpush1.msra.mxu0 0.0
  %875 = vmatprep.subr.mxu0 0.0
  %876 = vmatpush1.msra.mxu0 0.0
  %877 = vmatprep.subr.mxu0 0.0
  %878 = vmatpush1.msra.mxu0 0.0
  %879 = vmatprep.subr.mxu0 0.0
  %880 = vmatpush1.msra.mxu0 0.0
  %881 = vmatprep.subr.mxu0 0.0
  %882 = vmatpush1.msra.mxu0 0.0
  %883 = vmatprep.subr.mxu0 0.0
  %884 = vmatpush1.msra.mxu0 0.0
  %885 = vmatprep.subr.mxu0 0.0
  %886 = vmatpush1.msra.mxu0 0.0
  %887 = vmatprep.subr.mxu0 0.0
  %888 = vmatpush1.msra.mxu0 0.0
  %889 = vmatprep.subr.mxu0 0.0
  %890 = vmatpush1.msra.mxu0 0.0
  %891 = vmatprep.subr.mxu0 0.0
  %892 = vmatpush1.msra.mxu0 0.0
  %893 = vmatprep.subr.mxu0 0.0
  %894 = vmatpush1.msra.mxu0 0.0
  %895 = vmatprep.subr.mxu0 0.0
  %896 = vmatpush1.msra.mxu0 0.0
  %897 = vmatprep.subr.mxu0 0.0
  %898 = vmatpush1.msra.mxu0 0.0
  %899 = vmatprep.subr.mxu0 0.0
  %900 = vmatpush1.msra.mxu0 0.0
  %901 = vmatprep.subr.mxu0 0.0
  %902 = vmatpush1.msra.mxu0 0.0
  %903 = vmatprep.subr.mxu0 0.0
  %904 = vmatpush1.msra.mxu0 0.0
  %905 = vmatprep.subr.mxu0 0.0
  %906 = vmatpush1.msra.mxu0 0.0
  %907 = vmatprep.subr.mxu0 0.0
  %908 = vmatpush1.msra.mxu0 0.0
  %909 = vmatprep.subr.mxu0 0.0
  %910 = vmatpush1.msra.mxu0 0.0
  %911 = vmatprep.subr.mxu0 0.0
  %912 = vmatpush1.msra.mxu0 0.0
  %913 = vmatprep.subr.mxu0 0.0
  %914 = vmatpush1.msra.mxu0 0.0
  %915 = vmatprep.subr.mxu0 0.0
  %916 = vmatpush1.msra.mxu0 0.0
  %917 = vmatprep.subr.mxu0 0.0
  %918 = vmatpush1.msra.mxu0 0.0
  %919 = vmatprep.subr.mxu0 0.0
  %920 = vmatpush1.msra.mxu0 0.0
  %921 = vmatprep.mubr.f32.mxu0 0.0
  %v922 = vand.u32 %v516, 4294901760
  %923 = vmatmul.mubr.f32.gmra.mrb[0].mxu0 %v922
  %v924 = vpop.f32.mrb[0].mxu0
  %v925 = vadd.f32 %v842, %v924
  %v926 = vpop.f32.mrb[0].mxu0
  %927 = vdwg.mxu0
  %928 = vmatprep.subr.mxu0 0.0
  %v929 = vand.u32 %v14, 4294901760
  %930 = vmatpush1.msra.mxu0 %v929
  %931 = vmatprep.subr.mxu0 0.0
  %v932 = vand.u32 %v15, 4294901760
  %933 = vmatpush1.msra.mxu0 %v932
  %934 = vmatprep.subr.mxu0 0.0
  %v935 = vand.u32 %v16, 4294901760
  %936 = vmatpush1.msra.mxu0 %v935
  %937 = vmatprep.subr.mxu0 0.0
  %v938 = vand.u32 %v17, 4294901760
  %939 = vmatpush1.msra.mxu0 %v938
  %940 = vmatprep.subr.mxu0 0.0
  %941 = vmatpush1.msra.mxu0 0.0
  %942 = vmatprep.subr.mxu0 0.0
  %943 = vmatpush1.msra.mxu0 0.0
  %944 = vmatprep.subr.mxu0 0.0
  %945 = vmatpush1.msra.mxu0 0.0
  %946 = vmatprep.subr.mxu0 0.0
  %947 = vmatpush1.msra.mxu0 0.0
  %948 = vmatprep.subr.mxu0 0.0
  %949 = vmatpush1.msra.mxu0 0.0
  %950 = vmatprep.subr.mxu0 0.0
  %951 = vmatpush1.msra.mxu0 0.0
  %952 = vmatprep.subr.mxu0 0.0
  %953 = vmatpush1.msra.mxu0 0.0
  %954 = vmatprep.subr.mxu0 0.0
  %955 = vmatpush1.msra.mxu0 0.0
  %956 = vmatprep.subr.mxu0 0.0
  %957 = vmatpush1.msra.mxu0 0.0
  %958 = vmatprep.subr.mxu0 0.0
  %959 = vmatpush1.msra.mxu0 0.0
  %960 = vmatprep.subr.mxu0 0.0
  %961 = vmatpush1.msra.mxu0 0.0
  %962 = vmatprep.subr.mxu0 0.0
  %963 = vmatpush1.msra.mxu0 0.0
  %964 = vmatprep.subr.mxu0 0.0
  %965 = vmatpush1.msra.mxu0 0.0
  %966 = vmatprep.subr.mxu0 0.0
  %967 = vmatpush1.msra.mxu0 0.0
  %968 = vmatprep.subr.mxu0 0.0
  %969 = vmatpush1.msra.mxu0 0.0
  %970 = vmatprep.subr.mxu0 0.0
  %971 = vmatpush1.msra.mxu0 0.0
  %972 = vmatprep.subr.mxu0 0.0
  %973 = vmatpush1.msra.mxu0 0.0
  %974 = vmatprep.subr.mxu0 0.0
  %975 = vmatpush1.msra.mxu0 0.0
  %976 = vmatprep.subr.mxu0 0.0
  %977 = vmatpush1.msra.mxu0 0.0
  %978 = vmatprep.subr.mxu0 0.0
  %979 = vmatpush1.msra.mxu0 0.0
  %980 = vmatprep.subr.mxu0 0.0
  %981 = vmatpush1.msra.mxu0 0.0
  %982 = vmatprep.subr.mxu0 0.0
  %983 = vmatpush1.msra.mxu0 0.0
  %984 = vmatprep.subr.mxu0 0.0
  %985 = vmatpush1.msra.mxu0 0.0
  %986 = vmatprep.subr.mxu0 0.0
  %987 = vmatpush1.msra.mxu0 0.0
  %988 = vmatprep.subr.mxu0 0.0
  %989 = vmatpush1.msra.mxu0 0.0
  %990 = vmatprep.subr.mxu0 0.0
  %991 = vmatpush1.msra.mxu0 0.0
  %992 = vmatprep.subr.mxu0 0.0
  %993 = vmatpush1.msra.mxu0 0.0
  %994 = vmatprep.subr.mxu0 0.0
  %995 = vmatpush1.msra.mxu0 0.0
  %996 = vmatprep.mubr.f32.mxu0 0.0
  %v997 = vand.u32 %v516, 4294901760
  %998 = vmatmul.mubr.f32.gmra.mrb[0].mxu0 %v997
  %v999 = vpop.f32.mrb[0].mxu0
  %v1000 = vadd.f32 %v925, %v999
  %v1001 = vpop.f32.mrb[0].mxu0
  %1002 = vdwg.mxu0
  %v1003 = vadd.f32 %v514, %v1000
  %v1004 = vtanh.pop %v1003
  %s1005 = scalar_lea.vmem %s3, 2
  %1006 = vst.msk [vmem:[%s1005] sm:$0x3] %vm511, %v1004
  %s1007 = scalar_lea.vmem %s0, 4
  %v1008 = vld [vmem:[%s1007] sm:$0x3]
  %v1010 = vsel %vm20, %v1004, 0
  %1012 = vmatprep.subr.mxu0 0.0
  %v1013 = vand.u32 %v14, 4294901760
  %1014 = vmatpush1.msra.mxu0 %v1013
  %1015 = vmatprep.subr.mxu0 0.0
  %v1016 = vand.u32 %v15, 4294901760
  %1017 = vmatpush1.msra.mxu0 %v1016
  %1018 = vmatprep.subr.mxu0 0.0
  %v1019 = vand.u32 %v16, 4294901760
  %1020 = vmatpush1.msra.mxu0 %v1019
  %1021 = vmatprep.subr.mxu0 0.0
  %v1022 = vand.u32 %v17, 4294901760
  %1023 = vmatpush1.msra.mxu0 %v1022
  %1024 = vmatprep.subr.mxu0 0.0
  %1025 = vmatpush1.msra.mxu0 0.0
  %1026 = vmatprep.subr.mxu0 0.0
  %1027 = vmatpush1.msra.mxu0 0.0
  %1028 = vmatprep.subr.mxu0 0.0
  %1029 = vmatpush1.msra.mxu0 0.0
  %1030 = vmatprep.subr.mxu0 0.0
  %1031 = vmatpush1.msra.mxu0 0.0
  %1032 = vmatprep.subr.mxu0 0.0
  %1033 = vmatpush1.msra.mxu0 0.0
  %1034 = vmatprep.subr.mxu0 0.0
  %1035 = vmatpush1.msra.mxu0 0.0
  %1036 = vmatprep.subr.mxu0 0.0
  %1037 = vmatpush1.msra.mxu0 0.0
  %1038 = vmatprep.subr.mxu0 0.0
  %1039 = vmatpush1.msra.mxu0 0.0
  %1040 = vmatprep.subr.mxu0 0.0
  %1041 = vmatpush1.msra.mxu0 0.0
  %1042 = vmatprep.subr.mxu0 0.0
  %1043 = vmatpush1.msra.mxu0 0.0
  %1044 = vmatprep.subr.mxu0 0.0
  %1045 = vmatpush1.msra.mxu0 0.0
  %1046 = vmatprep.subr.mxu0 0.0
  %1047 = vmatpush1.msra.mxu0 0.0
  %1048 = vmatprep.subr.mxu0 0.0
  %1049 = vmatpush1.msra.mxu0 0.0
  %1050 = vmatprep.subr.mxu0 0.0
  %1051 = vmatpush1.msra.mxu0 0.0
  %1052 = vmatprep.subr.mxu0 0.0
  %1053 = vmatpush1.msra.mxu0 0.0
  %1054 = vmatprep.subr.mxu0 0.0
  %1055 = vmatpush1.msra.mxu0 0.0
  %1056 = vmatprep.subr.mxu0 0.0
  %1057 = vmatpush1.msra.mxu0 0.0
  %1058 = vmatprep.subr.mxu0 0.0
  %1059 = vmatpush1.msra.mxu0 0.0
  %1060 = vmatprep.subr.mxu0 0.0
  %1061 = vmatpush1.msra.mxu0 0.0
  %1062 = vmatprep.subr.mxu0 0.0
  %1063 = vmatpush1.msra.mxu0 0.0
  %1064 = vmatprep.subr.mxu0 0.0
  %1065 = vmatpush1.msra.mxu0 0.0
  %1066 = vmatprep.subr.mxu0 0.0
  %1067 = vmatpush1.msra.mxu0 0.0
  %1068 = vmatprep.subr.mxu0 0.0
  %1069 = vmatpush1.msra.mxu0 0.0
  %1070 = vmatprep.subr.mxu0 0.0
  %1071 = vmatpush1.msra.mxu0 0.0
  %1072 = vmatprep.subr.mxu0 0.0
  %1073 = vmatpush1.msra.mxu0 0.0
  %1074 = vmatprep.subr.mxu0 0.0
  %1075 = vmatpush1.msra.mxu0 0.0
  %1076 = vmatprep.subr.mxu0 0.0
  %1077 = vmatpush1.msra.mxu0 0.0
  %1078 = vmatprep.subr.mxu0 0.0
  %1079 = vmatpush1.msra.mxu0 0.0
  %1080 = vmatprep.mubr.f32.mxu0 0.0
  %v1081 = vand.u32 %v1010, 4294901760
  %v1082 = vsub.f32 %v1010, %v1081
  %v1083 = vand.u32 %v1082, 4294901760
  %v1084 = vsub.f32 %v1082, %v1083
  %v1085 = vand.u32 %v1084, 4294901760
  %1086 = vmatmul.mubr.f32.gmra.mrb[0].mxu0 %v1085
  %v1087 = vpop.f32.mrb[0].mxu0
  %v1088 = vadd.f32 0.0, %v1087
  %v1089 = vpop.f32.mrb[0].mxu0
  %1090 = vdwg.mxu0
  %1091 = vmatprep.subr.mxu0 0.0
  %v1092 = vand.u32 %v14, 4294901760
  %v1093 = vsub.f32 %v14, %v1092
  %v1094 = vand.u32 %v1093, 4294901760
  %v1095 = vsub.f32 %v1093, %v1094
  %v1096 = vand.u32 %v1095, 4294901760
  %1097 = vmatpush1.msra.mxu0 %v1096
  %1098 = vmatprep.subr.mxu0 0.0
  %v1099 = vand.u32 %v15, 4294901760
  %v1100 = vsub.f32 %v15, %v1099
  %v1101 = vand.u32 %v1100, 4294901760
  %v1102 = vsub.f32 %v1100, %v1101
  %v1103 = vand.u32 %v1102, 4294901760
  %1104 = vmatpush1.msra.mxu0 %v1103
  %1105 = vmatprep.subr.mxu0 0.0
  %v1106 = vand.u32 %v16, 4294901760
  %v1107 = vsub.f32 %v16, %v1106
  %v1108 = vand.u32 %v1107, 4294901760
  %v1109 = vsub.f32 %v1107, %v1108
  %v1110 = vand.u32 %v1109, 4294901760
  %1111 = vmatpush1.msra.mxu0 %v1110
  %1112 = vmatprep.subr.mxu0 0.0
  %v1113 = vand.u32 %v17, 4294901760
  %v1114 = vsub.f32 %v17, %v1113
  %v1115 = vand.u32 %v1114, 4294901760
  %v1116 = vsub.f32 %v1114, %v1115
  %v1117 = vand.u32 %v1116, 4294901760
  %1118 = vmatpush1.msra.mxu0 %v1117
  %1119 = vmatprep.subr.mxu0 0.0
  %1120 = vmatpush1.msra.mxu0 0.0
  %1121 = vmatprep.subr.mxu0 0.0
  %1122 = vmatpush1.msra.mxu0 0.0
  %1123 = vmatprep.subr.mxu0 0.0
  %1124 = vmatpush1.msra.mxu0 0.0
  %1125 = vmatprep.subr.mxu0 0.0
  %1126 = vmatpush1.msra.mxu0 0.0
  %1127 = vmatprep.subr.mxu0 0.0
  %1128 = vmatpush1.msra.mxu0 0.0
  %1129 = vmatprep.subr.mxu0 0.0
  %1130 = vmatpush1.msra.mxu0 0.0
  %1131 = vmatprep.subr.mxu0 0.0
  %1132 = vmatpush1.msra.mxu0 0.0
  %1133 = vmatprep.subr.mxu0 0.0
  %1134 = vmatpush1.msra.mxu0 0.0
  %1135 = vmatprep.subr.mxu0 0.0
  %1136 = vmatpush1.msra.mxu0 0.0
  %1137 = vmatprep.subr.mxu0 0.0
  %1138 = vmatpush1.msra.mxu0 0.0
  %1139 = vmatprep.subr.mxu0 0.0
  %1140 = vmatpush1.msra.mxu0 0.0
  %1141 = vmatprep.subr.mxu0 0.0
  %1142 = vmatpush1.msra.mxu0 0.0
  %1143 = vmatprep.subr.mxu0 0.0
  %1144 = vmatpush1.msra.mxu0 0.0
  %1145 = vmatprep.subr.mxu0 0.0
  %1146 = vmatpush1.msra.mxu0 0.0
  %1147 = vmatprep.subr.mxu0 0.0
  %1148 = vmatpush1.msra.mxu0 0.0
  %1149 = vmatprep.subr.mxu0 0.0
  %1150 = vmatpush1.msra.mxu0 0.0
  %1151 = vmatprep.subr.mxu0 0.0
  %1152 = vmatpush1.msra.mxu0 0.0
  %1153 = vmatprep.subr.mxu0 0.0
  %1154 = vmatpush1.msra.mxu0 0.0
  %1155 = vmatprep.subr.mxu0 0.0
  %1156 = vmatpush1.msra.mxu0 0.0
  %1157 = vmatprep.subr.mxu0 0.0
  %1158 = vmatpush1.msra.mxu0 0.0
  %1159 = vmatprep.subr.mxu0 0.0
  %1160 = vmatpush1.msra.mxu0 0.0
  %1161 = vmatprep.subr.mxu0 0.0
  %1162 = vmatpush1.msra.mxu0 0.0
  %1163 = vmatprep.subr.mxu0 0.0
  %1164 = vmatpush1.msra.mxu0 0.0
  %1165 = vmatprep.subr.mxu0 0.0
  %1166 = vmatpush1.msra.mxu0 0.0
  %1167 = vmatprep.subr.mxu0 0.0
  %1168 = vmatpush1.msra.mxu0 0.0
  %1169 = vmatprep.subr.mxu0 0.0
  %1170 = vmatpush1.msra.mxu0 0.0
  %1171 = vmatprep.subr.mxu0 0.0
  %1172 = vmatpush1.msra.mxu0 0.0
  %1173 = vmatprep.subr.mxu0 0.0
  %1174 = vmatpush1.msra.mxu0 0.0
  %1175 = vmatprep.mubr.f32.mxu0 0.0
  %v1176 = vand.u32 %v1010, 4294901760
  %1177 = vmatmul.mubr.f32.gmra.mrb[0].mxu0 %v1176
  %v1178 = vpop.f32.mrb[0].mxu0
  %v1179 = vadd.f32 %v1088, %v1178
  %v1180 = vpop.f32.mrb[0].mxu0
  %1181 = vdwg.mxu0
  %1182 = vmatprep.subr.mxu0 0.0
  %v1183 = vand.u32 %v14, 4294901760
  %v1184 = vsub.f32 %v14, %v1183
  %1185 = vmatpush1.msra.mxu0 %v1184
  %1186 = vmatprep.subr.mxu0 0.0
  %v1187 = vand.u32 %v15, 4294901760
  %v1188 = vsub.f32 %v15, %v1187
  %1189 = vmatpush1.msra.mxu0 %v1188
  %1190 = vmatprep.subr.mxu0 0.0
  %v1191 = vand.u32 %v16, 4294901760
  %v1192 = vsub.f32 %v16, %v1191
  %1193 = vmatpush1.msra.mxu0 %v1192
  %1194 = vmatprep.subr.mxu0 0.0
  %v1195 = vand.u32 %v17, 4294901760
  %v1196 = vsub.f32 %v17, %v1195
  %1197 = vmatpush1.msra.mxu0 %v1196
  %1198 = vmatprep.subr.mxu0 0.0
  %1199 = vmatpush1.msra.mxu0 0.0
  %1200 = vmatprep.subr.mxu0 0.0
  %1201 = vmatpush1.msra.mxu0 0.0
  %1202 = vmatprep.subr.mxu0 0.0
  %1203 = vmatpush1.msra.mxu0 0.0
  %1204 = vmatprep.subr.mxu0 0.0
  %1205 = vmatpush1.msra.mxu0 0.0
  %1206 = vmatprep.subr.mxu0 0.0
  %1207 = vmatpush1.msra.mxu0 0.0
  %1208 = vmatprep.subr.mxu0 0.0
  %1209 = vmatpush1.msra.mxu0 0.0
  %1210 = vmatprep.subr.mxu0 0.0
  %1211 = vmatpush1.msra.mxu0 0.0
  %1212 = vmatprep.subr.mxu0 0.0
  %1213 = vmatpush1.msra.mxu0 0.0
  %1214 = vmatprep.subr.mxu0 0.0
  %1215 = vmatpush1.msra.mxu0 0.0
  %1216 = vmatprep.subr.mxu0 0.0
  %1217 = vmatpush1.msra.mxu0 0.0
  %1218 = vmatprep.subr.mxu0 0.0
  %1219 = vmatpush1.msra.mxu0 0.0
  %1220 = vmatprep.subr.mxu0 0.0
  %1221 = vmatpush1.msra.mxu0 0.0
  %1222 = vmatprep.subr.mxu0 0.0
  %1223 = vmatpush1.msra.mxu0 0.0
  %1224 = vmatprep.subr.mxu0 0.0
  %1225 = vmatpush1.msra.mxu0 0.0
  %1226 = vmatprep.subr.mxu0 0.0
  %1227 = vmatpush1.msra.mxu0 0.0
  %1228 = vmatprep.subr.mxu0 0.0
  %1229 = vmatpush1.msra.mxu0 0.0
  %1230 = vmatprep.subr.mxu0 0.0
  %1231 = vmatpush1.msra.mxu0 0.0
  %1232 = vmatprep.subr.mxu0 0.0
  %1233 = vmatpush1.msra.mxu0 0.0
  %1234 = vmatprep.subr.mxu0 0.0
  %1235 = vmatpush1.msra.mxu0 0.0
  %1236 = vmatprep.subr.mxu0 0.0
  %1237 = vmatpush1.msra.mxu0 0.0
  %1238 = vmatprep.subr.mxu0 0.0
  %1239 = vmatpush1.msra.mxu0 0.0
  %1240 = vmatprep.subr.mxu0 0.0
  %1241 = vmatpush1.msra.mxu0 0.0
  %1242 = vmatprep.subr.mxu0 0.0
  %1243 = vmatpush1.msra.mxu0 0.0
  %1244 = vmatprep.subr.mxu0 0.0
  %1245 = vmatpush1.msra.mxu0 0.0
  %1246 = vmatprep.subr.mxu0 0.0
  %1247 = vmatpush1.msra.mxu0 0.0
  %1248 = vmatprep.subr.mxu0 0.0
  %1249 = vmatpush1.msra.mxu0 0.0
  %1250 = vmatprep.subr.mxu0 0.0
  %1251 = vmatpush1.msra.mxu0 0.0
  %1252 = vmatprep.subr.mxu0 0.0
  %1253 = vmatpush1.msra.mxu0 0.0
  %1254 = vmatprep.mubr.f32.mxu0 0.0
  %v1255 = vand.u32 %v1010, 4294901760
  %v1256 = vsub.f32 %v1010, %v1255
  %1257 = vmatmul.mubr.f32.gmra.mrb[0].mxu0 %v1256
  %v1258 = vpop.f32.mrb[0].mxu0
  %v1259 = vadd.f32 %v1179, %v1258
  %v1260 = vpop.f32.mrb[0].mxu0
  %1261 = vdwg.mxu0
  %1262 = vmatprep.subr.mxu0 0.0
  %v1263 = vand.u32 %v14, 4294901760
  %1264 = vmatpush1.msra.mxu0 %v1263
  %1265 = vmatprep.subr.mxu0 0.0
  %v1266 = vand.u32 %v15, 4294901760
  %1267 = vmatpush1.msra.mxu0 %v1266
  %1268 = vmatprep.subr.mxu0 0.0
  %v1269 = vand.u32 %v16, 4294901760
  %1270 = vmatpush1.msra.mxu0 %v1269
  %1271 = vmatprep.subr.mxu0 0.0
  %v1272 = vand.u32 %v17, 4294901760
  %1273 = vmatpush1.msra.mxu0 %v1272
  %1274 = vmatprep.subr.mxu0 0.0
  %1275 = vmatpush1.msra.mxu0 0.0
  %1276 = vmatprep.subr.mxu0 0.0
  %1277 = vmatpush1.msra.mxu0 0.0
  %1278 = vmatprep.subr.mxu0 0.0
  %1279 = vmatpush1.msra.mxu0 0.0
  %1280 = vmatprep.subr.mxu0 0.0
  %1281 = vmatpush1.msra.mxu0 0.0
  %1282 = vmatprep.subr.mxu0 0.0
  %1283 = vmatpush1.msra.mxu0 0.0
  %1284 = vmatprep.subr.mxu0 0.0
  %1285 = vmatpush1.msra.mxu0 0.0
  %1286 = vmatprep.subr.mxu0 0.0
  %1287 = vmatpush1.msra.mxu0 0.0
  %1288 = vmatprep.subr.mxu0 0.0
  %1289 = vmatpush1.msra.mxu0 0.0
  %1290 = vmatprep.subr.mxu0 0.0
  %1291 = vmatpush1.msra.mxu0 0.0
  %1292 = vmatprep.subr.mxu0 0.0
  %1293 = vmatpush1.msra.mxu0 0.0
  %1294 = vmatprep.subr.mxu0 0.0
  %1295 = vmatpush1.msra.mxu0 0.0
  %1296 = vmatprep.subr.mxu0 0.0
  %1297 = vmatpush1.msra.mxu0 0.0
  %1298 = vmatprep.subr.mxu0 0.0
  %1299 = vmatpush1.msra.mxu0 0.0
  %1300 = vmatprep.subr.mxu0 0.0
  %1301 = vmatpush1.msra.mxu0 0.0
  %1302 = vmatprep.subr.mxu0 0.0
  %1303 = vmatpush1.msra.mxu0 0.0
  %1304 = vmatprep.subr.mxu0 0.0
  %1305 = vmatpush1.msra.mxu0 0.0
  %1306 = vmatprep.subr.mxu0 0.0
  %1307 = vmatpush1.msra.mxu0 0.0
  %1308 = vmatprep.subr.mxu0 0.0
  %1309 = vmatpush1.msra.mxu0 0.0
  %1310 = vmatprep.subr.mxu0 0.0
  %1311 = vmatpush1.msra.mxu0 0.0
  %1312 = vmatprep.subr.mxu0 0.0
  %1313 = vmatpush1.msra.mxu0 0.0
  %1314 = vmatprep.subr.mxu0 0.0
  %1315 = vmatpush1.msra.mxu0 0.0
  %1316 = vmatprep.subr.mxu0 0.0
  %1317 = vmatpush1.msra.mxu0 0.0
  %1318 = vmatprep.subr.mxu0 0.0
  %1319 = vmatpush1.msra.mxu0 0.0
  %1320 = vmatprep.subr.mxu0 0.0
  %1321 = vmatpush1.msra.mxu0 0.0
  %1322 = vmatprep.subr.mxu0 0.0
  %1323 = vmatpush1.msra.mxu0 0.0
  %1324 = vmatprep.subr.mxu0 0.0
  %1325 = vmatpush1.msra.mxu0 0.0
  %1326 = vmatprep.subr.mxu0 0.0
  %1327 = vmatpush1.msra.mxu0 0.0
  %1328 = vmatprep.subr.mxu0 0.0
  %1329 = vmatpush1.msra.mxu0 0.0
  %1330 = vmatprep.mubr.f32.mxu0 0.0
  %v1331 = vand.u32 %v1010, 4294901760
  %v1332 = vsub.f32 %v1010, %v1331
  %v1333 = vand.u32 %v1332, 4294901760
  %1334 = vmatmul.mubr.f32.gmra.mrb[0].mxu0 %v1333
  %v1335 = vpop.f32.mrb[0].mxu0
  %v1336 = vadd.f32 %v1259, %v1335
  %v1337 = vpop.f32.mrb[0].mxu0
  %1338 = vdwg.mxu0
  %1339 = vmatprep.subr.mxu0 0.0
  %v1340 = vand.u32 %v14, 4294901760
  %v1341 = vsub.f32 %v14, %v1340
  %v1342 = vand.u32 %v1341, 4294901760
  %1343 = vmatpush1.msra.mxu0 %v1342
  %1344 = vmatprep.subr.mxu0 0.0
  %v1345 = vand.u32 %v15, 4294901760
  %v1346 = vsub.f32 %v15, %v1345
  %v1347 = vand.u32 %v1346, 4294901760
  %1348 = vmatpush1.msra.mxu0 %v1347
  %1349 = vmatprep.subr.mxu0 0.0
  %v1350 = vand.u32 %v16, 4294901760
  %v1351 = vsub.f32 %v16, %v1350
  %v1352 = vand.u32 %v1351, 4294901760
  %1353 = vmatpush1.msra.mxu0 %v1352
  %1354 = vmatprep.subr.mxu0 0.0
  %v1355 = vand.u32 %v17, 4294901760
  %v1356 = vsub.f32 %v17, %v1355
  %v1357 = vand.u32 %v1356, 4294901760
  %1358 = vmatpush1.msra.mxu0 %v1357
  %1359 = vmatprep.subr.mxu0 0.0
  %1360 = vmatpush1.msra.mxu0 0.0
  %1361 = vmatprep.subr.mxu0 0.0
  %1362 = vmatpush1.msra.mxu0 0.0
  %1363 = vmatprep.subr.mxu0 0.0
  %1364 = vmatpush1.msra.mxu0 0.0
  %1365 = vmatprep.subr.mxu0 0.0
  %1366 = vmatpush1.msra.mxu0 0.0
  %1367 = vmatprep.subr.mxu0 0.0
  %1368 = vmatpush1.msra.mxu0 0.0
  %1369 = vmatprep.subr.mxu0 0.0
  %1370 = vmatpush1.msra.mxu0 0.0
  %1371 = vmatprep.subr.mxu0 0.0
  %1372 = vmatpush1.msra.mxu0 0.0
  %1373 = vmatprep.subr.mxu0 0.0
  %1374 = vmatpush1.msra.mxu0 0.0
  %1375 = vmatprep.subr.mxu0 0.0
  %1376 = vmatpush1.msra.mxu0 0.0
  %1377 = vmatprep.subr.mxu0 0.0
  %1378 = vmatpush1.msra.mxu0 0.0
  %1379 = vmatprep.subr.mxu0 0.0
  %1380 = vmatpush1.msra.mxu0 0.0
  %1381 = vmatprep.subr.mxu0 0.0
  %1382 = vmatpush1.msra.mxu0 0.0
  %1383 = vmatprep.subr.mxu0 0.0
  %1384 = vmatpush1.msra.mxu0 0.0
  %1385 = vmatprep.subr.mxu0 0.0
  %1386 = vmatpush1.msra.mxu0 0.0
  %1387 = vmatprep.subr.mxu0 0.0
  %1388 = vmatpush1.msra.mxu0 0.0
  %1389 = vmatprep.subr.mxu0 0.0
  %1390 = vmatpush1.msra.mxu0 0.0
  %1391 = vmatprep.subr.mxu0 0.0
  %1392 = vmatpush1.msra.mxu0 0.0
  %1393 = vmatprep.subr.mxu0 0.0
  %1394 = vmatpush1.msra.mxu0 0.0
  %1395 = vmatprep.subr.mxu0 0.0
  %1396 = vmatpush1.msra.mxu0 0.0
  %1397 = vmatprep.subr.mxu0 0.0
  %1398 = vmatpush1.msra.mxu0 0.0
  %1399 = vmatprep.subr.mxu0 0.0
  %1400 = vmatpush1.msra.mxu0 0.0
  %1401 = vmatprep.subr.mxu0 0.0
  %1402 = vmatpush1.msra.mxu0 0.0
  %1403 = vmatprep.subr.mxu0 0.0
  %1404 = vmatpush1.msra.mxu0 0.0
  %1405 = vmatprep.subr.mxu0 0.0
  %1406 = vmatpush1.msra.mxu0 0.0
  %1407 = vmatprep.subr.mxu0 0.0
  %1408 = vmatpush1.msra.mxu0 0.0
  %1409 = vmatprep.subr.mxu0 0.0
  %1410 = vmatpush1.msra.mxu0 0.0
  %1411 = vmatprep.subr.mxu0 0.0
  %1412 = vmatpush1.msra.mxu0 0.0
  %1413 = vmatprep.subr.mxu0 0.0
  %1414 = vmatpush1.msra.mxu0 0.0
  %1415 = vmatprep.mubr.f32.mxu0 0.0
  %v1416 = vand.u32 %v1010, 4294901760
  %1417 = vmatmul.mubr.f32.gmra.mrb[0].mxu0 %v1416
  %v1418 = vpop.f32.mrb[0].mxu0
  %v1419 = vadd.f32 %v1336, %v1418
  %v1420 = vpop.f32.mrb[0].mxu0
  %1421 = vdwg.mxu0
  %1422 = vmatprep.subr.mxu0 0.0
  %v1423 = vand.u32 %v14, 4294901760
  %1424 = vmatpush1.msra.mxu0 %v1423
  %1425 = vmatprep.subr.mxu0 0.0
  %v1426 = vand.u32 %v15, 4294901760
  %1427 = vmatpush1.msra.mxu0 %v1426
  %1428 = vmatprep.subr.mxu0 0.0
  %v1429 = vand.u32 %v16, 4294901760
  %1430 = vmatpush1.msra.mxu0 %v1429
  %1431 = vmatprep.subr.mxu0 0.0
  %v1432 = vand.u32 %v17, 4294901760
  %1433 = vmatpush1.msra.mxu0 %v1432
  %1434 = vmatprep.subr.mxu0 0.0
  %1435 = vmatpush1.msra.mxu0 0.0
  %1436 = vmatprep.subr.mxu0 0.0
  %1437 = vmatpush1.msra.mxu0 0.0
  %1438 = vmatprep.subr.mxu0 0.0
  %1439 = vmatpush1.msra.mxu0 0.0
  %1440 = vmatprep.subr.mxu0 0.0
  %1441 = vmatpush1.msra.mxu0 0.0
  %1442 = vmatprep.subr.mxu0 0.0
  %1443 = vmatpush1.msra.mxu0 0.0
  %1444 = vmatprep.subr.mxu0 0.0
  %1445 = vmatpush1.msra.mxu0 0.0
  %1446 = vmatprep.subr.mxu0 0.0
  %1447 = vmatpush1.msra.mxu0 0.0
  %1448 = vmatprep.subr.mxu0 0.0
  %1449 = vmatpush1.msra.mxu0 0.0
  %1450 = vmatprep.subr.mxu0 0.0
  %1451 = vmatpush1.msra.mxu0 0.0
  %1452 = vmatprep.subr.mxu0 0.0
  %1453 = vmatpush1.msra.mxu0 0.0
  %1454 = vmatprep.subr.mxu0 0.0
  %1455 = vmatpush1.msra.mxu0 0.0
  %1456 = vmatprep.subr.mxu0 0.0
  %1457 = vmatpush1.msra.mxu0 0.0
  %1458 = vmatprep.subr.mxu0 0.0
  %1459 = vmatpush1.msra.mxu0 0.0
  %1460 = vmatprep.subr.mxu0 0.0
  %1461 = vmatpush1.msra.mxu0 0.0
  %1462 = vmatprep.subr.mxu0 0.0
  %1463 = vmatpush1.msra.mxu0 0.0
  %1464 = vmatprep.subr.mxu0 0.0
  %1465 = vmatpush1.msra.mxu0 0.0
  %1466 = vmatprep.subr.mxu0 0.0
  %1467 = vmatpush1.msra.mxu0 0.0
  %1468 = vmatprep.subr.mxu0 0.0
  %1469 = vmatpush1.msra.mxu0 0.0
  %1470 = vmatprep.subr.mxu0 0.0
  %1471 = vmatpush1.msra.mxu0 0.0
  %1472 = vmatprep.subr.mxu0 0.0
  %1473 = vmatpush1.msra.mxu0 0.0
  %1474 = vmatprep.subr.mxu0 0.0
  %1475 = vmatpush1.msra.mxu0 0.0
  %1476 = vmatprep.subr.mxu0 0.0
  %1477 = vmatpush1.msra.mxu0 0.0
  %1478 = vmatprep.subr.mxu0 0.0
  %1479 = vmatpush1.msra.mxu0 0.0
  %1480 = vmatprep.subr.mxu0 0.0
  %1481 = vmatpush1.msra.mxu0 0.0
  %1482 = vmatprep.subr.mxu0 0.0
  %1483 = vmatpush1.msra.mxu0 0.0
  %1484 = vmatprep.subr.mxu0 0.0
  %1485 = vmatpush1.msra.mxu0 0.0
  %1486 = vmatprep.subr.mxu0 0.0
  %1487 = vmatpush1.msra.mxu0 0.0
  %1488 = vmatprep.subr.mxu0 0.0
  %1489 = vmatpush1.msra.mxu0 0.0
  %1490 = vmatprep.mubr.f32.mxu0 0.0
  %v1491 = vand.u32 %v1010, 4294901760
  %1492 = vmatmul.mubr.f32.gmra.mrb[0].mxu0 %v1491
  %v1493 = vpop.f32.mrb[0].mxu0
  %v1494 = vadd.f32 %v1419, %v1493
  %v1495 = vpop.f32.mrb[0].mxu0
  %1496 = vdwg.mxu0
  %v1497 = vadd.f32 %v1008, %v1494
  %v1498 = vtanh.pop %v1497
  %s1499 = scalar_lea.vmem %s3, 4
  %1500 = vst.msk [vmem:[%s1499] sm:$0x3] %vm511, %v1498
  %s1501 = scalar_lea.vmem %s0, 6
  %v1502 = vld [vmem:[%s1501] sm:$0x3]
  %v1504 = vsel %vm20, %v1498, 0
  %1506 = vmatprep.subr.mxu0 0.0
  %v1507 = vand.u32 %v14, 4294901760
  %1508 = vmatpush1.msra.mxu0 %v1507
  %1509 = vmatprep.subr.mxu0 0.0
  %v1510 = vand.u32 %v15, 4294901760
  %1511 = vmatpush1.msra.mxu0 %v1510
  %1512 = vmatprep.subr.mxu0 0.0
  %v1513 = vand.u32 %v16, 4294901760
  %1514 = vmatpush1.msra.mxu0 %v1513
  %1515 = vmatprep.subr.mxu0 0.0
  %v1516 = vand.u32 %v17, 4294901760
  %1517 = vmatpush1.msra.mxu0 %v1516
  %1518 = vmatprep.subr.mxu0 0.0
  %1519 = vmatpush1.msra.mxu0 0.0
  %1520 = vmatprep.subr.mxu0 0.0
  %1521 = vmatpush1.msra.mxu0 0.0
  %1522 = vmatprep.subr.mxu0 0.0
  %1523 = vmatpush1.msra.mxu0 0.0
  %1524 = vmatprep.subr.mxu0 0.0
  %1525 = vmatpush1.msra.mxu0 0.0
  %1526 = vmatprep.subr.mxu0 0.0
  %1527 = vmatpush1.msra.mxu0 0.0
  %1528 = vmatprep.subr.mxu0 0.0
  %1529 = vmatpush1.msra.mxu0 0.0
  %1530 = vmatprep.subr.mxu0 0.0
  %1531 = vmatpush1.msra.mxu0 0.0
  %1532 = vmatprep.subr.mxu0 0.0
  %1533 = vmatpush1.msra.mxu0 0.0
  %1534 = vmatprep.subr.mxu0 0.0
  %1535 = vmatpush1.msra.mxu0 0.0
  %1536 = vmatprep.subr.mxu0 0.0
  %1537 = vmatpush1.msra.mxu0 0.0
  %1538 = vmatprep.subr.mxu0 0.0
  %1539 = vmatpush1.msra.mxu0 0.0
  %1540 = vmatprep.subr.mxu0 0.0
  %1541 = vmatpush1.msra.mxu0 0.0
  %1542 = vmatprep.subr.mxu0 0.0
  %1543 = vmatpush1.msra.mxu0 0.0
  %1544 = vmatprep.subr.mxu0 0.0
  %1545 = vmatpush1.msra.mxu0 0.0
  %1546 = vmatprep.subr.mxu0 0.0
  %1547 = vmatpush1.msra.mxu0 0.0
  %1548 = vmatprep.subr.mxu0 0.0
  %1549 = vmatpush1.msra.mxu0 0.0
  %1550 = vmatprep.subr.mxu0 0.0
  %1551 = vmatpush1.msra.mxu0 0.0
  %1552 = vmatprep.subr.mxu0 0.0
  %1553 = vmatpush1.msra.mxu0 0.0
  %1554 = vmatprep.subr.mxu0 0.0
  %1555 = vmatpush1.msra.mxu0 0.0
  %1556 = vmatprep.subr.mxu0 0.0
  %1557 = vmatpush1.msra.mxu0 0.0
  %1558 = vmatprep.subr.mxu0 0.0
  %1559 = vmatpush1.msra.mxu0 0.0
  %1560 = vmatprep.subr.mxu0 0.0
  %1561 = vmatpush1.msra.mxu0 0.0
  %1562 = vmatprep.subr.mxu0 0.0
  %1563 = vmatpush1.msra.mxu0 0.0
  %1564 = vmatprep.subr.mxu0 0.0
  %1565 = vmatpush1.msra.mxu0 0.0
  %1566 = vmatprep.subr.mxu0 0.0
  %1567 = vmatpush1.msra.mxu0 0.0
  %1568 = vmatprep.subr.mxu0 0.0
  %1569 = vmatpush1.msra.mxu0 0.0
  %1570 = vmatprep.subr.mxu0 0.0
  %1571 = vmatpush1.msra.mxu0 0.0
  %1572 = vmatprep.subr.mxu0 0.0
  %1573 = vmatpush1.msra.mxu0 0.0
  %1574 = vmatprep.mubr.f32.mxu0 0.0
  %v1575 = vand.u32 %v1504, 4294901760
  %v1576 = vsub.f32 %v1504, %v1575
  %v1577 = vand.u32 %v1576, 4294901760
  %v1578 = vsub.f32 %v1576, %v1577
  %v1579 = vand.u32 %v1578, 4294901760
  %1580 = vmatmul.mubr.f32.gmra.mrb[0].mxu0 %v1579
  %v1581 = vpop.f32.mrb[0].mxu0
  %v1582 = vadd.f32 0.0, %v1581
  %v1583 = vpop.f32.mrb[0].mxu0
  %1584 = vdwg.mxu0
  %1585 = vmatprep.subr.mxu0 0.0
  %v1586 = vand.u32 %v14, 4294901760
  %v1587 = vsub.f32 %v14, %v1586
  %v1588 = vand.u32 %v1587, 4294901760
  %v1589 = vsub.f32 %v1587, %v1588
  %v1590 = vand.u32 %v1589, 4294901760
  %1591 = vmatpush1.msra.mxu0 %v1590
  %1592 = vmatprep.subr.mxu0 0.0
  %v1593 = vand.u32 %v15, 4294901760
  %v1594 = vsub.f32 %v15, %v1593
  %v1595 = vand.u32 %v1594, 4294901760
  %v1596 = vsub.f32 %v1594, %v1595
  %v1597 = vand.u32 %v1596, 4294901760
  %1598 = vmatpush1.msra.mxu0 %v1597
  %1599 = vmatprep.subr.mxu0 0.0
  %v1600 = vand.u32 %v16, 4294901760
  %v1601 = vsub.f32 %v16, %v1600
  %v1602 = vand.u32 %v1601, 4294901760
  %v1603 = vsub.f32 %v1601, %v1602
  %v1604 = vand.u32 %v1603, 4294901760
  %1605 = vmatpush1.msra.mxu0 %v1604
  %1606 = vmatprep.subr.mxu0 0.0
  %v1607 = vand.u32 %v17, 4294901760
  %v1608 = vsub.f32 %v17, %v1607
  %v1609 = vand.u32 %v1608, 4294901760
  %v1610 = vsub.f32 %v1608, %v1609
  %v1611 = vand.u32 %v1610, 4294901760
  %1612 = vmatpush1.msra.mxu0 %v1611
  %1613 = vmatprep.subr.mxu0 0.0
  %1614 = vmatpush1.msra.mxu0 0.0
  %1615 = vmatprep.subr.mxu0 0.0
  %1616 = vmatpush1.msra.mxu0 0.0
  %1617 = vmatprep.subr.mxu0 0.0
  %1618 = vmatpush1.msra.mxu0 0.0
  %1619 = vmatprep.subr.mxu0 0.0
  %1620 = vmatpush1.msra.mxu0 0.0
  %1621 = vmatprep.subr.mxu0 0.0
  %1622 = vmatpush1.msra.mxu0 0.0
  %1623 = vmatprep.subr.mxu0 0.0
  %1624 = vmatpush1.msra.mxu0 0.0
  %1625 = vmatprep.subr.mxu0 0.0
  %1626 = vmatpush1.msra.mxu0 0.0
  %1627 = vmatprep.subr.mxu0 0.0
  %1628 = vmatpush1.msra.mxu0 0.0
  %1629 = vmatprep.subr.mxu0 0.0
  %1630 = vmatpush1.msra.mxu0 0.0
  %1631 = vmatprep.subr.mxu0 0.0
  %1632 = vmatpush1.msra.mxu0 0.0
  %1633 = vmatprep.subr.mxu0 0.0
  %1634 = vmatpush1.msra.mxu0 0.0
  %1635 = vmatprep.subr.mxu0 0.0
  %1636 = vmatpush1.msra.mxu0 0.0
  %1637 = vmatprep.subr.mxu0 0.0
  %1638 = vmatpush1.msra.mxu0 0.0
  %1639 = vmatprep.subr.mxu0 0.0
  %1640 = vmatpush1.msra.mxu0 0.0
  %1641 = vmatprep.subr.mxu0 0.0
  %1642 = vmatpush1.msra.mxu0 0.0
  %1643 = vmatprep.subr.mxu0 0.0
  %1644 = vmatpush1.msra.mxu0 0.0
  %1645 = vmatprep.subr.mxu0 0.0
  %1646 = vmatpush1.msra.mxu0 0.0
  %1647 = vmatprep.subr.mxu0 0.0
  %1648 = vmatpush1.msra.mxu0 0.0
  %1649 = vmatprep.subr.mxu0 0.0
  %1650 = vmatpush1.msra.mxu0 0.0
  %1651 = vmatprep.subr.mxu0 0.0
  %1652 = vmatpush1.msra.mxu0 0.0
  %1653 = vmatprep.subr.mxu0 0.0
  %1654 = vmatpush1.msra.mxu0 0.0
  %1655 = vmatprep.subr.mxu0 0.0
  %1656 = vmatpush1.msra.mxu0 0.0
  %1657 = vmatprep.subr.mxu0 0.0
  %1658 = vmatpush1.msra.mxu0 0.0
  %1659 = vmatprep.subr.mxu0 0.0
  %1660 = vmatpush1.msra.mxu0 0.0
  %1661 = vmatprep.subr.mxu0 0.0
  %1662 = vmatpush1.msra.mxu0 0.0
  %1663 = vmatprep.subr.mxu0 0.0
  %1664 = vmatpush1.msra.mxu0 0.0
  %1665 = vmatprep.subr.mxu0 0.0
  %1666 = vmatpush1.msra.mxu0 0.0
  %1667 = vmatprep.subr.mxu0 0.0
  %1668 = vmatpush1.msra.mxu0 0.0
  %1669 = vmatprep.mubr.f32.mxu0 0.0
  %v1670 = vand.u32 %v1504, 4294901760
  %1671 = vmatmul.mubr.f32.gmra.mrb[0].mxu0 %v1670
  %v1672 = vpop.f32.mrb[0].mxu0
  %v1673 = vadd.f32 %v1582, %v1672
  %v1674 = vpop.f32.mrb[0].mxu0
  %1675 = vdwg.mxu0
  %1676 = vmatprep.subr.mxu0 0.0
  %v1677 = vand.u32 %v14, 4294901760
  %v1678 = vsub.f32 %v14, %v1677
  %1679 = vmatpush1.msra.mxu0 %v1678
  %1680 = vmatprep.subr.mxu0 0.0
  %v1681 = vand.u32 %v15, 4294901760
  %v1682 = vsub.f32 %v15, %v1681
  %1683 = vmatpush1.msra.mxu0 %v1682
  %1684 = vmatprep.subr.mxu0 0.0
  %v1685 = vand.u32 %v16, 4294901760
  %v1686 = vsub.f32 %v16, %v1685
  %1687 = vmatpush1.msra.mxu0 %v1686
  %1688 = vmatprep.subr.mxu0 0.0
  %v1689 = vand.u32 %v17, 4294901760
  %v1690 = vsub.f32 %v17, %v1689
  %1691 = vmatpush1.msra.mxu0 %v1690
  %1692 = vmatprep.subr.mxu0 0.0
  %1693 = vmatpush1.msra.mxu0 0.0
  %1694 = vmatprep.subr.mxu0 0.0
  %1695 = vmatpush1.msra.mxu0 0.0
  %1696 = vmatprep.subr.mxu0 0.0
  %1697 = vmatpush1.msra.mxu0 0.0
  %1698 = vmatprep.subr.mxu0 0.0
  %1699 = vmatpush1.msra.mxu0 0.0
  %1700 = vmatprep.subr.mxu0 0.0
  %1701 = vmatpush1.msra.mxu0 0.0
  %1702 = vmatprep.subr.mxu0 0.0
  %1703 = vmatpush1.msra.mxu0 0.0
  %1704 = vmatprep.subr.mxu0 0.0
  %1705 = vmatpush1.msra.mxu0 0.0
  %1706 = vmatprep.subr.mxu0 0.0
  %1707 = vmatpush1.msra.mxu0 0.0
  %1708 = vmatprep.subr.mxu0 0.0
  %1709 = vmatpush1.msra.mxu0 0.0
  %1710 = vmatprep.subr.mxu0 0.0
  %1711 = vmatpush1.msra.mxu0 0.0
  %1712 = vmatprep.subr.mxu0 0.0
  %1713 = vmatpush1.msra.mxu0 0.0
  %1714 = vmatprep.subr.mxu0 0.0
  %1715 = vmatpush1.msra.mxu0 0.0
  %1716 = vmatprep.subr.mxu0 0.0
  %1717 = vmatpush1.msra.mxu0 0.0
  %1718 = vmatprep.subr.mxu0 0.0
  %1719 = vmatpush1.msra.mxu0 0.0
  %1720 = vmatprep.subr.mxu0 0.0
  %1721 = vmatpush1.msra.mxu0 0.0
  %1722 = vmatprep.subr.mxu0 0.0
  %1723 = vmatpush1.msra.mxu0 0.0
  %1724 = vmatprep.subr.mxu0 0.0
  %1725 = vmatpush1.msra.mxu0 0.0
  %1726 = vmatprep.subr.mxu0 0.0
  %1727 = vmatpush1.msra.mxu0 0.0
  %1728 = vmatprep.subr.mxu0 0.0
  %1729 = vmatpush1.msra.mxu0 0.0
  %1730 = vmatprep.subr.mxu0 0.0
  %1731 = vmatpush1.msra.mxu0 0.0
  %1732 = vmatprep.subr.mxu0 0.0
  %1733 = vmatpush1.msra.mxu0 0.0
  %1734 = vmatprep.subr.mxu0 0.0
  %1735 = vmatpush1.msra.mxu0 0.0
  %1736 = vmatprep.subr.mxu0 0.0
  %1737 = vmatpush1.msra.mxu0 0.0
  %1738 = vmatprep.subr.mxu0 0.0
  %1739 = vmatpush1.msra.mxu0 0.0
  %1740 = vmatprep.subr.mxu0 0.0
  %1741 = vmatpush1.msra.mxu0 0.0
  %1742 = vmatprep.subr.mxu0 0.0
  %1743 = vmatpush1.msra.mxu0 0.0
  %1744 = vmatprep.subr.mxu0 0.0
  %1745 = vmatpush1.msra.mxu0 0.0
  %1746 = vmatprep.subr.mxu0 0.0
  %1747 = vmatpush1.msra.mxu0 0.0
  %1748 = vmatprep.mubr.f32.mxu0 0.0
  %v1749 = vand.u32 %v1504, 4294901760
  %v1750 = vsub.f32 %v1504, %v1749
  %1751 = vmatmul.mubr.f32.gmra.mrb[0].mxu0 %v1750
  %v1752 = vpop.f32.mrb[0].mxu0
  %v1753 = vadd.f32 %v1673, %v1752
  %v1754 = vpop.f32.mrb[0].mxu0
  %1755 = vdwg.mxu0
  %1756 = vmatprep.subr.mxu0 0.0
  %v1757 = vand.u32 %v14, 4294901760
  %1758 = vmatpush1.msra.mxu0 %v1757
  %1759 = vmatprep.subr.mxu0 0.0
  %v1760 = vand.u32 %v15, 4294901760
  %1761 = vmatpush1.msra.mxu0 %v1760
  %1762 = vmatprep.subr.mxu0 0.0
  %v1763 = vand.u32 %v16, 4294901760
  %1764 = vmatpush1.msra.mxu0 %v1763
  %1765 = vmatprep.subr.mxu0 0.0
  %v1766 = vand.u32 %v17, 4294901760
  %1767 = vmatpush1.msra.mxu0 %v1766
  %1768 = vmatprep.subr.mxu0 0.0
  %1769 = vmatpush1.msra.mxu0 0.0
  %1770 = vmatprep.subr.mxu0 0.0
  %1771 = vmatpush1.msra.mxu0 0.0
  %1772 = vmatprep.subr.mxu0 0.0
  %1773 = vmatpush1.msra.mxu0 0.0
  %1774 = vmatprep.subr.mxu0 0.0
  %1775 = vmatpush1.msra.mxu0 0.0
  %1776 = vmatprep.subr.mxu0 0.0
  %1777 = vmatpush1.msra.mxu0 0.0
  %1778 = vmatprep.subr.mxu0 0.0
  %1779 = vmatpush1.msra.mxu0 0.0
  %1780 = vmatprep.subr.mxu0 0.0
  %1781 = vmatpush1.msra.mxu0 0.0
  %1782 = vmatprep.subr.mxu0 0.0
  %1783 = vmatpush1.msra.mxu0 0.0
  %1784 = vmatprep.subr.mxu0 0.0
  %1785 = vmatpush1.msra.mxu0 0.0
  %1786 = vmatprep.subr.mxu0 0.0
  %1787 = vmatpush1.msra.mxu0 0.0
  %1788 = vmatprep.subr.mxu0 0.0
  %1789 = vmatpush1.msra.mxu0 0.0
  %1790 = vmatprep.subr.mxu0 0.0
  %1791 = vmatpush1.msra.mxu0 0.0
  %1792 = vmatprep.subr.mxu0 0.0
  %1793 = vmatpush1.msra.mxu0 0.0
  %1794 = vmatprep.subr.mxu0 0.0
  %1795 = vmatpush1.msra.mxu0 0.0
  %1796 = vmatprep.subr.mxu0 0.0
  %1797 = vmatpush1.msra.mxu0 0.0
  %1798 = vmatprep.subr.mxu0 0.0
  %1799 = vmatpush1.msra.mxu0 0.0
  %1800 = vmatprep.subr.mxu0 0.0
  %1801 = vmatpush1.msra.mxu0 0.0
  %1802 = vmatprep.subr.mxu0 0.0
  %1803 = vmatpush1.msra.mxu0 0.0
  %1804 = vmatprep.subr.mxu0 0.0
  %1805 = vmatpush1.msra.mxu0 0.0
  %1806 = vmatprep.subr.mxu0 0.0
  %1807 = vmatpush1.msra.mxu0 0.0
  %1808 = vmatprep.subr.mxu0 0.0
  %1809 = vmatpush1.msra.mxu0 0.0
  %1810 = vmatprep.subr.mxu0 0.0
  %1811 = vmatpush1.msra.mxu0 0.0
  %1812 = vmatprep.subr.mxu0 0.0
  %1813 = vmatpush1.msra.mxu0 0.0
  %1814 = vmatprep.subr.mxu0 0.0
  %1815 = vmatpush1.msra.mxu0 0.0
  %1816 = vmatprep.subr.mxu0 0.0
  %1817 = vmatpush1.msra.mxu0 0.0
  %1818 = vmatprep.subr.mxu0 0.0
  %1819 = vmatpush1.msra.mxu0 0.0
  %1820 = vmatprep.subr.mxu0 0.0
  %1821 = vmatpush1.msra.mxu0 0.0
  %1822 = vmatprep.subr.mxu0 0.0
  %1823 = vmatpush1.msra.mxu0 0.0
  %1824 = vmatprep.mubr.f32.mxu0 0.0
  %v1825 = vand.u32 %v1504, 4294901760
  %v1826 = vsub.f32 %v1504, %v1825
  %v1827 = vand.u32 %v1826, 4294901760
  %1828 = vmatmul.mubr.f32.gmra.mrb[0].mxu0 %v1827
  %v1829 = vpop.f32.mrb[0].mxu0
  %v1830 = vadd.f32 %v1753, %v1829
  %v1831 = vpop.f32.mrb[0].mxu0
  %1832 = vdwg.mxu0
  %1833 = vmatprep.subr.mxu0 0.0
  %v1834 = vand.u32 %v14, 4294901760
  %v1835 = vsub.f32 %v14, %v1834
  %v1836 = vand.u32 %v1835, 4294901760
  %1837 = vmatpush1.msra.mxu0 %v1836
  %1838 = vmatprep.subr.mxu0 0.0
  %v1839 = vand.u32 %v15, 4294901760
  %v1840 = vsub.f32 %v15, %v1839
  %v1841 = vand.u32 %v1840, 4294901760
  %1842 = vmatpush1.msra.mxu0 %v1841
  %1843 = vmatprep.subr.mxu0 0.0
  %v1844 = vand.u32 %v16, 4294901760
  %v1845 = vsub.f32 %v16, %v1844
  %v1846 = vand.u32 %v1845, 4294901760
  %1847 = vmatpush1.msra.mxu0 %v1846
  %1848 = vmatprep.subr.mxu0 0.0
  %v1849 = vand.u32 %v17, 4294901760
  %v1850 = vsub.f32 %v17, %v1849
  %v1851 = vand.u32 %v1850, 4294901760
  %1852 = vmatpush1.msra.mxu0 %v1851
  %1853 = vmatprep.subr.mxu0 0.0
  %1854 = vmatpush1.msra.mxu0 0.0
  %1855 = vmatprep.subr.mxu0 0.0
  %1856 = vmatpush1.msra.mxu0 0.0
  %1857 = vmatprep.subr.mxu0 0.0
  %1858 = vmatpush1.msra.mxu0 0.0
  %1859 = vmatprep.subr.mxu0 0.0
  %1860 = vmatpush1.msra.mxu0 0.0
  %1861 = vmatprep.subr.mxu0 0.0
  %1862 = vmatpush1.msra.mxu0 0.0
  %1863 = vmatprep.subr.mxu0 0.0
  %1864 = vmatpush1.msra.mxu0 0.0
  %1865 = vmatprep.subr.mxu0 0.0
  %1866 = vmatpush1.msra.mxu0 0.0
  %1867 = vmatprep.subr.mxu0 0.0
  %1868 = vmatpush1.msra.mxu0 0.0
  %1869 = vmatprep.subr.mxu0 0.0
  %1870 = vmatpush1.msra.mxu0 0.0
  %1871 = vmatprep.subr.mxu0 0.0
  %1872 = vmatpush1.msra.mxu0 0.0
  %1873 = vmatprep.subr.mxu0 0.0
  %1874 = vmatpush1.msra.mxu0 0.0
  %1875 = vmatprep.subr.mxu0 0.0
  %1876 = vmatpush1.msra.mxu0 0.0
  %1877 = vmatprep.subr.mxu0 0.0
  %1878 = vmatpush1.msra.mxu0 0.0
  %1879 = vmatprep.subr.mxu0 0.0
  %1880 = vmatpush1.msra.mxu0 0.0
  %1881 = vmatprep.subr.mxu0 0.0
  %1882 = vmatpush1.msra.mxu0 0.0
  %1883 = vmatprep.subr.mxu0 0.0
  %1884 = vmatpush1.msra.mxu0 0.0
  %1885 = vmatprep.subr.mxu0 0.0
  %1886 = vmatpush1.msra.mxu0 0.0
  %1887 = vmatprep.subr.mxu0 0.0
  %1888 = vmatpush1.msra.mxu0 0.0
  %1889 = vmatprep.subr.mxu0 0.0
  %1890 = vmatpush1.msra.mxu0 0.0
  %1891 = vmatprep.subr.mxu0 0.0
  %1892 = vmatpush1.msra.mxu0 0.0
  %1893 = vmatprep.subr.mxu0 0.0
  %1894 = vmatpush1.msra.mxu0 0.0
  %1895 = vmatprep.subr.mxu0 0.0
  %1896 = vmatpush1.msra.mxu0 0.0
  %1897 = vmatprep.subr.mxu0 0.0
  %1898 = vmatpush1.msra.mxu0 0.0
  %1899 = vmatprep.subr.mxu0 0.0
  %1900 = vmatpush1.msra.mxu0 0.0
  %1901 = vmatprep.subr.mxu0 0.0
  %1902 = vmatpush1.msra.mxu0 0.0
  %1903 = vmatprep.subr.mxu0 0.0
  %1904 = vmatpush1.msra.mxu0 0.0
  %1905 = vmatprep.subr.mxu0 0.0
  %1906 = vmatpush1.msra.mxu0 0.0
  %1907 = vmatprep.subr.mxu0 0.0
  %1908 = vmatpush1.msra.mxu0 0.0
  %1909 = vmatprep.mubr.f32.mxu0 0.0
  %v1910 = vand.u32 %v1504, 4294901760
  %1911 = vmatmul.mubr.f32.gmra.mrb[0].mxu0 %v1910
  %v1912 = vpop.f32.mrb[0].mxu0
  %v1913 = vadd.f32 %v1830, %v1912
  %v1914 = vpop.f32.mrb[0].mxu0
  %1915 = vdwg.mxu0
  %1916 = vmatprep.subr.mxu0 0.0
  %v1917 = vand.u32 %v14, 4294901760
  %1918 = vmatpush1.msra.mxu0 %v1917
  %1919 = vmatprep.subr.mxu0 0.0
  %v1920 = vand.u32 %v15, 4294901760
  %1921 = vmatpush1.msra.mxu0 %v1920
  %1922 = vmatprep.subr.mxu0 0.0
  %v1923 = vand.u32 %v16, 4294901760
  %1924 = vmatpush1.msra.mxu0 %v1923
  %1925 = vmatprep.subr.mxu0 0.0
  %v1926 = vand.u32 %v17, 4294901760
  %1927 = vmatpush1.msra.mxu0 %v1926
  %1928 = vmatprep.subr.mxu0 0.0
  %1929 = vmatpush1.msra.mxu0 0.0
  %1930 = vmatprep.subr.mxu0 0.0
  %1931 = vmatpush1.msra.mxu0 0.0
  %1932 = vmatprep.subr.mxu0 0.0
  %1933 = vmatpush1.msra.mxu0 0.0
  %1934 = vmatprep.subr.mxu0 0.0
  %1935 = vmatpush1.msra.mxu0 0.0
  %1936 = vmatprep.subr.mxu0 0.0
  %1937 = vmatpush1.msra.mxu0 0.0
  %1938 = vmatprep.subr.mxu0 0.0
  %1939 = vmatpush1.msra.mxu0 0.0
  %1940 = vmatprep.subr.mxu0 0.0
  %1941 = vmatpush1.msra.mxu0 0.0
  %1942 = vmatprep.subr.mxu0 0.0
  %1943 = vmatpush1.msra.mxu0 0.0
  %1944 = vmatprep.subr.mxu0 0.0
  %1945 = vmatpush1.msra.mxu0 0.0
  %1946 = vmatprep.subr.mxu0 0.0
  %1947 = vmatpush1.msra.mxu0 0.0
  %1948 = vmatprep.subr.mxu0 0.0
  %1949 = vmatpush1.msra.mxu0 0.0
  %1950 = vmatprep.subr.mxu0 0.0
  %1951 = vmatpush1.msra.mxu0 0.0
  %1952 = vmatprep.subr.mxu0 0.0
  %1953 = vmatpush1.msra.mxu0 0.0
  %1954 = vmatprep.subr.mxu0 0.0
  %1955 = vmatpush1.msra.mxu0 0.0
  %1956 = vmatprep.subr.mxu0 0.0
  %1957 = vmatpush1.msra.mxu0 0.0
  %1958 = vmatprep.subr.mxu0 0.0
  %1959 = vmatpush1.msra.mxu0 0.0
  %1960 = vmatprep.subr.mxu0 0.0
  %1961 = vmatpush1.msra.mxu0 0.0
  %1962 = vmatprep.subr.mxu0 0.0
  %1963 = vmatpush1.msra.mxu0 0.0
  %1964 = vmatprep.subr.mxu0 0.0
  %1965 = vmatpush1.msra.mxu0 0.0
  %1966 = vmatprep.subr.mxu0 0.0
  %1967 = vmatpush1.msra.mxu0 0.0
  %1968 = vmatprep.subr.mxu0 0.0
  %1969 = vmatpush1.msra.mxu0 0.0
  %1970 = vmatprep.subr.mxu0 0.0
  %1971 = vmatpush1.msra.mxu0 0.0
  %1972 = vmatprep.subr.mxu0 0.0
  %1973 = vmatpush1.msra.mxu0 0.0
  %1974 = vmatprep.subr.mxu0 0.0
  %1975 = vmatpush1.msra.mxu0 0.0
  %1976 = vmatprep.subr.mxu0 0.0
  %1977 = vmatpush1.msra.mxu0 0.0
  %1978 = vmatprep.subr.mxu0 0.0
  %1979 = vmatpush1.msra.mxu0 0.0
  %1980 = vmatprep.subr.mxu0 0.0
  %1981 = vmatpush1.msra.mxu0 0.0
  %1982 = vmatprep.subr.mxu0 0.0
  %1983 = vmatpush1.msra.mxu0 0.0
  %1984 = vmatprep.mubr.f32.mxu0 0.0
  %v1985 = vand.u32 %v1504, 4294901760
  %1986 = vmatmul.mubr.f32.gmra.mrb[0].mxu0 %v1985
  %v1987 = vpop.f32.mrb[0].mxu0
  %v1988 = vadd.f32 %v1913, %v1987
  %v1989 = vpop.f32.mrb[0].mxu0
  %1990 = vdwg.mxu0
  %v1991 = vadd.f32 %v1502, %v1988
  %v1992 = vtanh.pop %v1991
  %s1993 = scalar_lea.vmem %s3, 6
  %1994 = vst.msk [vmem:[%s1993] sm:$0x3] %vm511, %v1992
  %s1995 = scalar_lea.vmem %s0, 8
  %v1996 = vld [vmem:[%s1995] sm:$0x3]
  %v1998 = vsel %vm20, %v1992, 0
  %2000 = vmatprep.subr.mxu0 0.0
  %v2001 = vand.u32 %v14, 4294901760
  %2002 = vmatpush1.msra.mxu0 %v2001
  %2003 = vmatprep.subr.mxu0 0.0
  %v2004 = vand.u32 %v15, 4294901760
  %2005 = vmatpush1.msra.mxu0 %v2004
  %2006 = vmatprep.subr.mxu0 0.0
  %v2007 = vand.u32 %v16, 4294901760
  %2008 = vmatpush1.msra.mxu0 %v2007
  %2009 = vmatprep.subr.mxu0 0.0
  %v2010 = vand.u32 %v17, 4294901760
  %2011 = vmatpush1.msra.mxu0 %v2010
  %2012 = vmatprep.subr.mxu0 0.0
  %2013 = vmatpush1.msra.mxu0 0.0
  %2014 = vmatprep.subr.mxu0 0.0
  %2015 = vmatpush1.msra.mxu0 0.0
  %2016 = vmatprep.subr.mxu0 0.0
  %2017 = vmatpush1.msra.mxu0 0.0
  %2018 = vmatprep.subr.mxu0 0.0
  %2019 = vmatpush1.msra.mxu0 0.0
  %2020 = vmatprep.subr.mxu0 0.0
  %2021 = vmatpush1.msra.mxu0 0.0
  %2022 = vmatprep.subr.mxu0 0.0
  %2023 = vmatpush1.msra.mxu0 0.0
  %2024 = vmatprep.subr.mxu0 0.0
  %2025 = vmatpush1.msra.mxu0 0.0
  %2026 = vmatprep.subr.mxu0 0.0
  %2027 = vmatpush1.msra.mxu0 0.0
  %2028 = vmatprep.subr.mxu0 0.0
  %2029 = vmatpush1.msra.mxu0 0.0
  %2030 = vmatprep.subr.mxu0 0.0
  %2031 = vmatpush1.msra.mxu0 0.0
  %2032 = vmatprep.subr.mxu0 0.0
  %2033 = vmatpush1.msra.mxu0 0.0
  %2034 = vmatprep.subr.mxu0 0.0
  %2035 = vmatpush1.msra.mxu0 0.0
  %2036 = vmatprep.subr.mxu0 0.0
  %2037 = vmatpush1.msra.mxu0 0.0
  %2038 = vmatprep.subr.mxu0 0.0
  %2039 = vmatpush1.msra.mxu0 0.0
  %2040 = vmatprep.subr.mxu0 0.0
  %2041 = vmatpush1.msra.mxu0 0.0
  %2042 = vmatprep.subr.mxu0 0.0
  %2043 = vmatpush1.msra.mxu0 0.0
  %2044 = vmatprep.subr.mxu0 0.0
  %2045 = vmatpush1.msra.mxu0 0.0
  %2046 = vmatprep.subr.mxu0 0.0
  %2047 = vmatpush1.msra.mxu0 0.0
  %2048 = vmatprep.subr.mxu0 0.0
  %2049 = vmatpush1.msra.mxu0 0.0
  %2050 = vmatprep.subr.mxu0 0.0
  %2051 = vmatpush1.msra.mxu0 0.0
  %2052 = vmatprep.subr.mxu0 0.0
  %2053 = vmatpush1.msra.mxu0 0.0
  %2054 = vmatprep.subr.mxu0 0.0
  %2055 = vmatpush1.msra.mxu0 0.0
  %2056 = vmatprep.subr.mxu0 0.0
  %2057 = vmatpush1.msra.mxu0 0.0
  %2058 = vmatprep.subr.mxu0 0.0
  %2059 = vmatpush1.msra.mxu0 0.0
  %2060 = vmatprep.subr.mxu0 0.0
  %2061 = vmatpush1.msra.mxu0 0.0
  %2062 = vmatprep.subr.mxu0 0.0
  %2063 = vmatpush1.msra.mxu0 0.0
  %2064 = vmatprep.subr.mxu0 0.0
  %2065 = vmatpush1.msra.mxu0 0.0
  %2066 = vmatprep.subr.mxu0 0.0
  %2067 = vmatpush1.msra.mxu0 0.0
  %2068 = vmatprep.mubr.f32.mxu0 0.0
  %v2069 = vand.u32 %v1998, 4294901760
  %v2070 = vsub.f32 %v1998, %v2069
  %v2071 = vand.u32 %v2070, 4294901760
  %v2072 = vsub.f32 %v2070, %v2071
  %v2073 = vand.u32 %v2072, 4294901760
  %2074 = vmatmul.mubr.f32.gmra.mrb[0].mxu0 %v2073
  %v2075 = vpop.f32.mrb[0].mxu0
  %v2076 = vadd.f32 0.0, %v2075
  %v2077 = vpop.f32.mrb[0].mxu0
  %2078 = vdwg.mxu0
  %2079 = vmatprep.subr.mxu0 0.0
  %v2080 = vand.u32 %v14, 4294901760
  %v2081 = vsub.f32 %v14, %v2080
  %v2082 = vand.u32 %v2081, 4294901760
  %v2083 = vsub.f32 %v2081, %v2082
  %v2084 = vand.u32 %v2083, 4294901760
  %2085 = vmatpush1.msra.mxu0 %v2084
  %2086 = vmatprep.subr.mxu0 0.0
  %v2087 = vand.u32 %v15, 4294901760
  %v2088 = vsub.f32 %v15, %v2087
  %v2089 = vand.u32 %v2088, 4294901760
  %v2090 = vsub.f32 %v2088, %v2089
  %v2091 = vand.u32 %v2090, 4294901760
  %2092 = vmatpush1.msra.mxu0 %v2091
  %2093 = vmatprep.subr.mxu0 0.0
  %v2094 = vand.u32 %v16, 4294901760
  %v2095 = vsub.f32 %v16, %v2094
  %v2096 = vand.u32 %v2095, 4294901760
  %v2097 = vsub.f32 %v2095, %v2096
  %v2098 = vand.u32 %v2097, 4294901760
  %2099 = vmatpush1.msra.mxu0 %v2098
  %2100 = vmatprep.subr.mxu0 0.0
  %v2101 = vand.u32 %v17, 4294901760
  %v2102 = vsub.f32 %v17, %v2101
  %v2103 = vand.u32 %v2102, 4294901760
  %v2104 = vsub.f32 %v2102, %v2103
  %v2105 = vand.u32 %v2104, 4294901760
  %2106 = vmatpush1.msra.mxu0 %v2105
  %2107 = vmatprep.subr.mxu0 0.0
  %2108 = vmatpush1.msra.mxu0 0.0
  %2109 = vmatprep.subr.mxu0 0.0
  %2110 = vmatpush1.msra.mxu0 0.0
  %2111 = vmatprep.subr.mxu0 0.0
  %2112 = vmatpush1.msra.mxu0 0.0
  %2113 = vmatprep.subr.mxu0 0.0
  %2114 = vmatpush1.msra.mxu0 0.0
  %2115 = vmatprep.subr.mxu0 0.0
  %2116 = vmatpush1.msra.mxu0 0.0
  %2117 = vmatprep.subr.mxu0 0.0
  %2118 = vmatpush1.msra.mxu0 0.0
  %2119 = vmatprep.subr.mxu0 0.0
  %2120 = vmatpush1.msra.mxu0 0.0
  %2121 = vmatprep.subr.mxu0 0.0
  %2122 = vmatpush1.msra.mxu0 0.0
  %2123 = vmatprep.subr.mxu0 0.0
  %2124 = vmatpush1.msra.mxu0 0.0
  %2125 = vmatprep.subr.mxu0 0.0
  %2126 = vmatpush1.msra.mxu0 0.0
  %2127 = vmatprep.subr.mxu0 0.0
  %2128 = vmatpush1.msra.mxu0 0.0
  %2129 = vmatprep.subr.mxu0 0.0
  %2130 = vmatpush1.msra.mxu0 0.0
  %2131 = vmatprep.subr.mxu0 0.0
  %2132 = vmatpush1.msra.mxu0 0.0
  %2133 = vmatprep.subr.mxu0 0.0
  %2134 = vmatpush1.msra.mxu0 0.0
  %2135 = vmatprep.subr.mxu0 0.0
  %2136 = vmatpush1.msra.mxu0 0.0
  %2137 = vmatprep.subr.mxu0 0.0
  %2138 = vmatpush1.msra.mxu0 0.0
  %2139 = vmatprep.subr.mxu0 0.0
  %2140 = vmatpush1.msra.mxu0 0.0
  %2141 = vmatprep.subr.mxu0 0.0
  %2142 = vmatpush1.msra.mxu0 0.0
  %2143 = vmatprep.subr.mxu0 0.0
  %2144 = vmatpush1.msra.mxu0 0.0
  %2145 = vmatprep.subr.mxu0 0.0
  %2146 = vmatpush1.msra.mxu0 0.0
  %2147 = vmatprep.subr.mxu0 0.0
  %2148 = vmatpush1.msra.mxu0 0.0
  %2149 = vmatprep.subr.mxu0 0.0
  %2150 = vmatpush1.msra.mxu0 0.0
  %2151 = vmatprep.subr.mxu0 0.0
  %2152 = vmatpush1.msra.mxu0 0.0
  %2153 = vmatprep.subr.mxu0 0.0
  %2154 = vmatpush1.msra.mxu0 0.0
  %2155 = vmatprep.subr.mxu0 0.0
  %2156 = vmatpush1.msra.mxu0 0.0
  %2157 = vmatprep.subr.mxu0 0.0
  %2158 = vmatpush1.msra.mxu0 0.0
  %2159 = vmatprep.subr.mxu0 0.0
  %2160 = vmatpush1.msra.mxu0 0.0
  %2161 = vmatprep.subr.mxu0 0.0
  %2162 = vmatpush1.msra.mxu0 0.0
  %2163 = vmatprep.mubr.f32.mxu0 0.0
  %v2164 = vand.u32 %v1998, 4294901760
  %2165 = vmatmul.mubr.f32.gmra.mrb[0].mxu0 %v2164
  %v2166 = vpop.f32.mrb[0].mxu0
  %v2167 = vadd.f32 %v2076, %v2166
  %v2168 = vpop.f32.mrb[0].mxu0
  %2169 = vdwg.mxu0
  %2170 = vmatprep.subr.mxu0 0.0
  %v2171 = vand.u32 %v14, 4294901760
  %v2172 = vsub.f32 %v14, %v2171
  %2173 = vmatpush1.msra.mxu0 %v2172
  %2174 = vmatprep.subr.mxu0 0.0
  %v2175 = vand.u32 %v15, 4294901760
  %v2176 = vsub.f32 %v15, %v2175
  %2177 = vmatpush1.msra.mxu0 %v2176
  %2178 = vmatprep.subr.mxu0 0.0
  %v2179 = vand.u32 %v16, 4294901760
  %v2180 = vsub.f32 %v16, %v2179
  %2181 = vmatpush1.msra.mxu0 %v2180
  %2182 = vmatprep.subr.mxu0 0.0
  %v2183 = vand.u32 %v17, 4294901760
  %v2184 = vsub.f32 %v17, %v2183
  %2185 = vmatpush1.msra.mxu0 %v2184
  %2186 = vmatprep.subr.mxu0 0.0
  %2187 = vmatpush1.msra.mxu0 0.0
  %2188 = vmatprep.subr.mxu0 0.0
  %2189 = vmatpush1.msra.mxu0 0.0
  %2190 = vmatprep.subr.mxu0 0.0
  %2191 = vmatpush1.msra.mxu0 0.0
  %2192 = vmatprep.subr.mxu0 0.0
  %2193 = vmatpush1.msra.mxu0 0.0
  %2194 = vmatprep.subr.mxu0 0.0
  %2195 = vmatpush1.msra.mxu0 0.0
  %2196 = vmatprep.subr.mxu0 0.0
  %2197 = vmatpush1.msra.mxu0 0.0
  %2198 = vmatprep.subr.mxu0 0.0
  %2199 = vmatpush1.msra.mxu0 0.0
  %2200 = vmatprep.subr.mxu0 0.0
  %2201 = vmatpush1.msra.mxu0 0.0
  %2202 = vmatprep.subr.mxu0 0.0
  %2203 = vmatpush1.msra.mxu0 0.0
  %2204 = vmatprep.subr.mxu0 0.0
  %2205 = vmatpush1.msra.mxu0 0.0
  %2206 = vmatprep.subr.mxu0 0.0
  %2207 = vmatpush1.msra.mxu0 0.0
  %2208 = vmatprep.subr.mxu0 0.0
  %2209 = vmatpush1.msra.mxu0 0.0
  %2210 = vmatprep.subr.mxu0 0.0
  %2211 = vmatpush1.msra.mxu0 0.0
  %2212 = vmatprep.subr.mxu0 0.0
  %2213 = vmatpush1.msra.mxu0 0.0
  %2214 = vmatprep.subr.mxu0 0.0
  %2215 = vmatpush1.msra.mxu0 0.0
  %2216 = vmatprep.subr.mxu0 0.0
  %2217 = vmatpush1.msra.mxu0 0.0
  %2218 = vmatprep.subr.mxu0 0.0
  %2219 = vmatpush1.msra.mxu0 0.0
  %2220 = vmatprep.subr.mxu0 0.0
  %2221 = vmatpush1.msra.mxu0 0.0
  %2222 = vmatprep.subr.mxu0 0.0
  %2223 = vmatpush1.msra.mxu0 0.0
  %2224 = vmatprep.subr.mxu0 0.0
  %2225 = vmatpush1.msra.mxu0 0.0
  %2226 = vmatprep.subr.mxu0 0.0
  %2227 = vmatpush1.msra.mxu0 0.0
  %2228 = vmatprep.subr.mxu0 0.0
  %2229 = vmatpush1.msra.mxu0 0.0
  %2230 = vmatprep.subr.mxu0 0.0
  %2231 = vmatpush1.msra.mxu0 0.0
  %2232 = vmatprep.subr.mxu0 0.0
  %2233 = vmatpush1.msra.mxu0 0.0
  %2234 = vmatprep.subr.mxu0 0.0
  %2235 = vmatpush1.msra.mxu0 0.0
  %2236 = vmatprep.subr.mxu0 0.0
  %2237 = vmatpush1.msra.mxu0 0.0
  %2238 = vmatprep.subr.mxu0 0.0
  %2239 = vmatpush1.msra.mxu0 0.0
  %2240 = vmatprep.subr.mxu0 0.0
  %2241 = vmatpush1.msra.mxu0 0.0
  %2242 = vmatprep.mubr.f32.mxu0 0.0
  %v2243 = vand.u32 %v1998, 4294901760
  %v2244 = vsub.f32 %v1998, %v2243
  %2245 = vmatmul.mubr.f32.gmra.mrb[0].mxu0 %v2244
  %v2246 = vpop.f32.mrb[0].mxu0
  %v2247 = vadd.f32 %v2167, %v2246
  %v2248 = vpop.f32.mrb[0].mxu0
  %2249 = vdwg.mxu0
  %2250 = vmatprep.subr.mxu0 0.0
  %v2251 = vand.u32 %v14, 4294901760
  %2252 = vmatpush1.msra.mxu0 %v2251
  %2253 = vmatprep.subr.mxu0 0.0
  %v2254 = vand.u32 %v15, 4294901760
  %2255 = vmatpush1.msra.mxu0 %v2254
  %2256 = vmatprep.subr.mxu0 0.0
  %v2257 = vand.u32 %v16, 4294901760
  %2258 = vmatpush1.msra.mxu0 %v2257
  %2259 = vmatprep.subr.mxu0 0.0
  %v2260 = vand.u32 %v17, 4294901760
  %2261 = vmatpush1.msra.mxu0 %v2260
  %2262 = vmatprep.subr.mxu0 0.0
  %2263 = vmatpush1.msra.mxu0 0.0
  %2264 = vmatprep.subr.mxu0 0.0
  %2265 = vmatpush1.msra.mxu0 0.0
  %2266 = vmatprep.subr.mxu0 0.0
  %2267 = vmatpush1.msra.mxu0 0.0
  %2268 = vmatprep.subr.mxu0 0.0
  %2269 = vmatpush1.msra.mxu0 0.0
  %2270 = vmatprep.subr.mxu0 0.0
  %2271 = vmatpush1.msra.mxu0 0.0
  %2272 = vmatprep.subr.mxu0 0.0
  %2273 = vmatpush1.msra.mxu0 0.0
  %2274 = vmatprep.subr.mxu0 0.0
  %2275 = vmatpush1.msra.mxu0 0.0
  %2276 = vmatprep.subr.mxu0 0.0
  %2277 = vmatpush1.msra.mxu0 0.0
  %2278 = vmatprep.subr.mxu0 0.0
  %2279 = vmatpush1.msra.mxu0 0.0
  %2280 = vmatprep.subr.mxu0 0.0
  %2281 = vmatpush1.msra.mxu0 0.0
  %2282 = vmatprep.subr.mxu0 0.0
  %2283 = vmatpush1.msra.mxu0 0.0
  %2284 = vmatprep.subr.mxu0 0.0
  %2285 = vmatpush1.msra.mxu0 0.0
  %2286 = vmatprep.subr.mxu0 0.0
  %2287 = vmatpush1.msra.mxu0 0.0
  %2288 = vmatprep.subr.mxu0 0.0
  %2289 = vmatpush1.msra.mxu0 0.0
  %2290 = vmatprep.subr.mxu0 0.0
  %2291 = vmatpush1.msra.mxu0 0.0
  %2292 = vmatprep.subr.mxu0 0.0
  %2293 = vmatpush1.msra.mxu0 0.0
  %2294 = vmatprep.subr.mxu0 0.0
  %2295 = vmatpush1.msra.mxu0 0.0
  %2296 = vmatprep.subr.mxu0 0.0
  %2297 = vmatpush1.msra.mxu0 0.0
  %2298 = vmatprep.subr.mxu0 0.0
  %2299 = vmatpush1.msra.mxu0 0.0
  %2300 = vmatprep.subr.mxu0 0.0
  %2301 = vmatpush1.msra.mxu0 0.0
  %2302 = vmatprep.subr.mxu0 0.0
  %2303 = vmatpush1.msra.mxu0 0.0
  %2304 = vmatprep.subr.mxu0 0.0
  %2305 = vmatpush1.msra.mxu0 0.0
  %2306 = vmatprep.subr.mxu0 0.0
  %2307 = vmatpush1.msra.mxu0 0.0
  %2308 = vmatprep.subr.mxu0 0.0
  %2309 = vmatpush1.msra.mxu0 0.0
  %2310 = vmatprep.subr.mxu0 0.0
  %2311 = vmatpush1.msra.mxu0 0.0
  %2312 = vmatprep.subr.mxu0 0.0
  %2313 = vmatpush1.msra.mxu0 0.0
  %2314 = vmatprep.subr.mxu0 0.0
  %2315 = vmatpush1.msra.mxu0 0.0
  %2316 = vmatprep.subr.mxu0 0.0
  %2317 = vmatpush1.msra.mxu0 0.0
  %2318 = vmatprep.mubr.f32.mxu0 0.0
  %v2319 = vand.u32 %v1998, 4294901760
  %v2320 = vsub.f32 %v1998, %v2319
  %v2321 = vand.u32 %v2320, 4294901760
  %2322 = vmatmul.mubr.f32.gmra.mrb[0].mxu0 %v2321
  %v2323 = vpop.f32.mrb[0].mxu0
  %v2324 = vadd.f32 %v2247, %v2323
  %v2325 = vpop.f32.mrb[0].mxu0
  %2326 = vdwg.mxu0
  %2327 = vmatprep.subr.mxu0 0.0
  %v2328 = vand.u32 %v14, 4294901760
  %v2329 = vsub.f32 %v14, %v2328
  %v2330 = vand.u32 %v2329, 4294901760
  %2331 = vmatpush1.msra.mxu0 %v2330
  %2332 = vmatprep.subr.mxu0 0.0
  %v2333 = vand.u32 %v15, 4294901760
  %v2334 = vsub.f32 %v15, %v2333
  %v2335 = vand.u32 %v2334, 4294901760
  %2336 = vmatpush1.msra.mxu0 %v2335
  %2337 = vmatprep.subr.mxu0 0.0
  %v2338 = vand.u32 %v16, 4294901760
  %v2339 = vsub.f32 %v16, %v2338
  %v2340 = vand.u32 %v2339, 4294901760
  %2341 = vmatpush1.msra.mxu0 %v2340
  %2342 = vmatprep.subr.mxu0 0.0
  %v2343 = vand.u32 %v17, 4294901760
  %v2344 = vsub.f32 %v17, %v2343
  %v2345 = vand.u32 %v2344, 4294901760
  %2346 = vmatpush1.msra.mxu0 %v2345
  %2347 = vmatprep.subr.mxu0 0.0
  %2348 = vmatpush1.msra.mxu0 0.0
  %2349 = vmatprep.subr.mxu0 0.0
  %2350 = vmatpush1.msra.mxu0 0.0
  %2351 = vmatprep.subr.mxu0 0.0
  %2352 = vmatpush1.msra.mxu0 0.0
  %2353 = vmatprep.subr.mxu0 0.0
  %2354 = vmatpush1.msra.mxu0 0.0
  %2355 = vmatprep.subr.mxu0 0.0
  %2356 = vmatpush1.msra.mxu0 0.0
  %2357 = vmatprep.subr.mxu0 0.0
  %2358 = vmatpush1.msra.mxu0 0.0
  %2359 = vmatprep.subr.mxu0 0.0
  %2360 = vmatpush1.msra.mxu0 0.0
  %2361 = vmatprep.subr.mxu0 0.0
  %2362 = vmatpush1.msra.mxu0 0.0
  %2363 = vmatprep.subr.mxu0 0.0
  %2364 = vmatpush1.msra.mxu0 0.0
  %2365 = vmatprep.subr.mxu0 0.0
  %2366 = vmatpush1.msra.mxu0 0.0
  %2367 = vmatprep.subr.mxu0 0.0
  %2368 = vmatpush1.msra.mxu0 0.0
  %2369 = vmatprep.subr.mxu0 0.0
  %2370 = vmatpush1.msra.mxu0 0.0
  %2371 = vmatprep.subr.mxu0 0.0
  %2372 = vmatpush1.msra.mxu0 0.0
  %2373 = vmatprep.subr.mxu0 0.0
  %2374 = vmatpush1.msra.mxu0 0.0
  %2375 = vmatprep.subr.mxu0 0.0
  %2376 = vmatpush1.msra.mxu0 0.0
  %2377 = vmatprep.subr.mxu0 0.0
  %2378 = vmatpush1.msra.mxu0 0.0
  %2379 = vmatprep.subr.mxu0 0.0
  %2380 = vmatpush1.msra.mxu0 0.0
  %2381 = vmatprep.subr.mxu0 0.0
  %2382 = vmatpush1.msra.mxu0 0.0
  %2383 = vmatprep.subr.mxu0 0.0
  %2384 = vmatpush1.msra.mxu0 0.0
  %2385 = vmatprep.subr.mxu0 0.0
  %2386 = vmatpush1.msra.mxu0 0.0
  %2387 = vmatprep.subr.mxu0 0.0
  %2388 = vmatpush1.msra.mxu0 0.0
  %2389 = vmatprep.subr.mxu0 0.0
  %2390 = vmatpush1.msra.mxu0 0.0
  %2391 = vmatprep.subr.mxu0 0.0
  %2392 = vmatpush1.msra.mxu0 0.0
  %2393 = vmatprep.subr.mxu0 0.0
  %2394 = vmatpush1.msra.mxu0 0.0
  %2395 = vmatprep.subr.mxu0 0.0
  %2396 = vmatpush1.msra.mxu0 0.0
  %2397 = vmatprep.subr.mxu0 0.0
  %2398 = vmatpush1.msra.mxu0 0.0
  %2399 = vmatprep.subr.mxu0 0.0
  %2400 = vmatpush1.msra.mxu0 0.0
  %2401 = vmatprep.subr.mxu0 0.0
  %2402 = vmatpush1.msra.mxu0 0.0
  %2403 = vmatprep.mubr.f32.mxu0 0.0
  %v2404 = vand.u32 %v1998, 4294901760
  %2405 = vmatmul.mubr.f32.gmra.mrb[0].mxu0 %v2404
  %v2406 = vpop.f32.mrb[0].mxu0
  %v2407 = vadd.f32 %v2324, %v2406
  %v2408 = vpop.f32.mrb[0].mxu0
  %2409 = vdwg.mxu0
  %2410 = vmatprep.subr.mxu0 0.0
  %v2411 = vand.u32 %v14, 4294901760
  %2412 = vmatpush1.msra.mxu0 %v2411
  %2413 = vmatprep.subr.mxu0 0.0
  %v2414 = vand.u32 %v15, 4294901760
  %2415 = vmatpush1.msra.mxu0 %v2414
  %2416 = vmatprep.subr.mxu0 0.0
  %v2417 = vand.u32 %v16, 4294901760
  %2418 = vmatpush1.msra.mxu0 %v2417
  %2419 = vmatprep.subr.mxu0 0.0
  %v2420 = vand.u32 %v17, 4294901760
  %2421 = vmatpush1.msra.mxu0 %v2420
  %2422 = vmatprep.subr.mxu0 0.0
  %2423 = vmatpush1.msra.mxu0 0.0
  %2424 = vmatprep.subr.mxu0 0.0
  %2425 = vmatpush1.msra.mxu0 0.0
  %2426 = vmatprep.subr.mxu0 0.0
  %2427 = vmatpush1.msra.mxu0 0.0
  %2428 = vmatprep.subr.mxu0 0.0
  %2429 = vmatpush1.msra.mxu0 0.0
  %2430 = vmatprep.subr.mxu0 0.0
  %2431 = vmatpush1.msra.mxu0 0.0
  %2432 = vmatprep.subr.mxu0 0.0
  %2433 = vmatpush1.msra.mxu0 0.0
  %2434 = vmatprep.subr.mxu0 0.0
  %2435 = vmatpush1.msra.mxu0 0.0
  %2436 = vmatprep.subr.mxu0 0.0
  %2437 = vmatpush1.msra.mxu0 0.0
  %2438 = vmatprep.subr.mxu0 0.0
  %2439 = vmatpush1.msra.mxu0 0.0
  %2440 = vmatprep.subr.mxu0 0.0
  %2441 = vmatpush1.msra.mxu0 0.0
  %2442 = vmatprep.subr.mxu0 0.0
  %2443 = vmatpush1.msra.mxu0 0.0
  %2444 = vmatprep.subr.mxu0 0.0
  %2445 = vmatpush1.msra.mxu0 0.0
  %2446 = vmatprep.subr.mxu0 0.0
  %2447 = vmatpush1.msra.mxu0 0.0
  %2448 = vmatprep.subr.mxu0 0.0
  %2449 = vmatpush1.msra.mxu0 0.0
  %2450 = vmatprep.subr.mxu0 0.0
  %2451 = vmatpush1.msra.mxu0 0.0
  %2452 = vmatprep.subr.mxu0 0.0
  %2453 = vmatpush1.msra.mxu0 0.0
  %2454 = vmatprep.subr.mxu0 0.0
  %2455 = vmatpush1.msra.mxu0 0.0
  %2456 = vmatprep.subr.mxu0 0.0
  %2457 = vmatpush1.msra.mxu0 0.0
  %2458 = vmatprep.subr.mxu0 0.0
  %2459 = vmatpush1.msra.mxu0 0.0
  %2460 = vmatprep.subr.mxu0 0.0
  %2461 = vmatpush1.msra.mxu0 0.0
  %2462 = vmatprep.subr.mxu0 0.0
  %2463 = vmatpush1.msra.mxu0 0.0
  %2464 = vmatprep.subr.mxu0 0.0
  %2465 = vmatpush1.msra.mxu0 0.0
  %2466 = vmatprep.subr.mxu0 0.0
  %2467 = vmatpush1.msra.mxu0 0.0
  %2468 = vmatprep.subr.mxu0 0.0
  %2469 = vmatpush1.msra.mxu0 0.0
  %2470 = vmatprep.subr.mxu0 0.0
  %2471 = vmatpush1.msra.mxu0 0.0
  %2472 = vmatprep.subr.mxu0 0.0
  %2473 = vmatpush1.msra.mxu0 0.0
  %2474 = vmatprep.subr.mxu0 0.0
  %2475 = vmatpush1.msra.mxu0 0.0
  %2476 = vmatprep.subr.mxu0 0.0
  %2477 = vmatpush1.msra.mxu0 0.0
  %2478 = vmatprep.mubr.f32.mxu0 0.0
  %v2479 = vand.u32 %v1998, 4294901760
  %2480 = vmatmul.mubr.f32.gmra.mrb[0].mxu0 %v2479
  %v2481 = vpop.f32.mrb[0].mxu0
  %v2482 = vadd.f32 %v2407, %v2481
  %v2483 = vpop.f32.mrb[0].mxu0
  %2484 = vdwg.mxu0
  %v2485 = vadd.f32 %v1996, %v2482
  %v2486 = vtanh.pop %v2485
  %s2487 = scalar_lea.vmem %s3, 8
  %2488 = vst.msk [vmem:[%s2487] sm:$0x3] %vm511, %v2486
  %s2489 = scalar_lea.vmem %s0, 10
  %v2490 = vld [vmem:[%s2489] sm:$0x3]
  %v2492 = vsel %vm20, %v2486, 0
  %2494 = vmatprep.subr.mxu0 0.0
  %v2495 = vand.u32 %v14, 4294901760
  %2496 = vmatpush1.msra.mxu0 %v2495
  %2497 = vmatprep.subr.mxu0 0.0
  %v2498 = vand.u32 %v15, 4294901760
  %2499 = vmatpush1.msra.mxu0 %v2498
  %2500 = vmatprep.subr.mxu0 0.0
  %v2501 = vand.u32 %v16, 4294901760
  %2502 = vmatpush1.msra.mxu0 %v2501
  %2503 = vmatprep.subr.mxu0 0.0
  %v2504 = vand.u32 %v17, 4294901760
  %2505 = vmatpush1.msra.mxu0 %v2504
  %2506 = vmatprep.subr.mxu0 0.0
  %2507 = vmatpush1.msra.mxu0 0.0
  %2508 = vmatprep.subr.mxu0 0.0
  %2509 = vmatpush1.msra.mxu0 0.0
  %2510 = vmatprep.subr.mxu0 0.0
  %2511 = vmatpush1.msra.mxu0 0.0
  %2512 = vmatprep.subr.mxu0 0.0
  %2513 = vmatpush1.msra.mxu0 0.0
  %2514 = vmatprep.subr.mxu0 0.0
  %2515 = vmatpush1.msra.mxu0 0.0
  %2516 = vmatprep.subr.mxu0 0.0
  %2517 = vmatpush1.msra.mxu0 0.0
  %2518 = vmatprep.subr.mxu0 0.0
  %2519 = vmatpush1.msra.mxu0 0.0
  %2520 = vmatprep.subr.mxu0 0.0
  %2521 = vmatpush1.msra.mxu0 0.0
  %2522 = vmatprep.subr.mxu0 0.0
  %2523 = vmatpush1.msra.mxu0 0.0
  %2524 = vmatprep.subr.mxu0 0.0
  %2525 = vmatpush1.msra.mxu0 0.0
  %2526 = vmatprep.subr.mxu0 0.0
  %2527 = vmatpush1.msra.mxu0 0.0
  %2528 = vmatprep.subr.mxu0 0.0
  %2529 = vmatpush1.msra.mxu0 0.0
  %2530 = vmatprep.subr.mxu0 0.0
  %2531 = vmatpush1.msra.mxu0 0.0
  %2532 = vmatprep.subr.mxu0 0.0
  %2533 = vmatpush1.msra.mxu0 0.0
  %2534 = vmatprep.subr.mxu0 0.0
  %2535 = vmatpush1.msra.mxu0 0.0
  %2536 = vmatprep.subr.mxu0 0.0
  %2537 = vmatpush1.msra.mxu0 0.0
  %2538 = vmatprep.subr.mxu0 0.0
  %2539 = vmatpush1.msra.mxu0 0.0
  %2540 = vmatprep.subr.mxu0 0.0
  %2541 = vmatpush1.msra.mxu0 0.0
  %2542 = vmatprep.subr.mxu0 0.0
  %2543 = vmatpush1.msra.mxu0 0.0
  %2544 = vmatprep.subr.mxu0 0.0
  %2545 = vmatpush1.msra.mxu0 0.0
  %2546 = vmatprep.subr.mxu0 0.0
  %2547 = vmatpush1.msra.mxu0 0.0
  %2548 = vmatprep.subr.mxu0 0.0
  %2549 = vmatpush1.msra.mxu0 0.0
  %2550 = vmatprep.subr.mxu0 0.0
  %2551 = vmatpush1.msra.mxu0 0.0
  %2552 = vmatprep.subr.mxu0 0.0
  %2553 = vmatpush1.msra.mxu0 0.0
  %2554 = vmatprep.subr.mxu0 0.0
  %2555 = vmatpush1.msra.mxu0 0.0
  %2556 = vmatprep.subr.mxu0 0.0
  %2557 = vmatpush1.msra.mxu0 0.0
  %2558 = vmatprep.subr.mxu0 0.0
  %2559 = vmatpush1.msra.mxu0 0.0
  %2560 = vmatprep.subr.mxu0 0.0
  %2561 = vmatpush1.msra.mxu0 0.0
  %2562 = vmatprep.mubr.f32.mxu0 0.0
  %v2563 = vand.u32 %v2492, 4294901760
  %v2564 = vsub.f32 %v2492, %v2563
  %v2565 = vand.u32 %v2564, 4294901760
  %v2566 = vsub.f32 %v2564, %v2565
  %v2567 = vand.u32 %v2566, 4294901760
  %2568 = vmatmul.mubr.f32.gmra.mrb[0].mxu0 %v2567
  %v2569 = vpop.f32.mrb[0].mxu0
  %v2570 = vadd.f32 0.0, %v2569
  %v2571 = vpop.f32.mrb[0].mxu0
  %2572 = vdwg.mxu0
  %2573 = vmatprep.subr.mxu0 0.0
  %v2574 = vand.u32 %v14, 4294901760
  %v2575 = vsub.f32 %v14, %v2574
  %v2576 = vand.u32 %v2575, 4294901760
  %v2577 = vsub.f32 %v2575, %v2576
  %v2578 = vand.u32 %v2577, 4294901760
  %2579 = vmatpush1.msra.mxu0 %v2578
  %2580 = vmatprep.subr.mxu0 0.0
  %v2581 = vand.u32 %v15, 4294901760
  %v2582 = vsub.f32 %v15, %v2581
  %v2583 = vand.u32 %v2582, 4294901760
  %v2584 = vsub.f32 %v2582, %v2583
  %v2585 = vand.u32 %v2584, 4294901760
  %2586 = vmatpush1.msra.mxu0 %v2585
  %2587 = vmatprep.subr.mxu0 0.0
  %v2588 = vand.u32 %v16, 4294901760
  %v2589 = vsub.f32 %v16, %v2588
  %v2590 = vand.u32 %v2589, 4294901760
  %v2591 = vsub.f32 %v2589, %v2590
  %v2592 = vand.u32 %v2591, 4294901760
  %2593 = vmatpush1.msra.mxu0 %v2592
  %2594 = vmatprep.subr.mxu0 0.0
  %v2595 = vand.u32 %v17, 4294901760
  %v2596 = vsub.f32 %v17, %v2595
  %v2597 = vand.u32 %v2596, 4294901760
  %v2598 = vsub.f32 %v2596, %v2597
  %v2599 = vand.u32 %v2598, 4294901760
  %2600 = vmatpush1.msra.mxu0 %v2599
  %2601 = vmatprep.subr.mxu0 0.0
  %2602 = vmatpush1.msra.mxu0 0.0
  %2603 = vmatprep.subr.mxu0 0.0
  %2604 = vmatpush1.msra.mxu0 0.0
  %2605 = vmatprep.subr.mxu0 0.0
  %2606 = vmatpush1.msra.mxu0 0.0
  %2607 = vmatprep.subr.mxu0 0.0
  %2608 = vmatpush1.msra.mxu0 0.0
  %2609 = vmatprep.subr.mxu0 0.0
  %2610 = vmatpush1.msra.mxu0 0.0
  %2611 = vmatprep.subr.mxu0 0.0
  %2612 = vmatpush1.msra.mxu0 0.0
  %2613 = vmatprep.subr.mxu0 0.0
  %2614 = vmatpush1.msra.mxu0 0.0
  %2615 = vmatprep.subr.mxu0 0.0
  %2616 = vmatpush1.msra.mxu0 0.0
  %2617 = vmatprep.subr.mxu0 0.0
  %2618 = vmatpush1.msra.mxu0 0.0
  %2619 = vmatprep.subr.mxu0 0.0
  %2620 = vmatpush1.msra.mxu0 0.0
  %2621 = vmatprep.subr.mxu0 0.0
  %2622 = vmatpush1.msra.mxu0 0.0
  %2623 = vmatprep.subr.mxu0 0.0
  %2624 = vmatpush1.msra.mxu0 0.0
  %2625 = vmatprep.subr.mxu0 0.0
  %2626 = vmatpush1.msra.mxu0 0.0
  %2627 = vmatprep.subr.mxu0 0.0
  %2628 = vmatpush1.msra.mxu0 0.0
  %2629 = vmatprep.subr.mxu0 0.0
  %2630 = vmatpush1.msra.mxu0 0.0
  %2631 = vmatprep.subr.mxu0 0.0
  %2632 = vmatpush1.msra.mxu0 0.0
  %2633 = vmatprep.subr.mxu0 0.0
  %2634 = vmatpush1.msra.mxu0 0.0
  %2635 = vmatprep.subr.mxu0 0.0
  %2636 = vmatpush1.msra.mxu0 0.0
  %2637 = vmatprep.subr.mxu0 0.0
  %2638 = vmatpush1.msra.mxu0 0.0
  %2639 = vmatprep.subr.mxu0 0.0
  %2640 = vmatpush1.msra.mxu0 0.0
  %2641 = vmatprep.subr.mxu0 0.0
  %2642 = vmatpush1.msra.mxu0 0.0
  %2643 = vmatprep.subr.mxu0 0.0
  %2644 = vmatpush1.msra.mxu0 0.0
  %2645 = vmatprep.subr.mxu0 0.0
  %2646 = vmatpush1.msra.mxu0 0.0
  %2647 = vmatprep.subr.mxu0 0.0
  %2648 = vmatpush1.msra.mxu0 0.0
  %2649 = vmatprep.subr.mxu0 0.0
  %2650 = vmatpush1.msra.mxu0 0.0
  %2651 = vmatprep.subr.mxu0 0.0
  %2652 = vmatpush1.msra.mxu0 0.0
  %2653 = vmatprep.subr.mxu0 0.0
  %2654 = vmatpush1.msra.mxu0 0.0
  %2655 = vmatprep.subr.mxu0 0.0
  %2656 = vmatpush1.msra.mxu0 0.0
  %2657 = vmatprep.mubr.f32.mxu0 0.0
  %v2658 = vand.u32 %v2492, 4294901760
  %2659 = vmatmul.mubr.f32.gmra.mrb[0].mxu0 %v2658
  %v2660 = vpop.f32.mrb[0].mxu0
  %v2661 = vadd.f32 %v2570, %v2660
  %v2662 = vpop.f32.mrb[0].mxu0
  %2663 = vdwg.mxu0
  %2664 = vmatprep.subr.mxu0 0.0
  %v2665 = vand.u32 %v14, 4294901760
  %v2666 = vsub.f32 %v14, %v2665
  %2667 = vmatpush1.msra.mxu0 %v2666
  %2668 = vmatprep.subr.mxu0 0.0
  %v2669 = vand.u32 %v15, 4294901760
  %v2670 = vsub.f32 %v15, %v2669
  %2671 = vmatpush1.msra.mxu0 %v2670
  %2672 = vmatprep.subr.mxu0 0.0
  %v2673 = vand.u32 %v16, 4294901760
  %v2674 = vsub.f32 %v16, %v2673
  %2675 = vmatpush1.msra.mxu0 %v2674
  %2676 = vmatprep.subr.mxu0 0.0
  %v2677 = vand.u32 %v17, 4294901760
  %v2678 = vsub.f32 %v17, %v2677
  %2679 = vmatpush1.msra.mxu0 %v2678
  %2680 = vmatprep.subr.mxu0 0.0
  %2681 = vmatpush1.msra.mxu0 0.0
  %2682 = vmatprep.subr.mxu0 0.0
  %2683 = vmatpush1.msra.mxu0 0.0
  %2684 = vmatprep.subr.mxu0 0.0
  %2685 = vmatpush1.msra.mxu0 0.0
  %2686 = vmatprep.subr.mxu0 0.0
  %2687 = vmatpush1.msra.mxu0 0.0
  %2688 = vmatprep.subr.mxu0 0.0
  %2689 = vmatpush1.msra.mxu0 0.0
  %2690 = vmatprep.subr.mxu0 0.0
  %2691 = vmatpush1.msra.mxu0 0.0
  %2692 = vmatprep.subr.mxu0 0.0
  %2693 = vmatpush1.msra.mxu0 0.0
  %2694 = vmatprep.subr.mxu0 0.0
  %2695 = vmatpush1.msra.mxu0 0.0
  %2696 = vmatprep.subr.mxu0 0.0
  %2697 = vmatpush1.msra.mxu0 0.0
  %2698 = vmatprep.subr.mxu0 0.0
  %2699 = vmatpush1.msra.mxu0 0.0
  %2700 = vmatprep.subr.mxu0 0.0
  %2701 = vmatpush1.msra.mxu0 0.0
  %2702 = vmatprep.subr.mxu0 0.0
  %2703 = vmatpush1.msra.mxu0 0.0
  %2704 = vmatprep.subr.mxu0 0.0
  %2705 = vmatpush1.msra.mxu0 0.0
  %2706 = vmatprep.subr.mxu0 0.0
  %2707 = vmatpush1.msra.mxu0 0.0
  %2708 = vmatprep.subr.mxu0 0.0
  %2709 = vmatpush1.msra.mxu0 0.0
  %2710 = vmatprep.subr.mxu0 0.0
  %2711 = vmatpush1.msra.mxu0 0.0
  %2712 = vmatprep.subr.mxu0 0.0
  %2713 = vmatpush1.msra.mxu0 0.0
  %2714 = vmatprep.subr.mxu0 0.0
  %2715 = vmatpush1.msra.mxu0 0.0
  %2716 = vmatprep.subr.mxu0 0.0
  %2717 = vmatpush1.msra.mxu0 0.0
  %2718 = vmatprep.subr.mxu0 0.0
  %2719 = vmatpush1.msra.mxu0 0.0
  %2720 = vmatprep.subr.mxu0 0.0
  %2721 = vmatpush1.msra.mxu0 0.0
  %2722 = vmatprep.subr.mxu0 0.0
  %2723 = vmatpush1.msra.mxu0 0.0
  %2724 = vmatprep.subr.mxu0 0.0
  %2725 = vmatpush1.msra.mxu0 0.0
  %2726 = vmatprep.subr.mxu0 0.0
  %2727 = vmatpush1.msra.mxu0 0.0
  %2728 = vmatprep.subr.mxu0 0.0
  %2729 = vmatpush1.msra.mxu0 0.0
  %2730 = vmatprep.subr.mxu0 0.0
  %2731 = vmatpush1.msra.mxu0 0.0
  %2732 = vmatprep.subr.mxu0 0.0
  %2733 = vmatpush1.msra.mxu0 0.0
  %2734 = vmatprep.subr.mxu0 0.0
  %2735 = vmatpush1.msra.mxu0 0.0
  %2736 = vmatprep.mubr.f32.mxu0 0.0
  %v2737 = vand.u32 %v2492, 4294901760
  %v2738 = vsub.f32 %v2492, %v2737
  %2739 = vmatmul.mubr.f32.gmra.mrb[0].mxu0 %v2738
  %v2740 = vpop.f32.mrb[0].mxu0
  %v2741 = vadd.f32 %v2661, %v2740
  %v2742 = vpop.f32.mrb[0].mxu0
  %2743 = vdwg.mxu0
  %2744 = vmatprep.subr.mxu0 0.0
  %v2745 = vand.u32 %v14, 4294901760
  %2746 = vmatpush1.msra.mxu0 %v2745
  %2747 = vmatprep.subr.mxu0 0.0
  %v2748 = vand.u32 %v15, 4294901760
  %2749 = vmatpush1.msra.mxu0 %v2748
  %2750 = vmatprep.subr.mxu0 0.0
  %v2751 = vand.u32 %v16, 4294901760
  %2752 = vmatpush1.msra.mxu0 %v2751
  %2753 = vmatprep.subr.mxu0 0.0
  %v2754 = vand.u32 %v17, 4294901760
  %2755 = vmatpush1.msra.mxu0 %v2754
  %2756 = vmatprep.subr.mxu0 0.0
  %2757 = vmatpush1.msra.mxu0 0.0
  %2758 = vmatprep.subr.mxu0 0.0
  %2759 = vmatpush1.msra.mxu0 0.0
  %2760 = vmatprep.subr.mxu0 0.0
  %2761 = vmatpush1.msra.mxu0 0.0
  %2762 = vmatprep.subr.mxu0 0.0
  %2763 = vmatpush1.msra.mxu0 0.0
  %2764 = vmatprep.subr.mxu0 0.0
  %2765 = vmatpush1.msra.mxu0 0.0
  %2766 = vmatprep.subr.mxu0 0.0
  %2767 = vmatpush1.msra.mxu0 0.0
  %2768 = vmatprep.subr.mxu0 0.0
  %2769 = vmatpush1.msra.mxu0 0.0
  %2770 = vmatprep.subr.mxu0 0.0
  %2771 = vmatpush1.msra.mxu0 0.0
  %2772 = vmatprep.subr.mxu0 0.0
  %2773 = vmatpush1.msra.mxu0 0.0
  %2774 = vmatprep.subr.mxu0 0.0
  %2775 = vmatpush1.msra.mxu0 0.0
  %2776 = vmatprep.subr.mxu0 0.0
  %2777 = vmatpush1.msra.mxu0 0.0
  %2778 = vmatprep.subr.mxu0 0.0
  %2779 = vmatpush1.msra.mxu0 0.0
  %2780 = vmatprep.subr.mxu0 0.0
  %2781 = vmatpush1.msra.mxu0 0.0
  %2782 = vmatprep.subr.mxu0 0.0
  %2783 = vmatpush1.msra.mxu0 0.0
  %2784 = vmatprep.subr.mxu0 0.0
  %2785 = vmatpush1.msra.mxu0 0.0
  %2786 = vmatprep.subr.mxu0 0.0
  %2787 = vmatpush1.msra.mxu0 0.0
  %2788 = vmatprep.subr.mxu0 0.0
  %2789 = vmatpush1.msra.mxu0 0.0
  %2790 = vmatprep.subr.mxu0 0.0
  %2791 = vmatpush1.msra.mxu0 0.0
  %2792 = vmatprep.subr.mxu0 0.0
  %2793 = vmatpush1.msra.mxu0 0.0
  %2794 = vmatprep.subr.mxu0 0.0
  %2795 = vmatpush1.msra.mxu0 0.0
  %2796 = vmatprep.subr.mxu0 0.0
  %2797 = vmatpush1.msra.mxu0 0.0
  %2798 = vmatprep.subr.mxu0 0.0
  %2799 = vmatpush1.msra.mxu0 0.0
  %2800 = vmatprep.subr.mxu0 0.0
  %2801 = vmatpush1.msra.mxu0 0.0
  %2802 = vmatprep.subr.mxu0 0.0
  %2803 = vmatpush1.msra.mxu0 0.0
  %2804 = vmatprep.subr.mxu0 0.0
  %2805 = vmatpush1.msra.mxu0 0.0
  %2806 = vmatprep.subr.mxu0 0.0
  %2807 = vmatpush1.msra.mxu0 0.0
  %2808 = vmatprep.subr.mxu0 0.0
  %2809 = vmatpush1.msra.mxu0 0.0
  %2810 = vmatprep.subr.mxu0 0.0
  %2811 = vmatpush1.msra.mxu0 0.0
  %2812 = vmatprep.mubr.f32.mxu0 0.0
  %v2813 = vand.u32 %v2492, 4294901760
  %v2814 = vsub.f32 %v2492, %v2813
  %v2815 = vand.u32 %v2814, 4294901760
  %2816 = vmatmul.mubr.f32.gmra.mrb[0].mxu0 %v2815
  %v2817 = vpop.f32.mrb[0].mxu0
  %v2818 = vadd.f32 %v2741, %v2817
  %v2819 = vpop.f32.mrb[0].mxu0
  %2820 = vdwg.mxu0
  %2821 = vmatprep.subr.mxu0 0.0
  %v2822 = vand.u32 %v14, 4294901760
  %v2823 = vsub.f32 %v14, %v2822
  %v2824 = vand.u32 %v2823, 4294901760
  %2825 = vmatpush1.msra.mxu0 %v2824
  %2826 = vmatprep.subr.mxu0 0.0
  %v2827 = vand.u32 %v15, 4294901760
  %v2828 = vsub.f32 %v15, %v2827
  %v2829 = vand.u32 %v2828, 4294901760
  %2830 = vmatpush1.msra.mxu0 %v2829
  %2831 = vmatprep.subr.mxu0 0.0
  %v2832 = vand.u32 %v16, 4294901760
  %v2833 = vsub.f32 %v16, %v2832
  %v2834 = vand.u32 %v2833, 4294901760
  %2835 = vmatpush1.msra.mxu0 %v2834
  %2836 = vmatprep.subr.mxu0 0.0
  %v2837 = vand.u32 %v17, 4294901760
  %v2838 = vsub.f32 %v17, %v2837
  %v2839 = vand.u32 %v2838, 4294901760
  %2840 = vmatpush1.msra.mxu0 %v2839
  %2841 = vmatprep.subr.mxu0 0.0
  %2842 = vmatpush1.msra.mxu0 0.0
  %2843 = vmatprep.subr.mxu0 0.0
  %2844 = vmatpush1.msra.mxu0 0.0
  %2845 = vmatprep.subr.mxu0 0.0
  %2846 = vmatpush1.msra.mxu0 0.0
  %2847 = vmatprep.subr.mxu0 0.0
  %2848 = vmatpush1.msra.mxu0 0.0
  %2849 = vmatprep.subr.mxu0 0.0
  %2850 = vmatpush1.msra.mxu0 0.0
  %2851 = vmatprep.subr.mxu0 0.0
  %2852 = vmatpush1.msra.mxu0 0.0
  %2853 = vmatprep.subr.mxu0 0.0
  %2854 = vmatpush1.msra.mxu0 0.0
  %2855 = vmatprep.subr.mxu0 0.0
  %2856 = vmatpush1.msra.mxu0 0.0
  %2857 = vmatprep.subr.mxu0 0.0
  %2858 = vmatpush1.msra.mxu0 0.0
  %2859 = vmatprep.subr.mxu0 0.0
  %2860 = vmatpush1.msra.mxu0 0.0
  %2861 = vmatprep.subr.mxu0 0.0
  %2862 = vmatpush1.msra.mxu0 0.0
  %2863 = vmatprep.subr.mxu0 0.0
  %2864 = vmatpush1.msra.mxu0 0.0
  %2865 = vmatprep.subr.mxu0 0.0
  %2866 = vmatpush1.msra.mxu0 0.0
  %2867 = vmatprep.subr.mxu0 0.0
  %2868 = vmatpush1.msra.mxu0 0.0
  %2869 = vmatprep.subr.mxu0 0.0
  %2870 = vmatpush1.msra.mxu0 0.0
  %2871 = vmatprep.subr.mxu0 0.0
  %2872 = vmatpush1.msra.mxu0 0.0
  %2873 = vmatprep.subr.mxu0 0.0
  %2874 = vmatpush1.msra.mxu0 0.0
  %2875 = vmatprep.subr.mxu0 0.0
  %2876 = vmatpush1.msra.mxu0 0.0
  %2877 = vmatprep.subr.mxu0 0.0
  %2878 = vmatpush1.msra.mxu0 0.0
  %2879 = vmatprep.subr.mxu0 0.0
  %2880 = vmatpush1.msra.mxu0 0.0
  %2881 = vmatprep.subr.mxu0 0.0
  %2882 = vmatpush1.msra.mxu0 0.0
  %2883 = vmatprep.subr.mxu0 0.0
  %2884 = vmatpush1.msra.mxu0 0.0
  %2885 = vmatprep.subr.mxu0 0.0
  %2886 = vmatpush1.msra.mxu0 0.0
  %2887 = vmatprep.subr.mxu0 0.0
  %2888 = vmatpush1.msra.mxu0 0.0
  %2889 = vmatprep.subr.mxu0 0.0
  %2890 = vmatpush1.msra.mxu0 0.0
  %2891 = vmatprep.subr.mxu0 0.0
  %2892 = vmatpush1.msra.mxu0 0.0
  %2893 = vmatprep.subr.mxu0 0.0
  %2894 = vmatpush1.msra.mxu0 0.0
  %2895 = vmatprep.subr.mxu0 0.0
  %2896 = vmatpush1.msra.mxu0 0.0
  %2897 = vmatprep.mubr.f32.mxu0 0.0
  %v2898 = vand.u32 %v2492, 4294901760
  %2899 = vmatmul.mubr.f32.gmra.mrb[0].mxu0 %v2898
  %v2900 = vpop.f32.mrb[0].mxu0
  %v2901 = vadd.f32 %v2818, %v2900
  %v2902 = vpop.f32.mrb[0].mxu0
  %2903 = vdwg.mxu0
  %2904 = vmatprep.subr.mxu0 0.0
  %v2905 = vand.u32 %v14, 4294901760
  %2906 = vmatpush1.msra.mxu0 %v2905
  %2907 = vmatprep.subr.mxu0 0.0
  %v2908 = vand.u32 %v15, 4294901760
  %2909 = vmatpush1.msra.mxu0 %v2908
  %2910 = vmatprep.subr.mxu0 0.0
  %v2911 = vand.u32 %v16, 4294901760
  %2912 = vmatpush1.msra.mxu0 %v2911
  %2913 = vmatprep.subr.mxu0 0.0
  %v2914 = vand.u32 %v17, 4294901760
  %2915 = vmatpush1.msra.mxu0 %v2914
  %2916 = vmatprep.subr.mxu0 0.0
  %2917 = vmatpush1.msra.mxu0 0.0
  %2918 = vmatprep.subr.mxu0 0.0
  %2919 = vmatpush1.msra.mxu0 0.0
  %2920 = vmatprep.subr.mxu0 0.0
  %2921 = vmatpush1.msra.mxu0 0.0
  %2922 = vmatprep.subr.mxu0 0.0
  %2923 = vmatpush1.msra.mxu0 0.0
  %2924 = vmatprep.subr.mxu0 0.0
  %2925 = vmatpush1.msra.mxu0 0.0
  %2926 = vmatprep.subr.mxu0 0.0
  %2927 = vmatpush1.msra.mxu0 0.0
  %2928 = vmatprep.subr.mxu0 0.0
  %2929 = vmatpush1.msra.mxu0 0.0
  %2930 = vmatprep.subr.mxu0 0.0
  %2931 = vmatpush1.msra.mxu0 0.0
  %2932 = vmatprep.subr.mxu0 0.0
  %2933 = vmatpush1.msra.mxu0 0.0
  %2934 = vmatprep.subr.mxu0 0.0
  %2935 = vmatpush1.msra.mxu0 0.0
  %2936 = vmatprep.subr.mxu0 0.0
  %2937 = vmatpush1.msra.mxu0 0.0
  %2938 = vmatprep.subr.mxu0 0.0
  %2939 = vmatpush1.msra.mxu0 0.0
  %2940 = vmatprep.subr.mxu0 0.0
  %2941 = vmatpush1.msra.mxu0 0.0
  %2942 = vmatprep.subr.mxu0 0.0
  %2943 = vmatpush1.msra.mxu0 0.0
  %2944 = vmatprep.subr.mxu0 0.0
  %2945 = vmatpush1.msra.mxu0 0.0
  %2946 = vmatprep.subr.mxu0 0.0
  %2947 = vmatpush1.msra.mxu0 0.0
  %2948 = vmatprep.subr.mxu0 0.0
  %2949 = vmatpush1.msra.mxu0 0.0
  %2950 = vmatprep.subr.mxu0 0.0
  %2951 = vmatpush1.msra.mxu0 0.0
  %2952 = vmatprep.subr.mxu0 0.0
  %2953 = vmatpush1.msra.mxu0 0.0
  %2954 = vmatprep.subr.mxu0 0.0
  %2955 = vmatpush1.msra.mxu0 0.0
  %2956 = vmatprep.subr.mxu0 0.0
  %2957 = vmatpush1.msra.mxu0 0.0
  %2958 = vmatprep.subr.mxu0 0.0
  %2959 = vmatpush1.msra.mxu0 0.0
  %2960 = vmatprep.subr.mxu0 0.0
  %2961 = vmatpush1.msra.mxu0 0.0
  %2962 = vmatprep.subr.mxu0 0.0
  %2963 = vmatpush1.msra.mxu0 0.0
  %2964 = vmatprep.subr.mxu0 0.0
  %2965 = vmatpush1.msra.mxu0 0.0
  %2966 = vmatprep.subr.mxu0 0.0
  %2967 = vmatpush1.msra.mxu0 0.0
  %2968 = vmatprep.subr.mxu0 0.0
  %2969 = vmatpush1.msra.mxu0 0.0
  %2970 = vmatprep.subr.mxu0 0.0
  %2971 = vmatpush1.msra.mxu0 0.0
  %2972 = vmatprep.mubr.f32.mxu0 0.0
  %v2973 = vand.u32 %v2492, 4294901760
  %2974 = vmatmul.mubr.f32.gmra.mrb[0].mxu0 %v2973
  %v2975 = vpop.f32.mrb[0].mxu0
  %v2976 = vadd.f32 %v2901, %v2975
  %v2977 = vpop.f32.mrb[0].mxu0
  %2978 = vdwg.mxu0
  %v2979 = vadd.f32 %v2490, %v2976
  %v2980 = vtanh.pop %v2979
  %s2981 = scalar_lea.vmem %s3, 10
  %2982 = vst.msk [vmem:[%s2981] sm:$0x3] %vm511, %v2980
  %s2983 = scalar_lea.vmem %s0, 12
  %v2984 = vld [vmem:[%s2983] sm:$0x3]
  %v2986 = vsel %vm20, %v2980, 0
  %2988 = vmatprep.subr.mxu0 0.0
  %v2989 = vand.u32 %v14, 4294901760
  %2990 = vmatpush1.msra.mxu0 %v2989
  %2991 = vmatprep.subr.mxu0 0.0
  %v2992 = vand.u32 %v15, 4294901760
  %2993 = vmatpush1.msra.mxu0 %v2992
  %2994 = vmatprep.subr.mxu0 0.0
  %v2995 = vand.u32 %v16, 4294901760
  %2996 = vmatpush1.msra.mxu0 %v2995
  %2997 = vmatprep.subr.mxu0 0.0
  %v2998 = vand.u32 %v17, 4294901760
  %2999 = vmatpush1.msra.mxu0 %v2998
  %3000 = vmatprep.subr.mxu0 0.0
  %3001 = vmatpush1.msra.mxu0 0.0
  %3002 = vmatprep.subr.mxu0 0.0
  %3003 = vmatpush1.msra.mxu0 0.0
  %3004 = vmatprep.subr.mxu0 0.0
  %3005 = vmatpush1.msra.mxu0 0.0
  %3006 = vmatprep.subr.mxu0 0.0
  %3007 = vmatpush1.msra.mxu0 0.0
  %3008 = vmatprep.subr.mxu0 0.0
  %3009 = vmatpush1.msra.mxu0 0.0
  %3010 = vmatprep.subr.mxu0 0.0
  %3011 = vmatpush1.msra.mxu0 0.0
  %3012 = vmatprep.subr.mxu0 0.0
  %3013 = vmatpush1.msra.mxu0 0.0
  %3014 = vmatprep.subr.mxu0 0.0
  %3015 = vmatpush1.msra.mxu0 0.0
  %3016 = vmatprep.subr.mxu0 0.0
  %3017 = vmatpush1.msra.mxu0 0.0
  %3018 = vmatprep.subr.mxu0 0.0
  %3019 = vmatpush1.msra.mxu0 0.0
  %3020 = vmatprep.subr.mxu0 0.0
  %3021 = vmatpush1.msra.mxu0 0.0
  %3022 = vmatprep.subr.mxu0 0.0
  %3023 = vmatpush1.msra.mxu0 0.0
  %3024 = vmatprep.subr.mxu0 0.0
  %3025 = vmatpush1.msra.mxu0 0.0
  %3026 = vmatprep.subr.mxu0 0.0
  %3027 = vmatpush1.msra.mxu0 0.0
  %3028 = vmatprep.subr.mxu0 0.0
  %3029 = vmatpush1.msra.mxu0 0.0
  %3030 = vmatprep.subr.mxu0 0.0
  %3031 = vmatpush1.msra.mxu0 0.0
  %3032 = vmatprep.subr.mxu0 0.0
  %3033 = vmatpush1.msra.mxu0 0.0
  %3034 = vmatprep.subr.mxu0 0.0
  %3035 = vmatpush1.msra.mxu0 0.0
  %3036 = vmatprep.subr.mxu0 0.0
  %3037 = vmatpush1.msra.mxu0 0.0
  %3038 = vmatprep.subr.mxu0 0.0
  %3039 = vmatpush1.msra.mxu0 0.0
  %3040 = vmatprep.subr.mxu0 0.0
  %3041 = vmatpush1.msra.mxu0 0.0
  %3042 = vmatprep.subr.mxu0 0.0
  %3043 = vmatpush1.msra.mxu0 0.0
  %3044 = vmatprep.subr.mxu0 0.0
  %3045 = vmatpush1.msra.mxu0 0.0
  %3046 = vmatprep.subr.mxu0 0.0
  %3047 = vmatpush1.msra.mxu0 0.0
  %3048 = vmatprep.subr.mxu0 0.0
  %3049 = vmatpush1.msra.mxu0 0.0
  %3050 = vmatprep.subr.mxu0 0.0
  %3051 = vmatpush1.msra.mxu0 0.0
  %3052 = vmatprep.subr.mxu0 0.0
  %3053 = vmatpush1.msra.mxu0 0.0
  %3054 = vmatprep.subr.mxu0 0.0
  %3055 = vmatpush1.msra.mxu0 0.0
  %3056 = vmatprep.mubr.f32.mxu0 0.0
  %v3057 = vand.u32 %v2986, 4294901760
  %v3058 = vsub.f32 %v2986, %v3057
  %v3059 = vand.u32 %v3058, 4294901760
  %v3060 = vsub.f32 %v3058, %v3059
  %v3061 = vand.u32 %v3060, 4294901760
  %3062 = vmatmul.mubr.f32.gmra.mrb[0].mxu0 %v3061
  %v3063 = vpop.f32.mrb[0].mxu0
  %v3064 = vadd.f32 0.0, %v3063
  %v3065 = vpop.f32.mrb[0].mxu0
  %3066 = vdwg.mxu0
  %3067 = vmatprep.subr.mxu0 0.0
  %v3068 = vand.u32 %v14, 4294901760
  %v3069 = vsub.f32 %v14, %v3068
  %v3070 = vand.u32 %v3069, 4294901760
  %v3071 = vsub.f32 %v3069, %v3070
  %v3072 = vand.u32 %v3071, 4294901760
  %3073 = vmatpush1.msra.mxu0 %v3072
  %3074 = vmatprep.subr.mxu0 0.0
  %v3075 = vand.u32 %v15, 4294901760
  %v3076 = vsub.f32 %v15, %v3075
  %v3077 = vand.u32 %v3076, 4294901760
  %v3078 = vsub.f32 %v3076, %v3077
  %v3079 = vand.u32 %v3078, 4294901760
  %3080 = vmatpush1.msra.mxu0 %v3079
  %3081 = vmatprep.subr.mxu0 0.0
  %v3082 = vand.u32 %v16, 4294901760
  %v3083 = vsub.f32 %v16, %v3082
  %v3084 = vand.u32 %v3083, 4294901760
  %v3085 = vsub.f32 %v3083, %v3084
  %v3086 = vand.u32 %v3085, 4294901760
  %3087 = vmatpush1.msra.mxu0 %v3086
  %3088 = vmatprep.subr.mxu0 0.0
  %v3089 = vand.u32 %v17, 4294901760
  %v3090 = vsub.f32 %v17, %v3089
  %v3091 = vand.u32 %v3090, 4294901760
  %v3092 = vsub.f32 %v3090, %v3091
  %v3093 = vand.u32 %v3092, 4294901760
  %3094 = vmatpush1.msra.mxu0 %v3093
  %3095 = vmatprep.subr.mxu0 0.0
  %3096 = vmatpush1.msra.mxu0 0.0
  %3097 = vmatprep.subr.mxu0 0.0
  %3098 = vmatpush1.msra.mxu0 0.0
  %3099 = vmatprep.subr.mxu0 0.0
  %3100 = vmatpush1.msra.mxu0 0.0
  %3101 = vmatprep.subr.mxu0 0.0
  %3102 = vmatpush1.msra.mxu0 0.0
  %3103 = vmatprep.subr.mxu0 0.0
  %3104 = vmatpush1.msra.mxu0 0.0
  %3105 = vmatprep.subr.mxu0 0.0
  %3106 = vmatpush1.msra.mxu0 0.0
  %3107 = vmatprep.subr.mxu0 0.0
  %3108 = vmatpush1.msra.mxu0 0.0
  %3109 = vmatprep.subr.mxu0 0.0
  %3110 = vmatpush1.msra.mxu0 0.0
  %3111 = vmatprep.subr.mxu0 0.0
  %3112 = vmatpush1.msra.mxu0 0.0
  %3113 = vmatprep.subr.mxu0 0.0
  %3114 = vmatpush1.msra.mxu0 0.0
  %3115 = vmatprep.subr.mxu0 0.0
  %3116 = vmatpush1.msra.mxu0 0.0
  %3117 = vmatprep.subr.mxu0 0.0
  %3118 = vmatpush1.msra.mxu0 0.0
  %3119 = vmatprep.subr.mxu0 0.0
  %3120 = vmatpush1.msra.mxu0 0.0
  %3121 = vmatprep.subr.mxu0 0.0
  %3122 = vmatpush1.msra.mxu0 0.0
  %3123 = vmatprep.subr.mxu0 0.0
  %3124 = vmatpush1.msra.mxu0 0.0
  %3125 = vmatprep.subr.mxu0 0.0
  %3126 = vmatpush1.msra.mxu0 0.0
  %3127 = vmatprep.subr.mxu0 0.0
  %3128 = vmatpush1.msra.mxu0 0.0
  %3129 = vmatprep.subr.mxu0 0.0
  %3130 = vmatpush1.msra.mxu0 0.0
  %3131 = vmatprep.subr.mxu0 0.0
  %3132 = vmatpush1.msra.mxu0 0.0
  %3133 = vmatprep.subr.mxu0 0.0
  %3134 = vmatpush1.msra.mxu0 0.0
  %3135 = vmatprep.subr.mxu0 0.0
  %3136 = vmatpush1.msra.mxu0 0.0
  %3137 = vmatprep.subr.mxu0 0.0
  %3138 = vmatpush1.msra.mxu0 0.0
  %3139 = vmatprep.subr.mxu0 0.0
  %3140 = vmatpush1.msra.mxu0 0.0
  %3141 = vmatprep.subr.mxu0 0.0
  %3142 = vmatpush1.msra.mxu0 0.0
  %3143 = vmatprep.subr.mxu0 0.0
  %3144 = vmatpush1.msra.mxu0 0.0
  %3145 = vmatprep.subr.mxu0 0.0
  %3146 = vmatpush1.msra.mxu0 0.0
  %3147 = vmatprep.subr.mxu0 0.0
  %3148 = vmatpush1.msra.mxu0 0.0
  %3149 = vmatprep.subr.mxu0 0.0
  %3150 = vmatpush1.msra.mxu0 0.0
  %3151 = vmatprep.mubr.f32.mxu0 0.0
  %v3152 = vand.u32 %v2986, 4294901760
  %3153 = vmatmul.mubr.f32.gmra.mrb[0].mxu0 %v3152
  %v3154 = vpop.f32.mrb[0].mxu0
  %v3155 = vadd.f32 %v3064, %v3154
  %v3156 = vpop.f32.mrb[0].mxu0
  %3157 = vdwg.mxu0
  %3158 = vmatprep.subr.mxu0 0.0
  %v3159 = vand.u32 %v14, 4294901760
  %v3160 = vsub.f32 %v14, %v3159
  %3161 = vmatpush1.msra.mxu0 %v3160
  %3162 = vmatprep.subr.mxu0 0.0
  %v3163 = vand.u32 %v15, 4294901760
  %v3164 = vsub.f32 %v15, %v3163
  %3165 = vmatpush1.msra.mxu0 %v3164
  %3166 = vmatprep.subr.mxu0 0.0
  %v3167 = vand.u32 %v16, 4294901760
  %v3168 = vsub.f32 %v16, %v3167
  %3169 = vmatpush1.msra.mxu0 %v3168
  %3170 = vmatprep.subr.mxu0 0.0
  %v3171 = vand.u32 %v17, 4294901760
  %v3172 = vsub.f32 %v17, %v3171
  %3173 = vmatpush1.msra.mxu0 %v3172
  %3174 = vmatprep.subr.mxu0 0.0
  %3175 = vmatpush1.msra.mxu0 0.0
  %3176 = vmatprep.subr.mxu0 0.0
  %3177 = vmatpush1.msra.mxu0 0.0
  %3178 = vmatprep.subr.mxu0 0.0
  %3179 = vmatpush1.msra.mxu0 0.0
  %3180 = vmatprep.subr.mxu0 0.0
  %3181 = vmatpush1.msra.mxu0 0.0
  %3182 = vmatprep.subr.mxu0 0.0
  %3183 = vmatpush1.msra.mxu0 0.0
  %3184 = vmatprep.subr.mxu0 0.0
  %3185 = vmatpush1.msra.mxu0 0.0
  %3186 = vmatprep.subr.mxu0 0.0
  %3187 = vmatpush1.msra.mxu0 0.0
  %3188 = vmatprep.subr.mxu0 0.0
  %3189 = vmatpush1.msra.mxu0 0.0
  %3190 = vmatprep.subr.mxu0 0.0
  %3191 = vmatpush1.msra.mxu0 0.0
  %3192 = vmatprep.subr.mxu0 0.0
  %3193 = vmatpush1.msra.mxu0 0.0
  %3194 = vmatprep.subr.mxu0 0.0
  %3195 = vmatpush1.msra.mxu0 0.0
  %3196 = vmatprep.subr.mxu0 0.0
  %3197 = vmatpush1.msra.mxu0 0.0
  %3198 = vmatprep.subr.mxu0 0.0
  %3199 = vmatpush1.msra.mxu0 0.0
  %3200 = vmatprep.subr.mxu0 0.0
  %3201 = vmatpush1.msra.mxu0 0.0
  %3202 = vmatprep.subr.mxu0 0.0
  %3203 = vmatpush1.msra.mxu0 0.0
  %3204 = vmatprep.subr.mxu0 0.0
  %3205 = vmatpush1.msra.mxu0 0.0
  %3206 = vmatprep.subr.mxu0 0.0
  %3207 = vmatpush1.msra.mxu0 0.0
  %3208 = vmatprep.subr.mxu0 0.0
  %3209 = vmatpush1.msra.mxu0 0.0
  %3210 = vmatprep.subr.mxu0 0.0
  %3211 = vmatpush1.msra.mxu0 0.0
  %3212 = vmatprep.subr.mxu0 0.0
  %3213 = vmatpush1.msra.mxu0 0.0
  %3214 = vmatprep.subr.mxu0 0.0
  %3215 = vmatpush1.msra.mxu0 0.0
  %3216 = vmatprep.subr.mxu0 0.0
  %3217 = vmatpush1.msra.mxu0 0.0
  %3218 = vmatprep.subr.mxu0 0.0
  %3219 = vmatpush1.msra.mxu0 0.0
  %3220 = vmatprep.subr.mxu0 0.0
  %3221 = vmatpush1.msra.mxu0 0.0
  %3222 = vmatprep.subr.mxu0 0.0
  %3223 = vmatpush1.msra.mxu0 0.0
  %3224 = vmatprep.subr.mxu0 0.0
  %3225 = vmatpush1.msra.mxu0 0.0
  %3226 = vmatprep.subr.mxu0 0.0
  %3227 = vmatpush1.msra.mxu0 0.0
  %3228 = vmatprep.subr.mxu0 0.0
  %3229 = vmatpush1.msra.mxu0 0.0
  %3230 = vmatprep.mubr.f32.mxu0 0.0
  %v3231 = vand.u32 %v2986, 4294901760
  %v3232 = vsub.f32 %v2986, %v3231
  %3233 = vmatmul.mubr.f32.gmra.mrb[0].mxu0 %v3232
  %v3234 = vpop.f32.mrb[0].mxu0
  %v3235 = vadd.f32 %v3155, %v3234
  %v3236 = vpop.f32.mrb[0].mxu0
  %3237 = vdwg.mxu0
  %3238 = vmatprep.subr.mxu0 0.0
  %v3239 = vand.u32 %v14, 4294901760
  %3240 = vmatpush1.msra.mxu0 %v3239
  %3241 = vmatprep.subr.mxu0 0.0
  %v3242 = vand.u32 %v15, 4294901760
  %3243 = vmatpush1.msra.mxu0 %v3242
  %3244 = vmatprep.subr.mxu0 0.0
  %v3245 = vand.u32 %v16, 4294901760
  %3246 = vmatpush1.msra.mxu0 %v3245
  %3247 = vmatprep.subr.mxu0 0.0
  %v3248 = vand.u32 %v17, 4294901760
  %3249 = vmatpush1.msra.mxu0 %v3248
  %3250 = vmatprep.subr.mxu0 0.0
  %3251 = vmatpush1.msra.mxu0 0.0
  %3252 = vmatprep.subr.mxu0 0.0
  %3253 = vmatpush1.msra.mxu0 0.0
  %3254 = vmatprep.subr.mxu0 0.0
  %3255 = vmatpush1.msra.mxu0 0.0
  %3256 = vmatprep.subr.mxu0 0.0
  %3257 = vmatpush1.msra.mxu0 0.0
  %3258 = vmatprep.subr.mxu0 0.0
  %3259 = vmatpush1.msra.mxu0 0.0
  %3260 = vmatprep.subr.mxu0 0.0
  %3261 = vmatpush1.msra.mxu0 0.0
  %3262 = vmatprep.subr.mxu0 0.0
  %3263 = vmatpush1.msra.mxu0 0.0
  %3264 = vmatprep.subr.mxu0 0.0
  %3265 = vmatpush1.msra.mxu0 0.0
  %3266 = vmatprep.subr.mxu0 0.0
  %3267 = vmatpush1.msra.mxu0 0.0
  %3268 = vmatprep.subr.mxu0 0.0
  %3269 = vmatpush1.msra.mxu0 0.0
  %3270 = vmatprep.subr.mxu0 0.0
  %3271 = vmatpush1.msra.mxu0 0.0
  %3272 = vmatprep.subr.mxu0 0.0
  %3273 = vmatpush1.msra.mxu0 0.0
  %3274 = vmatprep.subr.mxu0 0.0
  %3275 = vmatpush1.msra.mxu0 0.0
  %3276 = vmatprep.subr.mxu0 0.0
  %3277 = vmatpush1.msra.mxu0 0.0
  %3278 = vmatprep.subr.mxu0 0.0
  %3279 = vmatpush1.msra.mxu0 0.0
  %3280 = vmatprep.subr.mxu0 0.0
  %3281 = vmatpush1.msra.mxu0 0.0
  %3282 = vmatprep.subr.mxu0 0.0
  %3283 = vmatpush1.msra.mxu0 0.0
  %3284 = vmatprep.subr.mxu0 0.0
  %3285 = vmatpush1.msra.mxu0 0.0
  %3286 = vmatprep.subr.mxu0 0.0
  %3287 = vmatpush1.msra.mxu0 0.0
  %3288 = vmatprep.subr.mxu0 0.0
  %3289 = vmatpush1.msra.mxu0 0.0
  %3290 = vmatprep.subr.mxu0 0.0
  %3291 = vmatpush1.msra.mxu0 0.0
  %3292 = vmatprep.subr.mxu0 0.0
  %3293 = vmatpush1.msra.mxu0 0.0
  %3294 = vmatprep.subr.mxu0 0.0
  %3295 = vmatpush1.msra.mxu0 0.0
  %3296 = vmatprep.subr.mxu0 0.0
  %3297 = vmatpush1.msra.mxu0 0.0
  %3298 = vmatprep.subr.mxu0 0.0
  %3299 = vmatpush1.msra.mxu0 0.0
  %3300 = vmatprep.subr.mxu0 0.0
  %3301 = vmatpush1.msra.mxu0 0.0
  %3302 = vmatprep.subr.mxu0 0.0
  %3303 = vmatpush1.msra.mxu0 0.0
  %3304 = vmatprep.subr.mxu0 0.0
  %3305 = vmatpush1.msra.mxu0 0.0
  %3306 = vmatprep.mubr.f32.mxu0 0.0
  %v3307 = vand.u32 %v2986, 4294901760
  %v3308 = vsub.f32 %v2986, %v3307
  %v3309 = vand.u32 %v3308, 4294901760
  %3310 = vmatmul.mubr.f32.gmra.mrb[0].mxu0 %v3309
  %v3311 = vpop.f32.mrb[0].mxu0
  %v3312 = vadd.f32 %v3235, %v3311
  %v3313 = vpop.f32.mrb[0].mxu0
  %3314 = vdwg.mxu0
  %3315 = vmatprep.subr.mxu0 0.0
  %v3316 = vand.u32 %v14, 4294901760
  %v3317 = vsub.f32 %v14, %v3316
  %v3318 = vand.u32 %v3317, 4294901760
  %3319 = vmatpush1.msra.mxu0 %v3318
  %3320 = vmatprep.subr.mxu0 0.0
  %v3321 = vand.u32 %v15, 4294901760
  %v3322 = vsub.f32 %v15, %v3321
  %v3323 = vand.u32 %v3322, 4294901760
  %3324 = vmatpush1.msra.mxu0 %v3323
  %3325 = vmatprep.subr.mxu0 0.0
  %v3326 = vand.u32 %v16, 4294901760
  %v3327 = vsub.f32 %v16, %v3326
  %v3328 = vand.u32 %v3327, 4294901760
  %3329 = vmatpush1.msra.mxu0 %v3328
  %3330 = vmatprep.subr.mxu0 0.0
  %v3331 = vand.u32 %v17, 4294901760
  %v3332 = vsub.f32 %v17, %v3331
  %v3333 = vand.u32 %v3332, 4294901760
  %3334 = vmatpush1.msra.mxu0 %v3333
  %3335 = vmatprep.subr.mxu0 0.0
  %3336 = vmatpush1.msra.mxu0 0.0
  %3337 = vmatprep.subr.mxu0 0.0
  %3338 = vmatpush1.msra.mxu0 0.0
  %3339 = vmatprep.subr.mxu0 0.0
  %3340 = vmatpush1.msra.mxu0 0.0
  %3341 = vmatprep.subr.mxu0 0.0
  %3342 = vmatpush1.msra.mxu0 0.0
  %3343 = vmatprep.subr.mxu0 0.0
  %3344 = vmatpush1.msra.mxu0 0.0
  %3345 = vmatprep.subr.mxu0 0.0
  %3346 = vmatpush1.msra.mxu0 0.0
  %3347 = vmatprep.subr.mxu0 0.0
  %3348 = vmatpush1.msra.mxu0 0.0
  %3349 = vmatprep.subr.mxu0 0.0
  %3350 = vmatpush1.msra.mxu0 0.0
  %3351 = vmatprep.subr.mxu0 0.0
  %3352 = vmatpush1.msra.mxu0 0.0
  %3353 = vmatprep.subr.mxu0 0.0
  %3354 = vmatpush1.msra.mxu0 0.0
  %3355 = vmatprep.subr.mxu0 0.0
  %3356 = vmatpush1.msra.mxu0 0.0
  %3357 = vmatprep.subr.mxu0 0.0
  %3358 = vmatpush1.msra.mxu0 0.0
  %3359 = vmatprep.subr.mxu0 0.0
  %3360 = vmatpush1.msra.mxu0 0.0
  %3361 = vmatprep.subr.mxu0 0.0
  %3362 = vmatpush1.msra.mxu0 0.0
  %3363 = vmatprep.subr.mxu0 0.0
  %3364 = vmatpush1.msra.mxu0 0.0
  %3365 = vmatprep.subr.mxu0 0.0
  %3366 = vmatpush1.msra.mxu0 0.0
  %3367 = vmatprep.subr.mxu0 0.0
  %3368 = vmatpush1.msra.mxu0 0.0
  %3369 = vmatprep.subr.mxu0 0.0
  %3370 = vmatpush1.msra.mxu0 0.0
  %3371 = vmatprep.subr.mxu0 0.0
  %3372 = vmatpush1.msra.mxu0 0.0
  %3373 = vmatprep.subr.mxu0 0.0
  %3374 = vmatpush1.msra.mxu0 0.0
  %3375 = vmatprep.subr.mxu0 0.0
  %3376 = vmatpush1.msra.mxu0 0.0
  %3377 = vmatprep.subr.mxu0 0.0
  %3378 = vmatpush1.msra.mxu0 0.0
  %3379 = vmatprep.subr.mxu0 0.0
  %3380 = vmatpush1.msra.mxu0 0.0
  %3381 = vmatprep.subr.mxu0 0.0
  %3382 = vmatpush1.msra.mxu0 0.0
  %3383 = vmatprep.subr.mxu0 0.0
  %3384 = vmatpush1.msra.mxu0 0.0
  %3385 = vmatprep.subr.mxu0 0.0
  %3386 = vmatpush1.msra.mxu0 0.0
  %3387 = vmatprep.subr.mxu0 0.0
  %3388 = vmatpush1.msra.mxu0 0.0
  %3389 = vmatprep.subr.mxu0 0.0
  %3390 = vmatpush1.msra.mxu0 0.0
  %3391 = vmatprep.mubr.f32.mxu0 0.0
  %v3392 = vand.u32 %v2986, 4294901760
  %3393 = vmatmul.mubr.f32.gmra.mrb[0].mxu0 %v3392
  %v3394 = vpop.f32.mrb[0].mxu0
  %v3395 = vadd.f32 %v3312, %v3394
  %v3396 = vpop.f32.mrb[0].mxu0
  %3397 = vdwg.mxu0
  %3398 = vmatprep.subr.mxu0 0.0
  %v3399 = vand.u32 %v14, 4294901760
  %3400 = vmatpush1.msra.mxu0 %v3399
  %3401 = vmatprep.subr.mxu0 0.0
  %v3402 = vand.u32 %v15, 4294901760
  %3403 = vmatpush1.msra.mxu0 %v3402
  %3404 = vmatprep.subr.mxu0 0.0
  %v3405 = vand.u32 %v16, 4294901760
  %3406 = vmatpush1.msra.mxu0 %v3405
  %3407 = vmatprep.subr.mxu0 0.0
  %v3408 = vand.u32 %v17, 4294901760
  %3409 = vmatpush1.msra.mxu0 %v3408
  %3410 = vmatprep.subr.mxu0 0.0
  %3411 = vmatpush1.msra.mxu0 0.0
  %3412 = vmatprep.subr.mxu0 0.0
  %3413 = vmatpush1.msra.mxu0 0.0
  %3414 = vmatprep.subr.mxu0 0.0
  %3415 = vmatpush1.msra.mxu0 0.0
  %3416 = vmatprep.subr.mxu0 0.0
  %3417 = vmatpush1.msra.mxu0 0.0
  %3418 = vmatprep.subr.mxu0 0.0
  %3419 = vmatpush1.msra.mxu0 0.0
  %3420 = vmatprep.subr.mxu0 0.0
  %3421 = vmatpush1.msra.mxu0 0.0
  %3422 = vmatprep.subr.mxu0 0.0
  %3423 = vmatpush1.msra.mxu0 0.0
  %3424 = vmatprep.subr.mxu0 0.0
  %3425 = vmatpush1.msra.mxu0 0.0
  %3426 = vmatprep.subr.mxu0 0.0
  %3427 = vmatpush1.msra.mxu0 0.0
  %3428 = vmatprep.subr.mxu0 0.0
  %3429 = vmatpush1.msra.mxu0 0.0
  %3430 = vmatprep.subr.mxu0 0.0
  %3431 = vmatpush1.msra.mxu0 0.0
  %3432 = vmatprep.subr.mxu0 0.0
  %3433 = vmatpush1.msra.mxu0 0.0
  %3434 = vmatprep.subr.mxu0 0.0
  %3435 = vmatpush1.msra.mxu0 0.0
  %3436 = vmatprep.subr.mxu0 0.0
  %3437 = vmatpush1.msra.mxu0 0.0
  %3438 = vmatprep.subr.mxu0 0.0
  %3439 = vmatpush1.msra.mxu0 0.0
  %3440 = vmatprep.subr.mxu0 0.0
  %3441 = vmatpush1.msra.mxu0 0.0
  %3442 = vmatprep.subr.mxu0 0.0
  %3443 = vmatpush1.msra.mxu0 0.0
  %3444 = vmatprep.subr.mxu0 0.0
  %3445 = vmatpush1.msra.mxu0 0.0
  %3446 = vmatprep.subr.mxu0 0.0
  %3447 = vmatpush1.msra.mxu0 0.0
  %3448 = vmatprep.subr.mxu0 0.0
  %3449 = vmatpush1.msra.mxu0 0.0
  %3450 = vmatprep.subr.mxu0 0.0
  %3451 = vmatpush1.msra.mxu0 0.0
  %3452 = vmatprep.subr.mxu0 0.0
  %3453 = vmatpush1.msra.mxu0 0.0
  %3454 = vmatprep.subr.mxu0 0.0
  %3455 = vmatpush1.msra.mxu0 0.0
  %3456 = vmatprep.subr.mxu0 0.0
  %3457 = vmatpush1.msra.mxu0 0.0
  %3458 = vmatprep.subr.mxu0 0.0
  %3459 = vmatpush1.msra.mxu0 0.0
  %3460 = vmatprep.subr.mxu0 0.0
  %3461 = vmatpush1.msra.mxu0 0.0
  %3462 = vmatprep.subr.mxu0 0.0
  %3463 = vmatpush1.msra.mxu0 0.0
  %3464 = vmatprep.subr.mxu0 0.0
  %3465 = vmatpush1.msra.mxu0 0.0
  %3466 = vmatprep.mubr.f32.mxu0 0.0
  %v3467 = vand.u32 %v2986, 4294901760
  %3468 = vmatmul.mubr.f32.gmra.mrb[0].mxu0 %v3467
  %v3469 = vpop.f32.mrb[0].mxu0
  %v3470 = vadd.f32 %v3395, %v3469
  %v3471 = vpop.f32.mrb[0].mxu0
  %3472 = vdwg.mxu0
  %v3473 = vadd.f32 %v2984, %v3470
  %v3474 = vtanh.pop %v3473
  %s3475 = scalar_lea.vmem %s3, 12
  %3476 = vst.msk [vmem:[%s3475] sm:$0x3] %vm511, %v3474
  %s3477 = scalar_lea.vmem %s0, 14
  %v3478 = vld [vmem:[%s3477] sm:$0x3]
  %v3480 = vsel %vm20, %v3474, 0
  %3482 = vmatprep.subr.mxu0 0.0
  %v3483 = vand.u32 %v14, 4294901760
  %3484 = vmatpush1.msra.mxu0 %v3483
  %3485 = vmatprep.subr.mxu0 0.0
  %v3486 = vand.u32 %v15, 4294901760
  %3487 = vmatpush1.msra.mxu0 %v3486
  %3488 = vmatprep.subr.mxu0 0.0
  %v3489 = vand.u32 %v16, 4294901760
  %3490 = vmatpush1.msra.mxu0 %v3489
  %3491 = vmatprep.subr.mxu0 0.0
  %v3492 = vand.u32 %v17, 4294901760
  %3493 = vmatpush1.msra.mxu0 %v3492
  %3494 = vmatprep.subr.mxu0 0.0
  %3495 = vmatpush1.msra.mxu0 0.0
  %3496 = vmatprep.subr.mxu0 0.0
  %3497 = vmatpush1.msra.mxu0 0.0
  %3498 = vmatprep.subr.mxu0 0.0
  %3499 = vmatpush1.msra.mxu0 0.0
  %3500 = vmatprep.subr.mxu0 0.0
  %3501 = vmatpush1.msra.mxu0 0.0
  %3502 = vmatprep.subr.mxu0 0.0
  %3503 = vmatpush1.msra.mxu0 0.0
  %3504 = vmatprep.subr.mxu0 0.0
  %3505 = vmatpush1.msra.mxu0 0.0
  %3506 = vmatprep.subr.mxu0 0.0
  %3507 = vmatpush1.msra.mxu0 0.0
  %3508 = vmatprep.subr.mxu0 0.0
  %3509 = vmatpush1.msra.mxu0 0.0
  %3510 = vmatprep.subr.mxu0 0.0
  %3511 = vmatpush1.msra.mxu0 0.0
  %3512 = vmatprep.subr.mxu0 0.0
  %3513 = vmatpush1.msra.mxu0 0.0
  %3514 = vmatprep.subr.mxu0 0.0
  %3515 = vmatpush1.msra.mxu0 0.0
  %3516 = vmatprep.subr.mxu0 0.0
  %3517 = vmatpush1.msra.mxu0 0.0
  %3518 = vmatprep.subr.mxu0 0.0
  %3519 = vmatpush1.msra.mxu0 0.0
  %3520 = vmatprep.subr.mxu0 0.0
  %3521 = vmatpush1.msra.mxu0 0.0
  %3522 = vmatprep.subr.mxu0 0.0
  %3523 = vmatpush1.msra.mxu0 0.0
  %3524 = vmatprep.subr.mxu0 0.0
  %3525 = vmatpush1.msra.mxu0 0.0
  %3526 = vmatprep.subr.mxu0 0.0
  %3527 = vmatpush1.msra.mxu0 0.0
  %3528 = vmatprep.subr.mxu0 0.0
  %3529 = vmatpush1.msra.mxu0 0.0
  %3530 = vmatprep.subr.mxu0 0.0
  %3531 = vmatpush1.msra.mxu0 0.0
  %3532 = vmatprep.subr.mxu0 0.0
  %3533 = vmatpush1.msra.mxu0 0.0
  %3534 = vmatprep.subr.mxu0 0.0
  %3535 = vmatpush1.msra.mxu0 0.0
  %3536 = vmatprep.subr.mxu0 0.0
  %3537 = vmatpush1.msra.mxu0 0.0
  %3538 = vmatprep.subr.mxu0 0.0
  %3539 = vmatpush1.msra.mxu0 0.0
  %3540 = vmatprep.subr.mxu0 0.0
  %3541 = vmatpush1.msra.mxu0 0.0
  %3542 = vmatprep.subr.mxu0 0.0
  %3543 = vmatpush1.msra.mxu0 0.0
  %3544 = vmatprep.subr.mxu0 0.0
  %3545 = vmatpush1.msra.mxu0 0.0
  %3546 = vmatprep.subr.mxu0 0.0
  %3547 = vmatpush1.msra.mxu0 0.0
  %3548 = vmatprep.subr.mxu0 0.0
  %3549 = vmatpush1.msra.mxu0 0.0
  %3550 = vmatprep.mubr.f32.mxu0 0.0
  %v3551 = vand.u32 %v3480, 4294901760
  %v3552 = vsub.f32 %v3480, %v3551
  %v3553 = vand.u32 %v3552, 4294901760
  %v3554 = vsub.f32 %v3552, %v3553
  %v3555 = vand.u32 %v3554, 4294901760
  %3556 = vmatmul.mubr.f32.gmra.mrb[0].mxu0 %v3555
  %v3557 = vpop.f32.mrb[0].mxu0
  %v3558 = vadd.f32 0.0, %v3557
  %v3559 = vpop.f32.mrb[0].mxu0
  %3560 = vdwg.mxu0
  %3561 = vmatprep.subr.mxu0 0.0
  %v3562 = vand.u32 %v14, 4294901760
  %v3563 = vsub.f32 %v14, %v3562
  %v3564 = vand.u32 %v3563, 4294901760
  %v3565 = vsub.f32 %v3563, %v3564
  %v3566 = vand.u32 %v3565, 4294901760
  %3567 = vmatpush1.msra.mxu0 %v3566
  %3568 = vmatprep.subr.mxu0 0.0
  %v3569 = vand.u32 %v15, 4294901760
  %v3570 = vsub.f32 %v15, %v3569
  %v3571 = vand.u32 %v3570, 4294901760
  %v3572 = vsub.f32 %v3570, %v3571
  %v3573 = vand.u32 %v3572, 4294901760
  %3574 = vmatpush1.msra.mxu0 %v3573
  %3575 = vmatprep.subr.mxu0 0.0
  %v3576 = vand.u32 %v16, 4294901760
  %v3577 = vsub.f32 %v16, %v3576
  %v3578 = vand.u32 %v3577, 4294901760
  %v3579 = vsub.f32 %v3577, %v3578
  %v3580 = vand.u32 %v3579, 4294901760
  %3581 = vmatpush1.msra.mxu0 %v3580
  %3582 = vmatprep.subr.mxu0 0.0
  %v3583 = vand.u32 %v17, 4294901760
  %v3584 = vsub.f32 %v17, %v3583
  %v3585 = vand.u32 %v3584, 4294901760
  %v3586 = vsub.f32 %v3584, %v3585
  %v3587 = vand.u32 %v3586, 4294901760
  %3588 = vmatpush1.msra.mxu0 %v3587
  %3589 = vmatprep.subr.mxu0 0.0
  %3590 = vmatpush1.msra.mxu0 0.0
  %3591 = vmatprep.subr.mxu0 0.0
  %3592 = vmatpush1.msra.mxu0 0.0
  %3593 = vmatprep.subr.mxu0 0.0
  %3594 = vmatpush1.msra.mxu0 0.0
  %3595 = vmatprep.subr.mxu0 0.0
  %3596 = vmatpush1.msra.mxu0 0.0
  %3597 = vmatprep.subr.mxu0 0.0
  %3598 = vmatpush1.msra.mxu0 0.0
  %3599 = vmatprep.subr.mxu0 0.0
  %3600 = vmatpush1.msra.mxu0 0.0
  %3601 = vmatprep.subr.mxu0 0.0
  %3602 = vmatpush1.msra.mxu0 0.0
  %3603 = vmatprep.subr.mxu0 0.0
  %3604 = vmatpush1.msra.mxu0 0.0
  %3605 = vmatprep.subr.mxu0 0.0
  %3606 = vmatpush1.msra.mxu0 0.0
  %3607 = vmatprep.subr.mxu0 0.0
  %3608 = vmatpush1.msra.mxu0 0.0
  %3609 = vmatprep.subr.mxu0 0.0
  %3610 = vmatpush1.msra.mxu0 0.0
  %3611 = vmatprep.subr.mxu0 0.0
  %3612 = vmatpush1.msra.mxu0 0.0
  %3613 = vmatprep.subr.mxu0 0.0
  %3614 = vmatpush1.msra.mxu0 0.0
  %3615 = vmatprep.subr.mxu0 0.0
  %3616 = vmatpush1.msra.mxu0 0.0
  %3617 = vmatprep.subr.mxu0 0.0
  %3618 = vmatpush1.msra.mxu0 0.0
  %3619 = vmatprep.subr.mxu0 0.0
  %3620 = vmatpush1.msra.mxu0 0.0
  %3621 = vmatprep.subr.mxu0 0.0
  %3622 = vmatpush1.msra.mxu0 0.0
  %3623 = vmatprep.subr.mxu0 0.0
  %3624 = vmatpush1.msra.mxu0 0.0
  %3625 = vmatprep.subr.mxu0 0.0
  %3626 = vmatpush1.msra.mxu0 0.0
  %3627 = vmatprep.subr.mxu0 0.0
  %3628 = vmatpush1.msra.mxu0 0.0
  %3629 = vmatprep.subr.mxu0 0.0
  %3630 = vmatpush1.msra.mxu0 0.0
  %3631 = vmatprep.subr.mxu0 0.0
  %3632 = vmatpush1.msra.mxu0 0.0
  %3633 = vmatprep.subr.mxu0 0.0
  %3634 = vmatpush1.msra.mxu0 0.0
  %3635 = vmatprep.subr.mxu0 0.0
  %3636 = vmatpush1.msra.mxu0 0.0
  %3637 = vmatprep.subr.mxu0 0.0
  %3638 = vmatpush1.msra.mxu0 0.0
  %3639 = vmatprep.subr.mxu0 0.0
  %3640 = vmatpush1.msra.mxu0 0.0
  %3641 = vmatprep.subr.mxu0 0.0
  %3642 = vmatpush1.msra.mxu0 0.0
  %3643 = vmatprep.subr.mxu0 0.0
  %3644 = vmatpush1.msra.mxu0 0.0
  %3645 = vmatprep.mubr.f32.mxu0 0.0
  %v3646 = vand.u32 %v3480, 4294901760
  %3647 = vmatmul.mubr.f32.gmra.mrb[0].mxu0 %v3646
  %v3648 = vpop.f32.mrb[0].mxu0
  %v3649 = vadd.f32 %v3558, %v3648
  %v3650 = vpop.f32.mrb[0].mxu0
  %3651 = vdwg.mxu0
  %3652 = vmatprep.subr.mxu0 0.0
  %v3653 = vand.u32 %v14, 4294901760
  %v3654 = vsub.f32 %v14, %v3653
  %3655 = vmatpush1.msra.mxu0 %v3654
  %3656 = vmatprep.subr.mxu0 0.0
  %v3657 = vand.u32 %v15, 4294901760
  %v3658 = vsub.f32 %v15, %v3657
  %3659 = vmatpush1.msra.mxu0 %v3658
  %3660 = vmatprep.subr.mxu0 0.0
  %v3661 = vand.u32 %v16, 4294901760
  %v3662 = vsub.f32 %v16, %v3661
  %3663 = vmatpush1.msra.mxu0 %v3662
  %3664 = vmatprep.subr.mxu0 0.0
  %v3665 = vand.u32 %v17, 4294901760
  %v3666 = vsub.f32 %v17, %v3665
  %3667 = vmatpush1.msra.mxu0 %v3666
  %3668 = vmatprep.subr.mxu0 0.0
  %3669 = vmatpush1.msra.mxu0 0.0
  %3670 = vmatprep.subr.mxu0 0.0
  %3671 = vmatpush1.msra.mxu0 0.0
  %3672 = vmatprep.subr.mxu0 0.0
  %3673 = vmatpush1.msra.mxu0 0.0
  %3674 = vmatprep.subr.mxu0 0.0
  %3675 = vmatpush1.msra.mxu0 0.0
  %3676 = vmatprep.subr.mxu0 0.0
  %3677 = vmatpush1.msra.mxu0 0.0
  %3678 = vmatprep.subr.mxu0 0.0
  %3679 = vmatpush1.msra.mxu0 0.0
  %3680 = vmatprep.subr.mxu0 0.0
  %3681 = vmatpush1.msra.mxu0 0.0
  %3682 = vmatprep.subr.mxu0 0.0
  %3683 = vmatpush1.msra.mxu0 0.0
  %3684 = vmatprep.subr.mxu0 0.0
  %3685 = vmatpush1.msra.mxu0 0.0
  %3686 = vmatprep.subr.mxu0 0.0
  %3687 = vmatpush1.msra.mxu0 0.0
  %3688 = vmatprep.subr.mxu0 0.0
  %3689 = vmatpush1.msra.mxu0 0.0
  %3690 = vmatprep.subr.mxu0 0.0
  %3691 = vmatpush1.msra.mxu0 0.0
  %3692 = vmatprep.subr.mxu0 0.0
  %3693 = vmatpush1.msra.mxu0 0.0
  %3694 = vmatprep.subr.mxu0 0.0
  %3695 = vmatpush1.msra.mxu0 0.0
  %3696 = vmatprep.subr.mxu0 0.0
  %3697 = vmatpush1.msra.mxu0 0.0
  %3698 = vmatprep.subr.mxu0 0.0
  %3699 = vmatpush1.msra.mxu0 0.0
  %3700 = vmatprep.subr.mxu0 0.0
  %3701 = vmatpush1.msra.mxu0 0.0
  %3702 = vmatprep.subr.mxu0 0.0
  %3703 = vmatpush1.msra.mxu0 0.0
  %3704 = vmatprep.subr.mxu0 0.0
  %3705 = vmatpush1.msra.mxu0 0.0
  %3706 = vmatprep.subr.mxu0 0.0
  %3707 = vmatpush1.msra.mxu0 0.0
  %3708 = vmatprep.subr.mxu0 0.0
  %3709 = vmatpush1.msra.mxu0 0.0
  %3710 = vmatprep.subr.mxu0 0.0
  %3711 = vmatpush1.msra.mxu0 0.0
  %3712 = vmatprep.subr.mxu0 0.0
  %3713 = vmatpush1.msra.mxu0 0.0
  %3714 = vmatprep.subr.mxu0 0.0
  %3715 = vmatpush1.msra.mxu0 0.0
  %3716 = vmatprep.subr.mxu0 0.0
  %3717 = vmatpush1.msra.mxu0 0.0
  %3718 = vmatprep.subr.mxu0 0.0
  %3719 = vmatpush1.msra.mxu0 0.0
  %3720 = vmatprep.subr.mxu0 0.0
  %3721 = vmatpush1.msra.mxu0 0.0
  %3722 = vmatprep.subr.mxu0 0.0
  %3723 = vmatpush1.msra.mxu0 0.0
  %3724 = vmatprep.mubr.f32.mxu0 0.0
  %v3725 = vand.u32 %v3480, 4294901760
  %v3726 = vsub.f32 %v3480, %v3725
  %3727 = vmatmul.mubr.f32.gmra.mrb[0].mxu0 %v3726
  %v3728 = vpop.f32.mrb[0].mxu0
  %v3729 = vadd.f32 %v3649, %v3728
  %v3730 = vpop.f32.mrb[0].mxu0
  %3731 = vdwg.mxu0
  %3732 = vmatprep.subr.mxu0 0.0
  %v3733 = vand.u32 %v14, 4294901760
  %3734 = vmatpush1.msra.mxu0 %v3733
  %3735 = vmatprep.subr.mxu0 0.0
  %v3736 = vand.u32 %v15, 4294901760
  %3737 = vmatpush1.msra.mxu0 %v3736
  %3738 = vmatprep.subr.mxu0 0.0
  %v3739 = vand.u32 %v16, 4294901760
  %3740 = vmatpush1.msra.mxu0 %v3739
  %3741 = vmatprep.subr.mxu0 0.0
  %v3742 = vand.u32 %v17, 4294901760
  %3743 = vmatpush1.msra.mxu0 %v3742
  %3744 = vmatprep.subr.mxu0 0.0
  %3745 = vmatpush1.msra.mxu0 0.0
  %3746 = vmatprep.subr.mxu0 0.0
  %3747 = vmatpush1.msra.mxu0 0.0
  %3748 = vmatprep.subr.mxu0 0.0
  %3749 = vmatpush1.msra.mxu0 0.0
  %3750 = vmatprep.subr.mxu0 0.0
  %3751 = vmatpush1.msra.mxu0 0.0
  %3752 = vmatprep.subr.mxu0 0.0
  %3753 = vmatpush1.msra.mxu0 0.0
  %3754 = vmatprep.subr.mxu0 0.0
  %3755 = vmatpush1.msra.mxu0 0.0
  %3756 = vmatprep.subr.mxu0 0.0
  %3757 = vmatpush1.msra.mxu0 0.0
  %3758 = vmatprep.subr.mxu0 0.0
  %3759 = vmatpush1.msra.mxu0 0.0
  %3760 = vmatprep.subr.mxu0 0.0
  %3761 = vmatpush1.msra.mxu0 0.0
  %3762 = vmatprep.subr.mxu0 0.0
  %3763 = vmatpush1.msra.mxu0 0.0
  %3764 = vmatprep.subr.mxu0 0.0
  %3765 = vmatpush1.msra.mxu0 0.0
  %3766 = vmatprep.subr.mxu0 0.0
  %3767 = vmatpush1.msra.mxu0 0.0
  %3768 = vmatprep.subr.mxu0 0.0
  %3769 = vmatpush1.msra.mxu0 0.0
  %3770 = vmatprep.subr.mxu0 0.0
  %3771 = vmatpush1.msra.mxu0 0.0
  %3772 = vmatprep.subr.mxu0 0.0
  %3773 = vmatpush1.msra.mxu0 0.0
  %3774 = vmatprep.subr.mxu0 0.0
  %3775 = vmatpush1.msra.mxu0 0.0
  %3776 = vmatprep.subr.mxu0 0.0
  %3777 = vmatpush1.msra.mxu0 0.0
  %3778 = vmatprep.subr.mxu0 0.0
  %3779 = vmatpush1.msra.mxu0 0.0
  %3780 = vmatprep.subr.mxu0 0.0
  %3781 = vmatpush1.msra.mxu0 0.0
  %3782 = vmatprep.subr.mxu0 0.0
  %3783 = vmatpush1.msra.mxu0 0.0
  %3784 = vmatprep.subr.mxu0 0.0
  %3785 = vmatpush1.msra.mxu0 0.0
  %3786 = vmatprep.subr.mxu0 0.0
  %3787 = vmatpush1.msra.mxu0 0.0
  %3788 = vmatprep.subr.mxu0 0.0
  %3789 = vmatpush1.msra.mxu0 0.0
  %3790 = vmatprep.subr.mxu0 0.0
  %3791 = vmatpush1.msra.mxu0 0.0
  %3792 = vmatprep.subr.mxu0 0.0
  %3793 = vmatpush1.msra.mxu0 0.0
  %3794 = vmatprep.subr.mxu0 0.0
  %3795 = vmatpush1.msra.mxu0 0.0
  %3796 = vmatprep.subr.mxu0 0.0
  %3797 = vmatpush1.msra.mxu0 0.0
  %3798 = vmatprep.subr.mxu0 0.0
  %3799 = vmatpush1.msra.mxu0 0.0
  %3800 = vmatprep.mubr.f32.mxu0 0.0
  %v3801 = vand.u32 %v3480, 4294901760
  %v3802 = vsub.f32 %v3480, %v3801
  %v3803 = vand.u32 %v3802, 4294901760
  %3804 = vmatmul.mubr.f32.gmra.mrb[0].mxu0 %v3803
  %v3805 = vpop.f32.mrb[0].mxu0
  %v3806 = vadd.f32 %v3729, %v3805
  %v3807 = vpop.f32.mrb[0].mxu0
  %3808 = vdwg.mxu0
  %3809 = vmatprep.subr.mxu0 0.0
  %v3810 = vand.u32 %v14, 4294901760
  %v3811 = vsub.f32 %v14, %v3810
  %v3812 = vand.u32 %v3811, 4294901760
  %3813 = vmatpush1.msra.mxu0 %v3812
  %3814 = vmatprep.subr.mxu0 0.0
  %v3815 = vand.u32 %v15, 4294901760
  %v3816 = vsub.f32 %v15, %v3815
  %v3817 = vand.u32 %v3816, 4294901760
  %3818 = vmatpush1.msra.mxu0 %v3817
  %3819 = vmatprep.subr.mxu0 0.0
  %v3820 = vand.u32 %v16, 4294901760
  %v3821 = vsub.f32 %v16, %v3820
  %v3822 = vand.u32 %v3821, 4294901760
  %3823 = vmatpush1.msra.mxu0 %v3822
  %3824 = vmatprep.subr.mxu0 0.0
  %v3825 = vand.u32 %v17, 4294901760
  %v3826 = vsub.f32 %v17, %v3825
  %v3827 = vand.u32 %v3826, 4294901760
  %3828 = vmatpush1.msra.mxu0 %v3827
  %3829 = vmatprep.subr.mxu0 0.0
  %3830 = vmatpush1.msra.mxu0 0.0
  %3831 = vmatprep.subr.mxu0 0.0
  %3832 = vmatpush1.msra.mxu0 0.0
  %3833 = vmatprep.subr.mxu0 0.0
  %3834 = vmatpush1.msra.mxu0 0.0
  %3835 = vmatprep.subr.mxu0 0.0
  %3836 = vmatpush1.msra.mxu0 0.0
  %3837 = vmatprep.subr.mxu0 0.0
  %3838 = vmatpush1.msra.mxu0 0.0
  %3839 = vmatprep.subr.mxu0 0.0
  %3840 = vmatpush1.msra.mxu0 0.0
  %3841 = vmatprep.subr.mxu0 0.0
  %3842 = vmatpush1.msra.mxu0 0.0
  %3843 = vmatprep.subr.mxu0 0.0
  %3844 = vmatpush1.msra.mxu0 0.0
  %3845 = vmatprep.subr.mxu0 0.0
  %3846 = vmatpush1.msra.mxu0 0.0
  %3847 = vmatprep.subr.mxu0 0.0
  %3848 = vmatpush1.msra.mxu0 0.0
  %3849 = vmatprep.subr.mxu0 0.0
  %3850 = vmatpush1.msra.mxu0 0.0
  %3851 = vmatprep.subr.mxu0 0.0
  %3852 = vmatpush1.msra.mxu0 0.0
  %3853 = vmatprep.subr.mxu0 0.0
  %3854 = vmatpush1.msra.mxu0 0.0
  %3855 = vmatprep.subr.mxu0 0.0
  %3856 = vmatpush1.msra.mxu0 0.0
  %3857 = vmatprep.subr.mxu0 0.0
  %3858 = vmatpush1.msra.mxu0 0.0
  %3859 = vmatprep.subr.mxu0 0.0
  %3860 = vmatpush1.msra.mxu0 0.0
  %3861 = vmatprep.subr.mxu0 0.0
  %3862 = vmatpush1.msra.mxu0 0.0
  %3863 = vmatprep.subr.mxu0 0.0
  %3864 = vmatpush1.msra.mxu0 0.0
  %3865 = vmatprep.subr.mxu0 0.0
  %3866 = vmatpush1.msra.mxu0 0.0
  %3867 = vmatprep.subr.mxu0 0.0
  %3868 = vmatpush1.msra.mxu0 0.0
  %3869 = vmatprep.subr.mxu0 0.0
  %3870 = vmatpush1.msra.mxu0 0.0
  %3871 = vmatprep.subr.mxu0 0.0
  %3872 = vmatpush1.msra.mxu0 0.0
  %3873 = vmatprep.subr.mxu0 0.0
  %3874 = vmatpush1.msra.mxu0 0.0
  %3875 = vmatprep.subr.mxu0 0.0
  %3876 = vmatpush1.msra.mxu0 0.0
  %3877 = vmatprep.subr.mxu0 0.0
  %3878 = vmatpush1.msra.mxu0 0.0
  %3879 = vmatprep.subr.mxu0 0.0
  %3880 = vmatpush1.msra.mxu0 0.0
  %3881 = vmatprep.subr.mxu0 0.0
  %3882 = vmatpush1.msra.mxu0 0.0
  %3883 = vmatprep.subr.mxu0 0.0
  %3884 = vmatpush1.msra.mxu0 0.0
  %3885 = vmatprep.mubr.f32.mxu0 0.0
  %v3886 = vand.u32 %v3480, 4294901760
  %3887 = vmatmul.mubr.f32.gmra.mrb[0].mxu0 %v3886
  %v3888 = vpop.f32.mrb[0].mxu0
  %v3889 = vadd.f32 %v3806, %v3888
  %v3890 = vpop.f32.mrb[0].mxu0
  %3891 = vdwg.mxu0
  %3892 = vmatprep.subr.mxu0 0.0
  %v3893 = vand.u32 %v14, 4294901760
  %3894 = vmatpush1.msra.mxu0 %v3893
  %3895 = vmatprep.subr.mxu0 0.0
  %v3896 = vand.u32 %v15, 4294901760
  %3897 = vmatpush1.msra.mxu0 %v3896
  %3898 = vmatprep.subr.mxu0 0.0
  %v3899 = vand.u32 %v16, 4294901760
  %3900 = vmatpush1.msra.mxu0 %v3899
  %3901 = vmatprep.subr.mxu0 0.0
  %v3902 = vand.u32 %v17, 4294901760
  %3903 = vmatpush1.msra.mxu0 %v3902
  %3904 = vmatprep.subr.mxu0 0.0
  %3905 = vmatpush1.msra.mxu0 0.0
  %3906 = vmatprep.subr.mxu0 0.0
  %3907 = vmatpush1.msra.mxu0 0.0
  %3908 = vmatprep.subr.mxu0 0.0
  %3909 = vmatpush1.msra.mxu0 0.0
  %3910 = vmatprep.subr.mxu0 0.0
  %3911 = vmatpush1.msra.mxu0 0.0
  %3912 = vmatprep.subr.mxu0 0.0
  %3913 = vmatpush1.msra.mxu0 0.0
  %3914 = vmatprep.subr.mxu0 0.0
  %3915 = vmatpush1.msra.mxu0 0.0
  %3916 = vmatprep.subr.mxu0 0.0
  %3917 = vmatpush1.msra.mxu0 0.0
  %3918 = vmatprep.subr.mxu0 0.0
  %3919 = vmatpush1.msra.mxu0 0.0
  %3920 = vmatprep.subr.mxu0 0.0
  %3921 = vmatpush1.msra.mxu0 0.0
  %3922 = vmatprep.subr.mxu0 0.0
  %3923 = vmatpush1.msra.mxu0 0.0
  %3924 = vmatprep.subr.mxu0 0.0
  %3925 = vmatpush1.msra.mxu0 0.0
  %3926 = vmatprep.subr.mxu0 0.0
  %3927 = vmatpush1.msra.mxu0 0.0
  %3928 = vmatprep.subr.mxu0 0.0
  %3929 = vmatpush1.msra.mxu0 0.0
  %3930 = vmatprep.subr.mxu0 0.0
  %3931 = vmatpush1.msra.mxu0 0.0
  %3932 = vmatprep.subr.mxu0 0.0
  %3933 = vmatpush1.msra.mxu0 0.0
  %3934 = vmatprep.subr.mxu0 0.0
  %3935 = vmatpush1.msra.mxu0 0.0
  %3936 = vmatprep.subr.mxu0 0.0
  %3937 = vmatpush1.msra.mxu0 0.0
  %3938 = vmatprep.subr.mxu0 0.0
  %3939 = vmatpush1.msra.mxu0 0.0
  %3940 = vmatprep.subr.mxu0 0.0
  %3941 = vmatpush1.msra.mxu0 0.0
  %3942 = vmatprep.subr.mxu0 0.0
  %3943 = vmatpush1.msra.mxu0 0.0
  %3944 = vmatprep.subr.mxu0 0.0
  %3945 = vmatpush1.msra.mxu0 0.0
  %3946 = vmatprep.subr.mxu0 0.0
  %3947 = vmatpush1.msra.mxu0 0.0
  %3948 = vmatprep.subr.mxu0 0.0
  %3949 = vmatpush1.msra.mxu0 0.0
  %3950 = vmatprep.subr.mxu0 0.0
  %3951 = vmatpush1.msra.mxu0 0.0
  %3952 = vmatprep.subr.mxu0 0.0
  %3953 = vmatpush1.msra.mxu0 0.0
  %3954 = vmatprep.subr.mxu0 0.0
  %3955 = vmatpush1.msra.mxu0 0.0
  %3956 = vmatprep.subr.mxu0 0.0
  %3957 = vmatpush1.msra.mxu0 0.0
  %3958 = vmatprep.subr.mxu0 0.0
  %3959 = vmatpush1.msra.mxu0 0.0
  %3960 = vmatprep.mubr.f32.mxu0 0.0
  %v3961 = vand.u32 %v3480, 4294901760
  %3962 = vmatmul.mubr.f32.gmra.mrb[0].mxu0 %v3961
  %v3963 = vpop.f32.mrb[0].mxu0
  %v3964 = vadd.f32 %v3889, %v3963
  %v3965 = vpop.f32.mrb[0].mxu0
  %3966 = vdwg.mxu0
  %v3967 = vadd.f32 %v3478, %v3964
  %v3968 = vtanh.pop %v3967
  %s3969 = scalar_lea.vmem %s3, 14
  %3970 = vst.msk [vmem:[%s3969] sm:$0x3] %vm511, %v3968
  // Predicated region
  $region14: #{rnn_forward.1} parent=0 // pred_check
    _
  $region15: #{rnn_forward.1} parent=0 // pred_check_branch
    %3972 = sbr.rel (0) target = $region17
  $region16: #{rnn_forward.1} parent=0 // pred_region
    _
  $region17: #{rnn_forward.1} parent=0 // pred_fallthru
    _
  // Predicated region
  $region18: #{rnn_forward.1} parent=0 // pred_check
    _
  $region19: #{rnn_forward.1} parent=0 // pred_check_branch
    %3974 = sbr.rel (0) target = $region21
  $region20: #{rnn_forward.1} parent=0 // pred_region
    _
  $region21: #{rnn_forward.1} parent=0 // pred_fallthru
    _

</llo_original>
